<compile_context>
chip_gen: v7x
topology: tpu7x:2x2x1
jax: 0.10.0
libtpu: 0.0.40
codegen_flags: <defaults>
</compile_context>

<pallas_src>
import numpy as np

import jax
import jax.numpy as jnp
from jax import lax
from jax.experimental import pallas as pl
from jax.experimental.pallas import tpu as pltpu  # noqa: F401  (TPU backend)


# ---------------------------------------------------------------------------
# helpers
# ---------------------------------------------------------------------------
def _round_up(v, m):
    return ((v + m - 1) // m) * m


def _gelu(x):
    # exact (erf-based) GELU, matching torch.nn.GELU() default
    return 0.5 * x * (1.0 + lax.erf(x * (1.0 / np.sqrt(2.0))))


def _mm(a, w):
    """a @ w.T, f32 accumulation (torch Linear convention; a is 2-D)."""
    return lax.dot_general(a, w, (((1,), (1,)), ((), ())),
                           preferred_element_type=jnp.float32)


def _mm3(a, w):
    """a @ w.T contracting the last dim of a 3-D activation (B, T, in)."""
    return lax.dot_general(a, w, (((2,), (1,)), ((), ())),
                           preferred_element_type=jnp.float32)


# ---------------------------------------------------------------------------
# fused kernel builder (all shapes / slab offsets are static Python)
# ---------------------------------------------------------------------------
def build_kernel(B, T, H, meta):
    Hh = H // 2
    VbP, VdP = meta["VbP"], meta["VdP"]
    wa_off, wb_off, vec_off = meta["wa"], meta["wb"], meta["vec"]
    inv_sqrt_h = 1.0 / np.sqrt(float(H))
    assert H <= 128

    def kernel(x_ref, wa_ref, wb_ref, vec_ref, out_ref):
        def wa(name):                      # weight, contraction dim = H
            o, n = wa_off[name]
            return wa_ref[o:o + n, :]

        def wb(name):                      # weight, contraction dim = H // 2
            o, n = wb_off[name]
            return wb_ref[o:o + n, :]

        def vec(name):                     # bias / LN vector -> (1, d)
            r, d = vec_off[name]
            return vec_ref[r:r + 1, :d]

        def ln(xv, gname, bname):
            mu = jnp.mean(xv, axis=-1, keepdims=True)
            xc = xv - mu
            var = jnp.mean(xc * xc, axis=-1, keepdims=True)
            return xc * lax.rsqrt(var + 1e-5) * vec(gname) + vec(bname)

        x = x_ref[...]                     # (B, T, H) f32

        # ---------------- bidirectional GRU (gate order r, z, n) ------------
        # input-path gates for ALL timesteps, off the recurrence critical path
        gi_f = _mm3(x, wa("gru_f_wi")) + vec("gru_f_bi")      # (B, T, 3H)
        gi_b = _mm3(x, wa("gru_b_wi")) + vec("gru_b_bi")
        wh_f, bh_f = wa("gru_f_wh"), vec("gru_f_bh")
        wh_b, bh_b = wa("gru_b_wh"), vec("gru_b_bh")

        hf = jnp.zeros((B, H), jnp.float32)
        hb = jnp.zeros((B, H), jnp.float32)
        hs_f = [None] * T
        hs_b = [None] * T
        for s in range(T):                 # T=8 fully unrolled serial steps
            tb = T - 1 - s
            # one recurrent matmul per direction per step; the two are
            # independent so the scheduler can overlap their MXU pushes
            ghf = _mm(hf, wh_f) + bh_f     # (B, 3H)
            ghb = _mm(hb, wh_b) + bh_b
            gif = gi_f[:, s, :]
            gib = gi_b[:, tb, :]

            rf = jax.nn.sigmoid(gif[:, :H] + ghf[:, :H])
            zf = jax.nn.sigmoid(gif[:, H:2 * H] + ghf[:, H:2 * H])
            nf = jnp.tanh(gif[:, 2 * H:] + rf * ghf[:, 2 * H:])
            hf = (1.0 - zf) * nf + zf * hf
            hs_f[s] = hf

            rb = jax.nn.sigmoid(gib[:, :H] + ghb[:, :H])
            zb = jax.nn.sigmoid(gib[:, H:2 * H] + ghb[:, H:2 * H])
            nb = jnp.tanh(gib[:, 2 * H:] + rb * ghb[:, 2 * H:])
            hb = (1.0 - zb) * nb + zb * hb
            hs_b[tb] = hb

        fwd_seq = jnp.stack(hs_f, axis=1)  # (B, T, H), stays in vregs
        bwd_seq = jnp.stack(hs_b, axis=1)

        # context projection (weight pre-split fwd/bwd -> no in-kernel concat)
        ctx = (_mm3(fwd_seq, wa("ctx_wf")) + _mm3(bwd_seq, wa("ctx_wb"))
               + vec("ctx_b"))
        enhanced = x + ctx                 # residual, (B, T, H)

        # ---------------- attention helper ----------------
        def attn(xin, qkv):
            q = qkv[..., :H]
            k = qkv[..., H:2 * H]
            v = qkv[..., 2 * H:]
            s = jnp.einsum("bqd,bkd->bqk", q, k,
                           preferred_element_type=jnp.float32) * inv_sqrt_h
            m = jnp.max(s, axis=-1, keepdims=True)
            e = jnp.exp(s - m)
            w = e * pl.reciprocal(jnp.sum(e, axis=-1, keepdims=True),
                                  approx=True)                 # EUP slot
            return xin + jnp.einsum("bqk,bkd->bqd", w, v,
                                    preferred_element_type=jnp.float32)

        # both heads' Q/K/V from ONE (B,T,H)@(H,6H) matmul
        qkv_all = _mm3(enhanced, wa("qkv_w"))                  # (B, T, 6H)
        bc_qkv = qkv_all[..., :3 * H] + vec("bc_qkv_b")
        dc_qkv = qkv_all[..., 3 * H:] + vec("dc_qkv_b")

        # ---------------- ImprovedCharacterHead ----------------
        att = ln(attn(enhanced, bc_qkv), "bc_ln1_g", "bc_ln1_b")
        h1 = _gelu(_mm3(att, wa("bc_fc1_w")) + vec("bc_fc1_b"))    # dropout=id
        h1 = ln(h1 + att, "bc_ln2_g", "bc_ln2_b")
        h2 = _gelu(_mm3(h1, wa("bc_fc2_w")) + vec("bc_fc2_b"))
        h2 = ln(h2, "bc_ln3_g", "bc_ln3_b")
        # classifier zero-padded to 128 lanes -> lane-dense logits
        base_logits = _mm3(h2, wb("bc_cls_w")) + vec("bc_cls_b")   # (B,T,VbP)

        # ---------------- DiacriticAwareHead ----------------
        att2 = ln(attn(enhanced, dc_qkv), "dc_ln1_g", "dc_ln1_b")
        # dc_proj o bc_cls fused offline -> consumes h2 directly (no padded
        # base-logit matmul on the critical path)
        bcf = _mm3(h2, wb("dc_pc_w")) + vec("dc_pc_b")             # (B,T,Hh)
        comb = _gelu(_mm3(att2, wa("dc_comb_wa"))
                     + _mm3(bcf, wb("dc_comb_wb")) + vec("dc_comb_b"))
        comb = ln(comb, "dc_ln2_g", "dc_ln2_b")
        h3 = _gelu(_mm3(comb, wa("dc_fc_w")) + vec("dc_fc_b"))
        h3 = ln(h3, "dc_ln3_g", "dc_ln3_b")
        dia_logits = _mm3(h3, wb("dc_cls_w")) + vec("dc_cls_b")    # (B,T,VdP)

        # single lane-dense output slab: [enhanced(pad 128) | base | diacritic]
        enh_pad = jnp.concatenate(
            [enhanced, jnp.zeros((B, T, 128 - H), jnp.float32)], axis=-1)
        out_ref[...] = jnp.concatenate([enh_pad, base_logits, dia_logits],
                                       axis=-1)

    return kernel


# ---------------------------------------------------------------------------
# wrapper: single, grid-less pallas_call for the whole custom forward path
# ---------------------------------------------------------------------------
def fused_forward(x, wa, wb, vec, Vb, Vd, meta):
    B, T, H = x.shape
    VbP, VdP = meta["VbP"], meta["VdP"]
    kernel = build_kernel(B, T, H, meta)

    out = pl.pallas_call(
        kernel,
        out_shape=jax.ShapeDtypeStruct((B, T, 128 + VbP + VdP), jnp.float32),
    )(x, wa, wb, vec)

    enhanced = out[..., :H]
    base = out[..., 128:128 + Vb]
    dia = out[..., 128 + VbP:128 + VbP + Vd]
    return {"base_char_logits": base,
            "diacritic_logits": dia,
            "enhanced_hidden_states": enhanced}


# ---------------------------------------------------------------------------
# parameter init (torch-style layouts)
# ---------------------------------------------------------------------------
def init_params(key, H, Vb, Vd):
    keys = iter(jax.random.split(key, 64))

    def lin(out_d, in_d):
        bound = 1.0 / np.sqrt(in_d)
        W = jax.random.uniform(next(keys), (out_d, in_d), jnp.float32, -bound, bound)
        b = jax.random.uniform(next(keys), (1, out_d), jnp.float32, -bound, bound)
        return W, b

    def gru_dir():
        bound = 1.0 / np.sqrt(H)
        wih = jax.random.uniform(next(keys), (3 * H, H), jnp.float32, -bound, bound)
        whh = jax.random.uniform(next(keys), (3 * H, H), jnp.float32, -bound, bound)
        bih = jax.random.uniform(next(keys), (1, 3 * H), jnp.float32, -bound, bound)
        bhh = jax.random.uniform(next(keys), (1, 3 * H), jnp.float32, -bound, bound)
        return wih, whh, bih, bhh

    def ln(d):
        return jnp.ones((1, d), jnp.float32), jnp.zeros((1, d), jnp.float32)

    p = {}
    p["gru_f"] = gru_dir()
    p["gru_b"] = gru_dir()
    p["ctx_proj"] = lin(H, 2 * H)
    # ImprovedCharacterHead
    p["bc_q"] = lin(H, H); p["bc_k"] = lin(H, H); p["bc_v"] = lin(H, H)
    p["bc_ln1"] = ln(H)
    p["bc_fc1"] = lin(H, H)
    p["bc_ln2"] = ln(H)
    p["bc_fc2"] = lin(H // 2, H)
    p["bc_ln3"] = ln(H // 2)
    p["bc_cls"] = lin(Vb, H // 2)
    # DiacriticAwareHead
    p["dc_q"] = lin(H, H); p["dc_k"] = lin(H, H); p["dc_v"] = lin(H, H)
    p["dc_ln1"] = ln(H)
    p["dc_proj"] = lin(H // 2, Vb)
    p["dc_comb"] = lin(H, H + H // 2)
    p["dc_ln2"] = ln(H)
    p["dc_fc"] = lin(H // 2, H)
    p["dc_ln3"] = ln(H // 2)
    p["dc_cls"] = lin(Vd, H // 2)
    return p


# ---------------------------------------------------------------------------
# packing: 3 slabs (weights-H, weights-H/2, bias/LN vectors) + static offsets
# ---------------------------------------------------------------------------
def pack_params(p, H, Vb, Vd):
    Hh = H // 2
    VbP = _round_up(Vb, 128)
    VdP = _round_up(Vd, 128)
    VECW = _round_up(max(3 * H, VbP, VdP), 128)

    # fuse dc_proj o bc_cls :  bcf = h2 @ (Wp@Wc)^T + (bc@Wp^T + bp)
    Wc, bc = p["bc_cls"]          # (Vb, Hh), (1, Vb)
    Wp, bp = p["dc_proj"]         # (Hh, Vb), (1, Hh)
    dc_pc_w = Wp @ Wc             # (Hh, Hh)
    dc_pc_b = bc @ Wp.T + bp      # (1, Hh)

    comb_w, comb_b = p["dc_comb"]  # (H, H + Hh)

    def pad_rows(W, rows):
        return jnp.zeros((rows, W.shape[1]), jnp.float32).at[:W.shape[0], :].set(W)

    # ---- slab A : weights contracting over H ----
    wa_entries = [
        ("gru_f_wi", p["gru_f"][0]),
        ("gru_f_wh", p["gru_f"][1]),
        ("gru_b_wi", p["gru_b"][0]),
        ("gru_b_wh", p["gru_b"][1]),
        ("ctx_wf", p["ctx_proj"][0][:, :H]),
        ("ctx_wb", p["ctx_proj"][0][:, H:]),
        ("qkv_w", jnp.concatenate([p["bc_q"][0], p["bc_k"][0], p["bc_v"][0],
                                   p["dc_q"][0], p["dc_k"][0], p["dc_v"][0]],
                                  axis=0)),
        ("bc_fc1_w", p["bc_fc1"][0]),
        ("dc_comb_wa", comb_w[:, :H]),
        ("bc_fc2_w", p["bc_fc2"][0]),
        ("dc_fc_w", p["dc_fc"][0]),
    ]
    # ---- slab B : weights contracting over H // 2 ----
    wb_entries = [
        ("bc_cls_w", pad_rows(p["bc_cls"][0], VbP)),
        ("dc_cls_w", pad_rows(p["dc_cls"][0], VdP)),
        ("dc_pc_w", dc_pc_w),
        ("dc_comb_wb", comb_w[:, H:]),
    ]

    def stack_weights(entries):
        off, rows, blocks = {}, 0, []
        for name, W in entries:
            n = W.shape[0]
            assert n % 8 == 0, f"{name}: {n} rows not sublane-aligned"
            off[name] = (rows, n)
            blocks.append(W.astype(jnp.float32))
            rows += n
        return off, jnp.concatenate(blocks, axis=0)

    wa_off, wa = stack_weights(wa_entries)
    wb_off, wb = stack_weights(wb_entries)

    # ---- slab C : biases / LayerNorm vectors, one lane-padded row each ----
    vec_entries = [
        ("gru_f_bi", p["gru_f"][2]), ("gru_f_bh", p["gru_f"][3]),
        ("gru_b_bi", p["gru_b"][2]), ("gru_b_bh", p["gru_b"][3]),
        ("ctx_b", p["ctx_proj"][1]),
        ("bc_qkv_b", jnp.concatenate([p["bc_q"][1], p["bc_k"][1], p["bc_v"][1]],
                                     axis=1)),
        ("dc_qkv_b", jnp.concatenate([p["dc_q"][1], p["dc_k"][1], p["dc_v"][1]],
                                     axis=1)),
        ("bc_ln1_g", p["bc_ln1"][0]), ("bc_ln1_b", p["bc_ln1"][1]),
        ("bc_fc1_b", p["bc_fc1"][1]),
        ("bc_ln2_g", p["bc_ln2"][0]), ("bc_ln2_b", p["bc_ln2"][1]),
        ("bc_fc2_b", p["bc_fc2"][1]),
        ("bc_ln3_g", p["bc_ln3"][0]), ("bc_ln3_b", p["bc_ln3"][1]),
        ("bc_cls_b", p["bc_cls"][1], VbP),       # read back at padded width
        ("dc_ln1_g", p["dc_ln1"][0]), ("dc_ln1_b", p["dc_ln1"][1]),
        ("dc_pc_b", dc_pc_b),
        ("dc_comb_b", comb_b),
        ("dc_ln2_g", p["dc_ln2"][0]), ("dc_ln2_b", p["dc_ln2"][1]),
        ("dc_fc_b", p["dc_fc"][1]),
        ("dc_ln3_g", p["dc_ln3"][0]), ("dc_ln3_b", p["dc_ln3"][1]),
        ("dc_cls_b", p["dc_cls"][1], VdP),       # read back at padded width
    ]
    vec_off, rows = {}, []
    for i, ent in enumerate(vec_entries):
        if len(ent) == 3:
            name, v, w = ent
        else:
            name, v = ent
            w = v.shape[1]
        vec_off[name] = (i, w)
        row = jnp.zeros((1, VECW), jnp.float32).at[:, :v.shape[1]].set(v)
        rows.append(row)
    vec = jnp.concatenate(rows, axis=0)

    meta = {"wa": wa_off, "wb": wb_off, "vec": vec_off, "VbP": VbP, "VdP": VdP}
    return wa, wb, vec, meta


# ---------------------------------------------------------------------------
# pure-JAX reference (original, unfused math)
# ---------------------------------------------------------------------------
def _gru_dir_ref(x, wih, whh, bih, bhh, reverse):
    B, T, H = x.shape
    h = jnp.zeros((B, H), jnp.float32)
    outs = [None] * T
    order = range(T - 1, -1, -1) if reverse else range(T)
    for t in order:
        xt = x[:, t, :]
        gi = xt @ wih.T + bih
        gh = h @ whh.T + bhh
        r = jax.nn.sigmoid(gi[:, :H] + gh[:, :H])
        z = jax.nn.sigmoid(gi[:, H:2 * H] + gh[:, H:2 * H])
        n = jnp.tanh(gi[:, 2 * H:] + r * gh[:, 2 * H:])
        h = (1.0 - z) * n + z * h
        outs[t] = h
    return jnp.stack(outs, axis=1)


def _attn_ref(x, qp, kp, vp):
    H = x.shape[-1]
    q = x @ qp[0].T + qp[1]
    k = x @ kp[0].T + kp[1]
    v = x @ vp[0].T + vp[1]
    scores = jnp.einsum("btd,bsd->bts", q, k) / jnp.sqrt(jnp.float32(H))
    w = jax.nn.softmax(scores, axis=-1)
    return x + jnp.einsum("bts,bsd->btd", w, v)


def _lin_ref(x, w, b, activation=None):
    y = x @ w.T + b
    return _gelu(y) if activation == "gelu" else y


def _ln_ref(x, g, b):
    mu = jnp.mean(x, axis=-1, keepdims=True)
    var = jnp.mean((x - mu) ** 2, axis=-1, keepdims=True)
    return (x - mu) * lax.rsqrt(var + 1e-5) * g + b


def reference_forward(params, hidden):
    B, T, H = hidden.shape
    N = B * T
    f = _gru_dir_ref(hidden, *params["gru_f"], reverse=False)
    bwd = _gru_dir_ref(hidden, *params["gru_b"], reverse=True)
    ctx = jnp.concatenate([f, bwd], axis=-1).reshape(N, 2 * H)
    ctx = _lin_ref(ctx, *params["ctx_proj"])
    enhanced = hidden.reshape(N, H) + ctx
    enhanced3 = enhanced.reshape(B, T, H)

    att = _attn_ref(enhanced3, params["bc_q"], params["bc_k"], params["bc_v"]).reshape(N, H)
    att = _ln_ref(att, *params["bc_ln1"])
    x = _lin_ref(att, *params["bc_fc1"], activation="gelu")
    x = _ln_ref(x + att, *params["bc_ln2"])
    x = _lin_ref(x, *params["bc_fc2"], activation="gelu")
    x = _ln_ref(x, *params["bc_ln3"])
    base_logits = _lin_ref(x, *params["bc_cls"])

    att2 = _attn_ref(enhanced3, params["dc_q"], params["dc_k"], params["dc_v"]).reshape(N, H)
    att2 = _ln_ref(att2, *params["dc_ln1"])
    bcf = _lin_ref(base_logits, *params["dc_proj"])
    comb = jnp.concatenate([att2, bcf], axis=-1)
    y = _lin_ref(comb, *params["dc_comb"], activation="gelu")
    y = _ln_ref(y, *params["dc_ln2"])
    y = _lin_ref(y, *params["dc_fc"], activation="gelu")
    y = _ln_ref(y, *params["dc_ln3"])
    dia_logits = _lin_ref(y, *params["dc_cls"])

    return {"base_char_logits": base_logits.reshape(B, T, -1),
            "diacritic_logits": dia_logits.reshape(B, T, -1),
            "enhanced_hidden_states": enhanced3}


# ---------------------------------------------------------------------------
if __name__ == "__main__":
    B, T, H = 2, 8, 32       # batch, decoder sequence length, decoder hidden size
    Vb, Vd = 24, 16          # base-character vocab, diacritic vocab

    key = jax.random.PRNGKey(0)
    kparam, kx = jax.random.split(key)
    params = init_params(kparam, H, Vb, Vd)
    wa, wb, vec, meta = pack_params(params, H, Vb, Vd)
    decoder_hidden_states = jax.random.normal(kx, (B, T, H), jnp.float32)

    out = fused_forward(decoder_hidden_states, wa, wb, vec, Vb, Vd, meta)
    jax.block_until_ready(out)

    ref = reference_forward(params, decoder_hidden_states)
    np.testing.assert_allclose(np.asarray(out["enhanced_hidden_states"]),
                               np.asarray(ref["enhanced_hidden_states"]),
                               rtol=2e-2, atol=2e-2)
    np.testing.assert_allclose(np.asarray(out["base_char_logits"]),
                               np.asarray(ref["base_char_logits"]),
                               rtol=2e-2, atol=2e-2)
    np.testing.assert_allclose(np.asarray(out["diacritic_logits"]),
                               np.asarray(ref["diacritic_logits"]),
                               rtol=2e-2, atol=2e-2)

    print("KERNEL_OK")
</pallas_src>

<mosaic_0001>
module attributes {stable_mosaic.version = 11 : i64} {
  func.func @kernel(%arg0: memref<2x8x32xf32, #tpu.memory_space<vmem>>, %arg1: memref<736x32xf32, #tpu.memory_space<vmem>>, %arg2: memref<304x16xf32, #tpu.memory_space<vmem>>, %arg3: memref<26x128xf32, #tpu.memory_space<vmem>>, %arg4: memref<2x8x384xf32, #tpu.memory_space<vmem>>) attributes {dimension_semantics = [], scalar_prefetch = 0 : i64, scratch_operands = 0 : i64, tpu.core_type = #tpu.core_type<tc>} {
    %c0 = arith.constant 0 : index
    %c0_0 = arith.constant 0 : index
    %c0_1 = arith.constant 0 : index
    %0 = vector.load %arg0[%c0, %c0_0, %c0_1] : memref<2x8x32xf32, #tpu.memory_space<vmem>>, vector<2x8x32xf32>
    %c0_2 = arith.constant 0 : index
    %c0_3 = arith.constant 0 : index
    %1 = vector.load %arg1[%c0_2, %c0_3] : memref<736x32xf32, #tpu.memory_space<vmem>>, vector<96x32xf32>
    %cst = arith.constant dense<0.000000e+00> : vector<2x8x96xf32>
    %2 = tpu.matmul %0, %1, %cst {dimension_numbers = #tpu.dot_dimension_numbers<[2], [1], [0, 1], [0], [0, 0, 0, 1, 1, 0], [], []>} : vector<2x8x32xf32>, vector<96x32xf32>, vector<2x8x96xf32> -> vector<2x8x96xf32>
    %c0_4 = arith.constant 0 : index
    %c0_5 = arith.constant 0 : index
    %3 = vector.load %arg3[%c0_4, %c0_5] : memref<26x128xf32, #tpu.memory_space<vmem>>, vector<1x96xf32>
    %4 = vector.shape_cast %3 : vector<1x96xf32> to vector<1x1x96xf32>
    %5 = vector.broadcast %4 : vector<1x1x96xf32> to vector<2x8x96xf32>
    %6 = arith.addf %2, %5 : vector<2x8x96xf32>
    %c192 = arith.constant 192 : index
    %c0_6 = arith.constant 0 : index
    %7 = vector.load %arg1[%c192, %c0_6] : memref<736x32xf32, #tpu.memory_space<vmem>>, vector<96x32xf32>
    %cst_7 = arith.constant dense<0.000000e+00> : vector<2x8x96xf32>
    %8 = tpu.matmul %0, %7, %cst_7 {dimension_numbers = #tpu.dot_dimension_numbers<[2], [1], [0, 1], [0], [0, 0, 0, 1, 1, 0], [], []>} : vector<2x8x32xf32>, vector<96x32xf32>, vector<2x8x96xf32> -> vector<2x8x96xf32>
    %c2 = arith.constant 2 : index
    %c0_8 = arith.constant 0 : index
    %9 = vector.load %arg3[%c2, %c0_8] : memref<26x128xf32, #tpu.memory_space<vmem>>, vector<1x96xf32>
    %10 = vector.shape_cast %9 : vector<1x96xf32> to vector<1x1x96xf32>
    %11 = vector.broadcast %10 : vector<1x1x96xf32> to vector<2x8x96xf32>
    %12 = arith.addf %8, %11 : vector<2x8x96xf32>
    %c96 = arith.constant 96 : index
    %c0_9 = arith.constant 0 : index
    %13 = vector.load %arg1[%c96, %c0_9] : memref<736x32xf32, #tpu.memory_space<vmem>>, vector<96x32xf32>
    %c1 = arith.constant 1 : index
    %c0_10 = arith.constant 0 : index
    %14 = vector.load %arg3[%c1, %c0_10] : memref<26x128xf32, #tpu.memory_space<vmem>>, vector<1x96xf32>
    %c288 = arith.constant 288 : index
    %c0_11 = arith.constant 0 : index
    %15 = vector.load %arg1[%c288, %c0_11] : memref<736x32xf32, #tpu.memory_space<vmem>>, vector<96x32xf32>
    %c3 = arith.constant 3 : index
    %c0_12 = arith.constant 0 : index
    %16 = vector.load %arg3[%c3, %c0_12] : memref<26x128xf32, #tpu.memory_space<vmem>>, vector<1x96xf32>
    %cst_13 = arith.constant 0.000000e+00 : f32
    %17 = vector.broadcast %cst_13 : f32 to vector<2x32xf32>
    %cst_14 = arith.constant 0.000000e+00 : f32
    %18 = vector.broadcast %cst_14 : f32 to vector<2x32xf32>
    %cst_15 = arith.constant dense<0.000000e+00> : vector<2x96xf32>
    %19 = tpu.matmul %17, %13, %cst_15 {dimension_numbers = #tpu.dot_dimension_numbers<[1], [1], [0], [0], [0, 0, 1, 0], [], []>} : vector<2x32xf32>, vector<96x32xf32>, vector<2x96xf32> -> vector<2x96xf32>
    %20 = vector.broadcast %14 : vector<1x96xf32> to vector<2x96xf32>
    %21 = arith.addf %19, %20 : vector<2x96xf32>
    %cst_16 = arith.constant dense<0.000000e+00> : vector<2x96xf32>
    %22 = tpu.matmul %18, %15, %cst_16 {dimension_numbers = #tpu.dot_dimension_numbers<[1], [1], [0], [0], [0, 0, 1, 0], [], []>} : vector<2x32xf32>, vector<96x32xf32>, vector<2x96xf32> -> vector<2x96xf32>
    %23 = vector.broadcast %16 : vector<1x96xf32> to vector<2x96xf32>
    %24 = arith.addf %22, %23 : vector<2x96xf32>
    %25 = vector.extract_strided_slice %6 {offsets = [0, 0, 0], sizes = [2, 1, 96], strides = [1, 1, 1]} : vector<2x8x96xf32> to vector<2x1x96xf32>
    %26 = vector.shape_cast %25 : vector<2x1x96xf32> to vector<2x96xf32>
    %27 = vector.extract_strided_slice %12 {offsets = [0, 7, 0], sizes = [2, 1, 96], strides = [1, 1, 1]} : vector<2x8x96xf32> to vector<2x1x96xf32>
    %28 = vector.shape_cast %27 : vector<2x1x96xf32> to vector<2x96xf32>
    %29 = vector.extract_strided_slice %26 {offsets = [0, 0], sizes = [2, 32], strides = [1, 1]} : vector<2x96xf32> to vector<2x32xf32>
    %30 = vector.extract_strided_slice %21 {offsets = [0, 0], sizes = [2, 32], strides = [1, 1]} : vector<2x96xf32> to vector<2x32xf32>
    %31 = arith.addf %29, %30 : vector<2x32xf32>
    %32 = arith.negf %31 : vector<2x32xf32>
    %33 = math.exp %32 : vector<2x32xf32>
    %cst_17 = arith.constant 1.000000e+00 : f32
    %34 = vector.broadcast %cst_17 : f32 to vector<2x32xf32>
    %35 = arith.addf %34, %33 : vector<2x32xf32>
    %36 = arith.divf %34, %35 : vector<2x32xf32>
    %37 = vector.extract_strided_slice %26 {offsets = [0, 32], sizes = [2, 32], strides = [1, 1]} : vector<2x96xf32> to vector<2x32xf32>
    %38 = vector.extract_strided_slice %21 {offsets = [0, 32], sizes = [2, 32], strides = [1, 1]} : vector<2x96xf32> to vector<2x32xf32>
    %39 = arith.addf %37, %38 : vector<2x32xf32>
    %40 = arith.negf %39 : vector<2x32xf32>
    %41 = math.exp %40 : vector<2x32xf32>
    %cst_18 = arith.constant 1.000000e+00 : f32
    %42 = vector.broadcast %cst_18 : f32 to vector<2x32xf32>
    %43 = arith.addf %42, %41 : vector<2x32xf32>
    %44 = arith.divf %42, %43 : vector<2x32xf32>
    %45 = vector.extract_strided_slice %26 {offsets = [0, 64], sizes = [2, 32], strides = [1, 1]} : vector<2x96xf32> to vector<2x32xf32>
    %46 = vector.extract_strided_slice %21 {offsets = [0, 64], sizes = [2, 32], strides = [1, 1]} : vector<2x96xf32> to vector<2x32xf32>
    %47 = arith.mulf %36, %46 : vector<2x32xf32>
    %48 = arith.addf %45, %47 : vector<2x32xf32>
    %49 = math.tanh %48 : vector<2x32xf32>
    %cst_19 = arith.constant 1.000000e+00 : f32
    %50 = vector.broadcast %cst_19 : f32 to vector<2x32xf32>
    %51 = arith.subf %50, %44 : vector<2x32xf32>
    %52 = arith.mulf %51, %49 : vector<2x32xf32>
    %53 = arith.mulf %44, %17 : vector<2x32xf32>
    %54 = arith.addf %52, %53 : vector<2x32xf32>
    %55 = vector.extract_strided_slice %28 {offsets = [0, 0], sizes = [2, 32], strides = [1, 1]} : vector<2x96xf32> to vector<2x32xf32>
    %56 = vector.extract_strided_slice %24 {offsets = [0, 0], sizes = [2, 32], strides = [1, 1]} : vector<2x96xf32> to vector<2x32xf32>
    %57 = arith.addf %55, %56 : vector<2x32xf32>
    %58 = arith.negf %57 : vector<2x32xf32>
    %59 = math.exp %58 : vector<2x32xf32>
    %cst_20 = arith.constant 1.000000e+00 : f32
    %60 = vector.broadcast %cst_20 : f32 to vector<2x32xf32>
    %61 = arith.addf %60, %59 : vector<2x32xf32>
    %62 = arith.divf %60, %61 : vector<2x32xf32>
    %63 = vector.extract_strided_slice %28 {offsets = [0, 32], sizes = [2, 32], strides = [1, 1]} : vector<2x96xf32> to vector<2x32xf32>
    %64 = vector.extract_strided_slice %24 {offsets = [0, 32], sizes = [2, 32], strides = [1, 1]} : vector<2x96xf32> to vector<2x32xf32>
    %65 = arith.addf %63, %64 : vector<2x32xf32>
    %66 = arith.negf %65 : vector<2x32xf32>
    %67 = math.exp %66 : vector<2x32xf32>
    %cst_21 = arith.constant 1.000000e+00 : f32
    %68 = vector.broadcast %cst_21 : f32 to vector<2x32xf32>
    %69 = arith.addf %68, %67 : vector<2x32xf32>
    %70 = arith.divf %68, %69 : vector<2x32xf32>
    %71 = vector.extract_strided_slice %28 {offsets = [0, 64], sizes = [2, 32], strides = [1, 1]} : vector<2x96xf32> to vector<2x32xf32>
    %72 = vector.extract_strided_slice %24 {offsets = [0, 64], sizes = [2, 32], strides = [1, 1]} : vector<2x96xf32> to vector<2x32xf32>
    %73 = arith.mulf %62, %72 : vector<2x32xf32>
    %74 = arith.addf %71, %73 : vector<2x32xf32>
    %75 = math.tanh %74 : vector<2x32xf32>
    %cst_22 = arith.constant 1.000000e+00 : f32
    %76 = vector.broadcast %cst_22 : f32 to vector<2x32xf32>
    %77 = arith.subf %76, %70 : vector<2x32xf32>
    %78 = arith.mulf %77, %75 : vector<2x32xf32>
    %79 = arith.mulf %70, %18 : vector<2x32xf32>
    %80 = arith.addf %78, %79 : vector<2x32xf32>
    %cst_23 = arith.constant dense<0.000000e+00> : vector<2x96xf32>
    %81 = tpu.matmul %54, %13, %cst_23 {dimension_numbers = #tpu.dot_dimension_numbers<[1], [1], [0], [0], [0, 0, 1, 0], [], []>} : vector<2x32xf32>, vector<96x32xf32>, vector<2x96xf32> -> vector<2x96xf32>
    %82 = vector.broadcast %14 : vector<1x96xf32> to vector<2x96xf32>
    %83 = arith.addf %81, %82 : vector<2x96xf32>
    %cst_24 = arith.constant dense<0.000000e+00> : vector<2x96xf32>
    %84 = tpu.matmul %80, %15, %cst_24 {dimension_numbers = #tpu.dot_dimension_numbers<[1], [1], [0], [0], [0, 0, 1, 0], [], []>} : vector<2x32xf32>, vector<96x32xf32>, vector<2x96xf32> -> vector<2x96xf32>
    %85 = vector.broadcast %16 : vector<1x96xf32> to vector<2x96xf32>
    %86 = arith.addf %84, %85 : vector<2x96xf32>
    %87 = vector.extract_strided_slice %6 {offsets = [0, 1, 0], sizes = [2, 1, 96], strides = [1, 1, 1]} : vector<2x8x96xf32> to vector<2x1x96xf32>
    %88 = vector.shape_cast %87 : vector<2x1x96xf32> to vector<2x96xf32>
    %89 = vector.extract_strided_slice %12 {offsets = [0, 6, 0], sizes = [2, 1, 96], strides = [1, 1, 1]} : vector<2x8x96xf32> to vector<2x1x96xf32>
    %90 = vector.shape_cast %89 : vector<2x1x96xf32> to vector<2x96xf32>
    %91 = vector.extract_strided_slice %88 {offsets = [0, 0], sizes = [2, 32], strides = [1, 1]} : vector<2x96xf32> to vector<2x32xf32>
    %92 = vector.extract_strided_slice %83 {offsets = [0, 0], sizes = [2, 32], strides = [1, 1]} : vector<2x96xf32> to vector<2x32xf32>
    %93 = arith.addf %91, %92 : vector<2x32xf32>
    %94 = arith.negf %93 : vector<2x32xf32>
    %95 = math.exp %94 : vector<2x32xf32>
    %cst_25 = arith.constant 1.000000e+00 : f32
    %96 = vector.broadcast %cst_25 : f32 to vector<2x32xf32>
    %97 = arith.addf %96, %95 : vector<2x32xf32>
    %98 = arith.divf %96, %97 : vector<2x32xf32>
    %99 = vector.extract_strided_slice %88 {offsets = [0, 32], sizes = [2, 32], strides = [1, 1]} : vector<2x96xf32> to vector<2x32xf32>
    %100 = vector.extract_strided_slice %83 {offsets = [0, 32], sizes = [2, 32], strides = [1, 1]} : vector<2x96xf32> to vector<2x32xf32>
    %101 = arith.addf %99, %100 : vector<2x32xf32>
    %102 = arith.negf %101 : vector<2x32xf32>
    %103 = math.exp %102 : vector<2x32xf32>
    %cst_26 = arith.constant 1.000000e+00 : f32
    %104 = vector.broadcast %cst_26 : f32 to vector<2x32xf32>
    %105 = arith.addf %104, %103 : vector<2x32xf32>
    %106 = arith.divf %104, %105 : vector<2x32xf32>
    %107 = vector.extract_strided_slice %88 {offsets = [0, 64], sizes = [2, 32], strides = [1, 1]} : vector<2x96xf32> to vector<2x32xf32>
    %108 = vector.extract_strided_slice %83 {offsets = [0, 64], sizes = [2, 32], strides = [1, 1]} : vector<2x96xf32> to vector<2x32xf32>
    %109 = arith.mulf %98, %108 : vector<2x32xf32>
    %110 = arith.addf %107, %109 : vector<2x32xf32>
    %111 = math.tanh %110 : vector<2x32xf32>
    %cst_27 = arith.constant 1.000000e+00 : f32
    %112 = vector.broadcast %cst_27 : f32 to vector<2x32xf32>
    %113 = arith.subf %112, %106 : vector<2x32xf32>
    %114 = arith.mulf %113, %111 : vector<2x32xf32>
    %115 = arith.mulf %106, %54 : vector<2x32xf32>
    %116 = arith.addf %114, %115 : vector<2x32xf32>
    %117 = vector.extract_strided_slice %90 {offsets = [0, 0], sizes = [2, 32], strides = [1, 1]} : vector<2x96xf32> to vector<2x32xf32>
    %118 = vector.extract_strided_slice %86 {offsets = [0, 0], sizes = [2, 32], strides = [1, 1]} : vector<2x96xf32> to vector<2x32xf32>
    %119 = arith.addf %117, %118 : vector<2x32xf32>
    %120 = arith.negf %119 : vector<2x32xf32>
    %121 = math.exp %120 : vector<2x32xf32>
    %cst_28 = arith.constant 1.000000e+00 : f32
    %122 = vector.broadcast %cst_28 : f32 to vector<2x32xf32>
    %123 = arith.addf %122, %121 : vector<2x32xf32>
    %124 = arith.divf %122, %123 : vector<2x32xf32>
    %125 = vector.extract_strided_slice %90 {offsets = [0, 32], sizes = [2, 32], strides = [1, 1]} : vector<2x96xf32> to vector<2x32xf32>
    %126 = vector.extract_strided_slice %86 {offsets = [0, 32], sizes = [2, 32], strides = [1, 1]} : vector<2x96xf32> to vector<2x32xf32>
    %127 = arith.addf %125, %126 : vector<2x32xf32>
    %128 = arith.negf %127 : vector<2x32xf32>
    %129 = math.exp %128 : vector<2x32xf32>
    %cst_29 = arith.constant 1.000000e+00 : f32
    %130 = vector.broadcast %cst_29 : f32 to vector<2x32xf32>
    %131 = arith.addf %130, %129 : vector<2x32xf32>
    %132 = arith.divf %130, %131 : vector<2x32xf32>
    %133 = vector.extract_strided_slice %90 {offsets = [0, 64], sizes = [2, 32], strides = [1, 1]} : vector<2x96xf32> to vector<2x32xf32>
    %134 = vector.extract_strided_slice %86 {offsets = [0, 64], sizes = [2, 32], strides = [1, 1]} : vector<2x96xf32> to vector<2x32xf32>
    %135 = arith.mulf %124, %134 : vector<2x32xf32>
    %136 = arith.addf %133, %135 : vector<2x32xf32>
    %137 = math.tanh %136 : vector<2x32xf32>
    %cst_30 = arith.constant 1.000000e+00 : f32
    %138 = vector.broadcast %cst_30 : f32 to vector<2x32xf32>
    %139 = arith.subf %138, %132 : vector<2x32xf32>
    %140 = arith.mulf %139, %137 : vector<2x32xf32>
    %141 = arith.mulf %132, %80 : vector<2x32xf32>
    %142 = arith.addf %140, %141 : vector<2x32xf32>
    %cst_31 = arith.constant dense<0.000000e+00> : vector<2x96xf32>
    %143 = tpu.matmul %116, %13, %cst_31 {dimension_numbers = #tpu.dot_dimension_numbers<[1], [1], [0], [0], [0, 0, 1, 0], [], []>} : vector<2x32xf32>, vector<96x32xf32>, vector<2x96xf32> -> vector<2x96xf32>
    %144 = vector.broadcast %14 : vector<1x96xf32> to vector<2x96xf32>
    %145 = arith.addf %143, %144 : vector<2x96xf32>
    %cst_32 = arith.constant dense<0.000000e+00> : vector<2x96xf32>
    %146 = tpu.matmul %142, %15, %cst_32 {dimension_numbers = #tpu.dot_dimension_numbers<[1], [1], [0], [0], [0, 0, 1, 0], [], []>} : vector<2x32xf32>, vector<96x32xf32>, vector<2x96xf32> -> vector<2x96xf32>
    %147 = vector.broadcast %16 : vector<1x96xf32> to vector<2x96xf32>
    %148 = arith.addf %146, %147 : vector<2x96xf32>
    %149 = vector.extract_strided_slice %6 {offsets = [0, 2, 0], sizes = [2, 1, 96], strides = [1, 1, 1]} : vector<2x8x96xf32> to vector<2x1x96xf32>
    %150 = vector.shape_cast %149 : vector<2x1x96xf32> to vector<2x96xf32>
    %151 = vector.extract_strided_slice %12 {offsets = [0, 5, 0], sizes = [2, 1, 96], strides = [1, 1, 1]} : vector<2x8x96xf32> to vector<2x1x96xf32>
    %152 = vector.shape_cast %151 : vector<2x1x96xf32> to vector<2x96xf32>
    %153 = vector.extract_strided_slice %150 {offsets = [0, 0], sizes = [2, 32], strides = [1, 1]} : vector<2x96xf32> to vector<2x32xf32>
    %154 = vector.extract_strided_slice %145 {offsets = [0, 0], sizes = [2, 32], strides = [1, 1]} : vector<2x96xf32> to vector<2x32xf32>
    %155 = arith.addf %153, %154 : vector<2x32xf32>
    %156 = arith.negf %155 : vector<2x32xf32>
    %157 = math.exp %156 : vector<2x32xf32>
    %cst_33 = arith.constant 1.000000e+00 : f32
    %158 = vector.broadcast %cst_33 : f32 to vector<2x32xf32>
    %159 = arith.addf %158, %157 : vector<2x32xf32>
    %160 = arith.divf %158, %159 : vector<2x32xf32>
    %161 = vector.extract_strided_slice %150 {offsets = [0, 32], sizes = [2, 32], strides = [1, 1]} : vector<2x96xf32> to vector<2x32xf32>
    %162 = vector.extract_strided_slice %145 {offsets = [0, 32], sizes = [2, 32], strides = [1, 1]} : vector<2x96xf32> to vector<2x32xf32>
    %163 = arith.addf %161, %162 : vector<2x32xf32>
    %164 = arith.negf %163 : vector<2x32xf32>
    %165 = math.exp %164 : vector<2x32xf32>
    %cst_34 = arith.constant 1.000000e+00 : f32
    %166 = vector.broadcast %cst_34 : f32 to vector<2x32xf32>
    %167 = arith.addf %166, %165 : vector<2x32xf32>
    %168 = arith.divf %166, %167 : vector<2x32xf32>
    %169 = vector.extract_strided_slice %150 {offsets = [0, 64], sizes = [2, 32], strides = [1, 1]} : vector<2x96xf32> to vector<2x32xf32>
    %170 = vector.extract_strided_slice %145 {offsets = [0, 64], sizes = [2, 32], strides = [1, 1]} : vector<2x96xf32> to vector<2x32xf32>
    %171 = arith.mulf %160, %170 : vector<2x32xf32>
    %172 = arith.addf %169, %171 : vector<2x32xf32>
    %173 = math.tanh %172 : vector<2x32xf32>
    %cst_35 = arith.constant 1.000000e+00 : f32
    %174 = vector.broadcast %cst_35 : f32 to vector<2x32xf32>
    %175 = arith.subf %174, %168 : vector<2x32xf32>
    %176 = arith.mulf %175, %173 : vector<2x32xf32>
    %177 = arith.mulf %168, %116 : vector<2x32xf32>
    %178 = arith.addf %176, %177 : vector<2x32xf32>
    %179 = vector.extract_strided_slice %152 {offsets = [0, 0], sizes = [2, 32], strides = [1, 1]} : vector<2x96xf32> to vector<2x32xf32>
    %180 = vector.extract_strided_slice %148 {offsets = [0, 0], sizes = [2, 32], strides = [1, 1]} : vector<2x96xf32> to vector<2x32xf32>
    %181 = arith.addf %179, %180 : vector<2x32xf32>
    %182 = arith.negf %181 : vector<2x32xf32>
    %183 = math.exp %182 : vector<2x32xf32>
    %cst_36 = arith.constant 1.000000e+00 : f32
    %184 = vector.broadcast %cst_36 : f32 to vector<2x32xf32>
    %185 = arith.addf %184, %183 : vector<2x32xf32>
    %186 = arith.divf %184, %185 : vector<2x32xf32>
    %187 = vector.extract_strided_slice %152 {offsets = [0, 32], sizes = [2, 32], strides = [1, 1]} : vector<2x96xf32> to vector<2x32xf32>
    %188 = vector.extract_strided_slice %148 {offsets = [0, 32], sizes = [2, 32], strides = [1, 1]} : vector<2x96xf32> to vector<2x32xf32>
    %189 = arith.addf %187, %188 : vector<2x32xf32>
    %190 = arith.negf %189 : vector<2x32xf32>
    %191 = math.exp %190 : vector<2x32xf32>
    %cst_37 = arith.constant 1.000000e+00 : f32
    %192 = vector.broadcast %cst_37 : f32 to vector<2x32xf32>
    %193 = arith.addf %192, %191 : vector<2x32xf32>
    %194 = arith.divf %192, %193 : vector<2x32xf32>
    %195 = vector.extract_strided_slice %152 {offsets = [0, 64], sizes = [2, 32], strides = [1, 1]} : vector<2x96xf32> to vector<2x32xf32>
    %196 = vector.extract_strided_slice %148 {offsets = [0, 64], sizes = [2, 32], strides = [1, 1]} : vector<2x96xf32> to vector<2x32xf32>
    %197 = arith.mulf %186, %196 : vector<2x32xf32>
    %198 = arith.addf %195, %197 : vector<2x32xf32>
    %199 = math.tanh %198 : vector<2x32xf32>
    %cst_38 = arith.constant 1.000000e+00 : f32
    %200 = vector.broadcast %cst_38 : f32 to vector<2x32xf32>
    %201 = arith.subf %200, %194 : vector<2x32xf32>
    %202 = arith.mulf %201, %199 : vector<2x32xf32>
    %203 = arith.mulf %194, %142 : vector<2x32xf32>
    %204 = arith.addf %202, %203 : vector<2x32xf32>
    %cst_39 = arith.constant dense<0.000000e+00> : vector<2x96xf32>
    %205 = tpu.matmul %178, %13, %cst_39 {dimension_numbers = #tpu.dot_dimension_numbers<[1], [1], [0], [0], [0, 0, 1, 0], [], []>} : vector<2x32xf32>, vector<96x32xf32>, vector<2x96xf32> -> vector<2x96xf32>
    %206 = vector.broadcast %14 : vector<1x96xf32> to vector<2x96xf32>
    %207 = arith.addf %205, %206 : vector<2x96xf32>
    %cst_40 = arith.constant dense<0.000000e+00> : vector<2x96xf32>
    %208 = tpu.matmul %204, %15, %cst_40 {dimension_numbers = #tpu.dot_dimension_numbers<[1], [1], [0], [0], [0, 0, 1, 0], [], []>} : vector<2x32xf32>, vector<96x32xf32>, vector<2x96xf32> -> vector<2x96xf32>
    %209 = vector.broadcast %16 : vector<1x96xf32> to vector<2x96xf32>
    %210 = arith.addf %208, %209 : vector<2x96xf32>
    %211 = vector.extract_strided_slice %6 {offsets = [0, 3, 0], sizes = [2, 1, 96], strides = [1, 1, 1]} : vector<2x8x96xf32> to vector<2x1x96xf32>
    %212 = vector.shape_cast %211 : vector<2x1x96xf32> to vector<2x96xf32>
    %213 = vector.extract_strided_slice %12 {offsets = [0, 4, 0], sizes = [2, 1, 96], strides = [1, 1, 1]} : vector<2x8x96xf32> to vector<2x1x96xf32>
    %214 = vector.shape_cast %213 : vector<2x1x96xf32> to vector<2x96xf32>
    %215 = vector.extract_strided_slice %212 {offsets = [0, 0], sizes = [2, 32], strides = [1, 1]} : vector<2x96xf32> to vector<2x32xf32>
    %216 = vector.extract_strided_slice %207 {offsets = [0, 0], sizes = [2, 32], strides = [1, 1]} : vector<2x96xf32> to vector<2x32xf32>
    %217 = arith.addf %215, %216 : vector<2x32xf32>
    %218 = arith.negf %217 : vector<2x32xf32>
    %219 = math.exp %218 : vector<2x32xf32>
    %cst_41 = arith.constant 1.000000e+00 : f32
    %220 = vector.broadcast %cst_41 : f32 to vector<2x32xf32>
    %221 = arith.addf %220, %219 : vector<2x32xf32>
    %222 = arith.divf %220, %221 : vector<2x32xf32>
    %223 = vector.extract_strided_slice %212 {offsets = [0, 32], sizes = [2, 32], strides = [1, 1]} : vector<2x96xf32> to vector<2x32xf32>
    %224 = vector.extract_strided_slice %207 {offsets = [0, 32], sizes = [2, 32], strides = [1, 1]} : vector<2x96xf32> to vector<2x32xf32>
    %225 = arith.addf %223, %224 : vector<2x32xf32>
    %226 = arith.negf %225 : vector<2x32xf32>
    %227 = math.exp %226 : vector<2x32xf32>
    %cst_42 = arith.constant 1.000000e+00 : f32
    %228 = vector.broadcast %cst_42 : f32 to vector<2x32xf32>
    %229 = arith.addf %228, %227 : vector<2x32xf32>
    %230 = arith.divf %228, %229 : vector<2x32xf32>
    %231 = vector.extract_strided_slice %212 {offsets = [0, 64], sizes = [2, 32], strides = [1, 1]} : vector<2x96xf32> to vector<2x32xf32>
    %232 = vector.extract_strided_slice %207 {offsets = [0, 64], sizes = [2, 32], strides = [1, 1]} : vector<2x96xf32> to vector<2x32xf32>
    %233 = arith.mulf %222, %232 : vector<2x32xf32>
    %234 = arith.addf %231, %233 : vector<2x32xf32>
    %235 = math.tanh %234 : vector<2x32xf32>
    %cst_43 = arith.constant 1.000000e+00 : f32
    %236 = vector.broadcast %cst_43 : f32 to vector<2x32xf32>
    %237 = arith.subf %236, %230 : vector<2x32xf32>
    %238 = arith.mulf %237, %235 : vector<2x32xf32>
    %239 = arith.mulf %230, %178 : vector<2x32xf32>
    %240 = arith.addf %238, %239 : vector<2x32xf32>
    %241 = vector.extract_strided_slice %214 {offsets = [0, 0], sizes = [2, 32], strides = [1, 1]} : vector<2x96xf32> to vector<2x32xf32>
    %242 = vector.extract_strided_slice %210 {offsets = [0, 0], sizes = [2, 32], strides = [1, 1]} : vector<2x96xf32> to vector<2x32xf32>
    %243 = arith.addf %241, %242 : vector<2x32xf32>
    %244 = arith.negf %243 : vector<2x32xf32>
    %245 = math.exp %244 : vector<2x32xf32>
    %cst_44 = arith.constant 1.000000e+00 : f32
    %246 = vector.broadcast %cst_44 : f32 to vector<2x32xf32>
    %247 = arith.addf %246, %245 : vector<2x32xf32>
    %248 = arith.divf %246, %247 : vector<2x32xf32>
    %249 = vector.extract_strided_slice %214 {offsets = [0, 32], sizes = [2, 32], strides = [1, 1]} : vector<2x96xf32> to vector<2x32xf32>
    %250 = vector.extract_strided_slice %210 {offsets = [0, 32], sizes = [2, 32], strides = [1, 1]} : vector<2x96xf32> to vector<2x32xf32>
    %251 = arith.addf %249, %250 : vector<2x32xf32>
    %252 = arith.negf %251 : vector<2x32xf32>
    %253 = math.exp %252 : vector<2x32xf32>
    %cst_45 = arith.constant 1.000000e+00 : f32
    %254 = vector.broadcast %cst_45 : f32 to vector<2x32xf32>
    %255 = arith.addf %254, %253 : vector<2x32xf32>
    %256 = arith.divf %254, %255 : vector<2x32xf32>
    %257 = vector.extract_strided_slice %214 {offsets = [0, 64], sizes = [2, 32], strides = [1, 1]} : vector<2x96xf32> to vector<2x32xf32>
    %258 = vector.extract_strided_slice %210 {offsets = [0, 64], sizes = [2, 32], strides = [1, 1]} : vector<2x96xf32> to vector<2x32xf32>
    %259 = arith.mulf %248, %258 : vector<2x32xf32>
    %260 = arith.addf %257, %259 : vector<2x32xf32>
    %261 = math.tanh %260 : vector<2x32xf32>
    %cst_46 = arith.constant 1.000000e+00 : f32
    %262 = vector.broadcast %cst_46 : f32 to vector<2x32xf32>
    %263 = arith.subf %262, %256 : vector<2x32xf32>
    %264 = arith.mulf %263, %261 : vector<2x32xf32>
    %265 = arith.mulf %256, %204 : vector<2x32xf32>
    %266 = arith.addf %264, %265 : vector<2x32xf32>
    %cst_47 = arith.constant dense<0.000000e+00> : vector<2x96xf32>
    %267 = tpu.matmul %240, %13, %cst_47 {dimension_numbers = #tpu.dot_dimension_numbers<[1], [1], [0], [0], [0, 0, 1, 0], [], []>} : vector<2x32xf32>, vector<96x32xf32>, vector<2x96xf32> -> vector<2x96xf32>
    %268 = vector.broadcast %14 : vector<1x96xf32> to vector<2x96xf32>
    %269 = arith.addf %267, %268 : vector<2x96xf32>
    %cst_48 = arith.constant dense<0.000000e+00> : vector<2x96xf32>
    %270 = tpu.matmul %266, %15, %cst_48 {dimension_numbers = #tpu.dot_dimension_numbers<[1], [1], [0], [0], [0, 0, 1, 0], [], []>} : vector<2x32xf32>, vector<96x32xf32>, vector<2x96xf32> -> vector<2x96xf32>
    %271 = vector.broadcast %16 : vector<1x96xf32> to vector<2x96xf32>
    %272 = arith.addf %270, %271 : vector<2x96xf32>
    %273 = vector.extract_strided_slice %6 {offsets = [0, 4, 0], sizes = [2, 1, 96], strides = [1, 1, 1]} : vector<2x8x96xf32> to vector<2x1x96xf32>
    %274 = vector.shape_cast %273 : vector<2x1x96xf32> to vector<2x96xf32>
    %275 = vector.extract_strided_slice %12 {offsets = [0, 3, 0], sizes = [2, 1, 96], strides = [1, 1, 1]} : vector<2x8x96xf32> to vector<2x1x96xf32>
    %276 = vector.shape_cast %275 : vector<2x1x96xf32> to vector<2x96xf32>
    %277 = vector.extract_strided_slice %274 {offsets = [0, 0], sizes = [2, 32], strides = [1, 1]} : vector<2x96xf32> to vector<2x32xf32>
    %278 = vector.extract_strided_slice %269 {offsets = [0, 0], sizes = [2, 32], strides = [1, 1]} : vector<2x96xf32> to vector<2x32xf32>
    %279 = arith.addf %277, %278 : vector<2x32xf32>
    %280 = arith.negf %279 : vector<2x32xf32>
    %281 = math.exp %280 : vector<2x32xf32>
    %cst_49 = arith.constant 1.000000e+00 : f32
    %282 = vector.broadcast %cst_49 : f32 to vector<2x32xf32>
    %283 = arith.addf %282, %281 : vector<2x32xf32>
    %284 = arith.divf %282, %283 : vector<2x32xf32>
    %285 = vector.extract_strided_slice %274 {offsets = [0, 32], sizes = [2, 32], strides = [1, 1]} : vector<2x96xf32> to vector<2x32xf32>
    %286 = vector.extract_strided_slice %269 {offsets = [0, 32], sizes = [2, 32], strides = [1, 1]} : vector<2x96xf32> to vector<2x32xf32>
    %287 = arith.addf %285, %286 : vector<2x32xf32>
    %288 = arith.negf %287 : vector<2x32xf32>
    %289 = math.exp %288 : vector<2x32xf32>
    %cst_50 = arith.constant 1.000000e+00 : f32
    %290 = vector.broadcast %cst_50 : f32 to vector<2x32xf32>
    %291 = arith.addf %290, %289 : vector<2x32xf32>
    %292 = arith.divf %290, %291 : vector<2x32xf32>
    %293 = vector.extract_strided_slice %274 {offsets = [0, 64], sizes = [2, 32], strides = [1, 1]} : vector<2x96xf32> to vector<2x32xf32>
    %294 = vector.extract_strided_slice %269 {offsets = [0, 64], sizes = [2, 32], strides = [1, 1]} : vector<2x96xf32> to vector<2x32xf32>
    %295 = arith.mulf %284, %294 : vector<2x32xf32>
    %296 = arith.addf %293, %295 : vector<2x32xf32>
    %297 = math.tanh %296 : vector<2x32xf32>
    %cst_51 = arith.constant 1.000000e+00 : f32
    %298 = vector.broadcast %cst_51 : f32 to vector<2x32xf32>
    %299 = arith.subf %298, %292 : vector<2x32xf32>
    %300 = arith.mulf %299, %297 : vector<2x32xf32>
    %301 = arith.mulf %292, %240 : vector<2x32xf32>
    %302 = arith.addf %300, %301 : vector<2x32xf32>
    %303 = vector.extract_strided_slice %276 {offsets = [0, 0], sizes = [2, 32], strides = [1, 1]} : vector<2x96xf32> to vector<2x32xf32>
    %304 = vector.extract_strided_slice %272 {offsets = [0, 0], sizes = [2, 32], strides = [1, 1]} : vector<2x96xf32> to vector<2x32xf32>
    %305 = arith.addf %303, %304 : vector<2x32xf32>
    %306 = arith.negf %305 : vector<2x32xf32>
    %307 = math.exp %306 : vector<2x32xf32>
    %cst_52 = arith.constant 1.000000e+00 : f32
    %308 = vector.broadcast %cst_52 : f32 to vector<2x32xf32>
    %309 = arith.addf %308, %307 : vector<2x32xf32>
    %310 = arith.divf %308, %309 : vector<2x32xf32>
    %311 = vector.extract_strided_slice %276 {offsets = [0, 32], sizes = [2, 32], strides = [1, 1]} : vector<2x96xf32> to vector<2x32xf32>
    %312 = vector.extract_strided_slice %272 {offsets = [0, 32], sizes = [2, 32], strides = [1, 1]} : vector<2x96xf32> to vector<2x32xf32>
    %313 = arith.addf %311, %312 : vector<2x32xf32>
    %314 = arith.negf %313 : vector<2x32xf32>
    %315 = math.exp %314 : vector<2x32xf32>
    %cst_53 = arith.constant 1.000000e+00 : f32
    %316 = vector.broadcast %cst_53 : f32 to vector<2x32xf32>
    %317 = arith.addf %316, %315 : vector<2x32xf32>
    %318 = arith.divf %316, %317 : vector<2x32xf32>
    %319 = vector.extract_strided_slice %276 {offsets = [0, 64], sizes = [2, 32], strides = [1, 1]} : vector<2x96xf32> to vector<2x32xf32>
    %320 = vector.extract_strided_slice %272 {offsets = [0, 64], sizes = [2, 32], strides = [1, 1]} : vector<2x96xf32> to vector<2x32xf32>
    %321 = arith.mulf %310, %320 : vector<2x32xf32>
    %322 = arith.addf %319, %321 : vector<2x32xf32>
    %323 = math.tanh %322 : vector<2x32xf32>
    %cst_54 = arith.constant 1.000000e+00 : f32
    %324 = vector.broadcast %cst_54 : f32 to vector<2x32xf32>
    %325 = arith.subf %324, %318 : vector<2x32xf32>
    %326 = arith.mulf %325, %323 : vector<2x32xf32>
    %327 = arith.mulf %318, %266 : vector<2x32xf32>
    %328 = arith.addf %326, %327 : vector<2x32xf32>
    %cst_55 = arith.constant dense<0.000000e+00> : vector<2x96xf32>
    %329 = tpu.matmul %302, %13, %cst_55 {dimension_numbers = #tpu.dot_dimension_numbers<[1], [1], [0], [0], [0, 0, 1, 0], [], []>} : vector<2x32xf32>, vector<96x32xf32>, vector<2x96xf32> -> vector<2x96xf32>
    %330 = vector.broadcast %14 : vector<1x96xf32> to vector<2x96xf32>
    %331 = arith.addf %329, %330 : vector<2x96xf32>
    %cst_56 = arith.constant dense<0.000000e+00> : vector<2x96xf32>
    %332 = tpu.matmul %328, %15, %cst_56 {dimension_numbers = #tpu.dot_dimension_numbers<[1], [1], [0], [0], [0, 0, 1, 0], [], []>} : vector<2x32xf32>, vector<96x32xf32>, vector<2x96xf32> -> vector<2x96xf32>
    %333 = vector.broadcast %16 : vector<1x96xf32> to vector<2x96xf32>
    %334 = arith.addf %332, %333 : vector<2x96xf32>
    %335 = vector.extract_strided_slice %6 {offsets = [0, 5, 0], sizes = [2, 1, 96], strides = [1, 1, 1]} : vector<2x8x96xf32> to vector<2x1x96xf32>
    %336 = vector.shape_cast %335 : vector<2x1x96xf32> to vector<2x96xf32>
    %337 = vector.extract_strided_slice %12 {offsets = [0, 2, 0], sizes = [2, 1, 96], strides = [1, 1, 1]} : vector<2x8x96xf32> to vector<2x1x96xf32>
    %338 = vector.shape_cast %337 : vector<2x1x96xf32> to vector<2x96xf32>
    %339 = vector.extract_strided_slice %336 {offsets = [0, 0], sizes = [2, 32], strides = [1, 1]} : vector<2x96xf32> to vector<2x32xf32>
    %340 = vector.extract_strided_slice %331 {offsets = [0, 0], sizes = [2, 32], strides = [1, 1]} : vector<2x96xf32> to vector<2x32xf32>
    %341 = arith.addf %339, %340 : vector<2x32xf32>
    %342 = arith.negf %341 : vector<2x32xf32>
    %343 = math.exp %342 : vector<2x32xf32>
    %cst_57 = arith.constant 1.000000e+00 : f32
    %344 = vector.broadcast %cst_57 : f32 to vector<2x32xf32>
    %345 = arith.addf %344, %343 : vector<2x32xf32>
    %346 = arith.divf %344, %345 : vector<2x32xf32>
    %347 = vector.extract_strided_slice %336 {offsets = [0, 32], sizes = [2, 32], strides = [1, 1]} : vector<2x96xf32> to vector<2x32xf32>
    %348 = vector.extract_strided_slice %331 {offsets = [0, 32], sizes = [2, 32], strides = [1, 1]} : vector<2x96xf32> to vector<2x32xf32>
    %349 = arith.addf %347, %348 : vector<2x32xf32>
    %350 = arith.negf %349 : vector<2x32xf32>
    %351 = math.exp %350 : vector<2x32xf32>
    %cst_58 = arith.constant 1.000000e+00 : f32
    %352 = vector.broadcast %cst_58 : f32 to vector<2x32xf32>
    %353 = arith.addf %352, %351 : vector<2x32xf32>
    %354 = arith.divf %352, %353 : vector<2x32xf32>
    %355 = vector.extract_strided_slice %336 {offsets = [0, 64], sizes = [2, 32], strides = [1, 1]} : vector<2x96xf32> to vector<2x32xf32>
    %356 = vector.extract_strided_slice %331 {offsets = [0, 64], sizes = [2, 32], strides = [1, 1]} : vector<2x96xf32> to vector<2x32xf32>
    %357 = arith.mulf %346, %356 : vector<2x32xf32>
    %358 = arith.addf %355, %357 : vector<2x32xf32>
    %359 = math.tanh %358 : vector<2x32xf32>
    %cst_59 = arith.constant 1.000000e+00 : f32
    %360 = vector.broadcast %cst_59 : f32 to vector<2x32xf32>
    %361 = arith.subf %360, %354 : vector<2x32xf32>
    %362 = arith.mulf %361, %359 : vector<2x32xf32>
    %363 = arith.mulf %354, %302 : vector<2x32xf32>
    %364 = arith.addf %362, %363 : vector<2x32xf32>
    %365 = vector.extract_strided_slice %338 {offsets = [0, 0], sizes = [2, 32], strides = [1, 1]} : vector<2x96xf32> to vector<2x32xf32>
    %366 = vector.extract_strided_slice %334 {offsets = [0, 0], sizes = [2, 32], strides = [1, 1]} : vector<2x96xf32> to vector<2x32xf32>
    %367 = arith.addf %365, %366 : vector<2x32xf32>
    %368 = arith.negf %367 : vector<2x32xf32>
    %369 = math.exp %368 : vector<2x32xf32>
    %cst_60 = arith.constant 1.000000e+00 : f32
    %370 = vector.broadcast %cst_60 : f32 to vector<2x32xf32>
    %371 = arith.addf %370, %369 : vector<2x32xf32>
    %372 = arith.divf %370, %371 : vector<2x32xf32>
    %373 = vector.extract_strided_slice %338 {offsets = [0, 32], sizes = [2, 32], strides = [1, 1]} : vector<2x96xf32> to vector<2x32xf32>
    %374 = vector.extract_strided_slice %334 {offsets = [0, 32], sizes = [2, 32], strides = [1, 1]} : vector<2x96xf32> to vector<2x32xf32>
    %375 = arith.addf %373, %374 : vector<2x32xf32>
    %376 = arith.negf %375 : vector<2x32xf32>
    %377 = math.exp %376 : vector<2x32xf32>
    %cst_61 = arith.constant 1.000000e+00 : f32
    %378 = vector.broadcast %cst_61 : f32 to vector<2x32xf32>
    %379 = arith.addf %378, %377 : vector<2x32xf32>
    %380 = arith.divf %378, %379 : vector<2x32xf32>
    %381 = vector.extract_strided_slice %338 {offsets = [0, 64], sizes = [2, 32], strides = [1, 1]} : vector<2x96xf32> to vector<2x32xf32>
    %382 = vector.extract_strided_slice %334 {offsets = [0, 64], sizes = [2, 32], strides = [1, 1]} : vector<2x96xf32> to vector<2x32xf32>
    %383 = arith.mulf %372, %382 : vector<2x32xf32>
    %384 = arith.addf %381, %383 : vector<2x32xf32>
    %385 = math.tanh %384 : vector<2x32xf32>
    %cst_62 = arith.constant 1.000000e+00 : f32
    %386 = vector.broadcast %cst_62 : f32 to vector<2x32xf32>
    %387 = arith.subf %386, %380 : vector<2x32xf32>
    %388 = arith.mulf %387, %385 : vector<2x32xf32>
    %389 = arith.mulf %380, %328 : vector<2x32xf32>
    %390 = arith.addf %388, %389 : vector<2x32xf32>
    %cst_63 = arith.constant dense<0.000000e+00> : vector<2x96xf32>
    %391 = tpu.matmul %364, %13, %cst_63 {dimension_numbers = #tpu.dot_dimension_numbers<[1], [1], [0], [0], [0, 0, 1, 0], [], []>} : vector<2x32xf32>, vector<96x32xf32>, vector<2x96xf32> -> vector<2x96xf32>
    %392 = vector.broadcast %14 : vector<1x96xf32> to vector<2x96xf32>
    %393 = arith.addf %391, %392 : vector<2x96xf32>
    %cst_64 = arith.constant dense<0.000000e+00> : vector<2x96xf32>
    %394 = tpu.matmul %390, %15, %cst_64 {dimension_numbers = #tpu.dot_dimension_numbers<[1], [1], [0], [0], [0, 0, 1, 0], [], []>} : vector<2x32xf32>, vector<96x32xf32>, vector<2x96xf32> -> vector<2x96xf32>
    %395 = vector.broadcast %16 : vector<1x96xf32> to vector<2x96xf32>
    %396 = arith.addf %394, %395 : vector<2x96xf32>
    %397 = vector.extract_strided_slice %6 {offsets = [0, 6, 0], sizes = [2, 1, 96], strides = [1, 1, 1]} : vector<2x8x96xf32> to vector<2x1x96xf32>
    %398 = vector.shape_cast %397 : vector<2x1x96xf32> to vector<2x96xf32>
    %399 = vector.extract_strided_slice %12 {offsets = [0, 1, 0], sizes = [2, 1, 96], strides = [1, 1, 1]} : vector<2x8x96xf32> to vector<2x1x96xf32>
    %400 = vector.shape_cast %399 : vector<2x1x96xf32> to vector<2x96xf32>
    %401 = vector.extract_strided_slice %398 {offsets = [0, 0], sizes = [2, 32], strides = [1, 1]} : vector<2x96xf32> to vector<2x32xf32>
    %402 = vector.extract_strided_slice %393 {offsets = [0, 0], sizes = [2, 32], strides = [1, 1]} : vector<2x96xf32> to vector<2x32xf32>
    %403 = arith.addf %401, %402 : vector<2x32xf32>
    %404 = arith.negf %403 : vector<2x32xf32>
    %405 = math.exp %404 : vector<2x32xf32>
    %cst_65 = arith.constant 1.000000e+00 : f32
    %406 = vector.broadcast %cst_65 : f32 to vector<2x32xf32>
    %407 = arith.addf %406, %405 : vector<2x32xf32>
    %408 = arith.divf %406, %407 : vector<2x32xf32>
    %409 = vector.extract_strided_slice %398 {offsets = [0, 32], sizes = [2, 32], strides = [1, 1]} : vector<2x96xf32> to vector<2x32xf32>
    %410 = vector.extract_strided_slice %393 {offsets = [0, 32], sizes = [2, 32], strides = [1, 1]} : vector<2x96xf32> to vector<2x32xf32>
    %411 = arith.addf %409, %410 : vector<2x32xf32>
    %412 = arith.negf %411 : vector<2x32xf32>
    %413 = math.exp %412 : vector<2x32xf32>
    %cst_66 = arith.constant 1.000000e+00 : f32
    %414 = vector.broadcast %cst_66 : f32 to vector<2x32xf32>
    %415 = arith.addf %414, %413 : vector<2x32xf32>
    %416 = arith.divf %414, %415 : vector<2x32xf32>
    %417 = vector.extract_strided_slice %398 {offsets = [0, 64], sizes = [2, 32], strides = [1, 1]} : vector<2x96xf32> to vector<2x32xf32>
    %418 = vector.extract_strided_slice %393 {offsets = [0, 64], sizes = [2, 32], strides = [1, 1]} : vector<2x96xf32> to vector<2x32xf32>
    %419 = arith.mulf %408, %418 : vector<2x32xf32>
    %420 = arith.addf %417, %419 : vector<2x32xf32>
    %421 = math.tanh %420 : vector<2x32xf32>
    %cst_67 = arith.constant 1.000000e+00 : f32
    %422 = vector.broadcast %cst_67 : f32 to vector<2x32xf32>
    %423 = arith.subf %422, %416 : vector<2x32xf32>
    %424 = arith.mulf %423, %421 : vector<2x32xf32>
    %425 = arith.mulf %416, %364 : vector<2x32xf32>
    %426 = arith.addf %424, %425 : vector<2x32xf32>
    %427 = vector.extract_strided_slice %400 {offsets = [0, 0], sizes = [2, 32], strides = [1, 1]} : vector<2x96xf32> to vector<2x32xf32>
    %428 = vector.extract_strided_slice %396 {offsets = [0, 0], sizes = [2, 32], strides = [1, 1]} : vector<2x96xf32> to vector<2x32xf32>
    %429 = arith.addf %427, %428 : vector<2x32xf32>
    %430 = arith.negf %429 : vector<2x32xf32>
    %431 = math.exp %430 : vector<2x32xf32>
    %cst_68 = arith.constant 1.000000e+00 : f32
    %432 = vector.broadcast %cst_68 : f32 to vector<2x32xf32>
    %433 = arith.addf %432, %431 : vector<2x32xf32>
    %434 = arith.divf %432, %433 : vector<2x32xf32>
    %435 = vector.extract_strided_slice %400 {offsets = [0, 32], sizes = [2, 32], strides = [1, 1]} : vector<2x96xf32> to vector<2x32xf32>
    %436 = vector.extract_strided_slice %396 {offsets = [0, 32], sizes = [2, 32], strides = [1, 1]} : vector<2x96xf32> to vector<2x32xf32>
    %437 = arith.addf %435, %436 : vector<2x32xf32>
    %438 = arith.negf %437 : vector<2x32xf32>
    %439 = math.exp %438 : vector<2x32xf32>
    %cst_69 = arith.constant 1.000000e+00 : f32
    %440 = vector.broadcast %cst_69 : f32 to vector<2x32xf32>
    %441 = arith.addf %440, %439 : vector<2x32xf32>
    %442 = arith.divf %440, %441 : vector<2x32xf32>
    %443 = vector.extract_strided_slice %400 {offsets = [0, 64], sizes = [2, 32], strides = [1, 1]} : vector<2x96xf32> to vector<2x32xf32>
    %444 = vector.extract_strided_slice %396 {offsets = [0, 64], sizes = [2, 32], strides = [1, 1]} : vector<2x96xf32> to vector<2x32xf32>
    %445 = arith.mulf %434, %444 : vector<2x32xf32>
    %446 = arith.addf %443, %445 : vector<2x32xf32>
    %447 = math.tanh %446 : vector<2x32xf32>
    %cst_70 = arith.constant 1.000000e+00 : f32
    %448 = vector.broadcast %cst_70 : f32 to vector<2x32xf32>
    %449 = arith.subf %448, %442 : vector<2x32xf32>
    %450 = arith.mulf %449, %447 : vector<2x32xf32>
    %451 = arith.mulf %442, %390 : vector<2x32xf32>
    %452 = arith.addf %450, %451 : vector<2x32xf32>
    %cst_71 = arith.constant dense<0.000000e+00> : vector<2x96xf32>
    %453 = tpu.matmul %426, %13, %cst_71 {dimension_numbers = #tpu.dot_dimension_numbers<[1], [1], [0], [0], [0, 0, 1, 0], [], []>} : vector<2x32xf32>, vector<96x32xf32>, vector<2x96xf32> -> vector<2x96xf32>
    %454 = vector.broadcast %14 : vector<1x96xf32> to vector<2x96xf32>
    %455 = arith.addf %453, %454 : vector<2x96xf32>
    %cst_72 = arith.constant dense<0.000000e+00> : vector<2x96xf32>
    %456 = tpu.matmul %452, %15, %cst_72 {dimension_numbers = #tpu.dot_dimension_numbers<[1], [1], [0], [0], [0, 0, 1, 0], [], []>} : vector<2x32xf32>, vector<96x32xf32>, vector<2x96xf32> -> vector<2x96xf32>
    %457 = vector.broadcast %16 : vector<1x96xf32> to vector<2x96xf32>
    %458 = arith.addf %456, %457 : vector<2x96xf32>
    %459 = vector.extract_strided_slice %6 {offsets = [0, 7, 0], sizes = [2, 1, 96], strides = [1, 1, 1]} : vector<2x8x96xf32> to vector<2x1x96xf32>
    %460 = vector.shape_cast %459 : vector<2x1x96xf32> to vector<2x96xf32>
    %461 = vector.extract_strided_slice %12 {offsets = [0, 0, 0], sizes = [2, 1, 96], strides = [1, 1, 1]} : vector<2x8x96xf32> to vector<2x1x96xf32>
    %462 = vector.shape_cast %461 : vector<2x1x96xf32> to vector<2x96xf32>
    %463 = vector.extract_strided_slice %460 {offsets = [0, 0], sizes = [2, 32], strides = [1, 1]} : vector<2x96xf32> to vector<2x32xf32>
    %464 = vector.extract_strided_slice %455 {offsets = [0, 0], sizes = [2, 32], strides = [1, 1]} : vector<2x96xf32> to vector<2x32xf32>
    %465 = arith.addf %463, %464 : vector<2x32xf32>
    %466 = arith.negf %465 : vector<2x32xf32>
    %467 = math.exp %466 : vector<2x32xf32>
    %cst_73 = arith.constant 1.000000e+00 : f32
    %468 = vector.broadcast %cst_73 : f32 to vector<2x32xf32>
    %469 = arith.addf %468, %467 : vector<2x32xf32>
    %470 = arith.divf %468, %469 : vector<2x32xf32>
    %471 = vector.extract_strided_slice %460 {offsets = [0, 32], sizes = [2, 32], strides = [1, 1]} : vector<2x96xf32> to vector<2x32xf32>
    %472 = vector.extract_strided_slice %455 {offsets = [0, 32], sizes = [2, 32], strides = [1, 1]} : vector<2x96xf32> to vector<2x32xf32>
    %473 = arith.addf %471, %472 : vector<2x32xf32>
    %474 = arith.negf %473 : vector<2x32xf32>
    %475 = math.exp %474 : vector<2x32xf32>
    %cst_74 = arith.constant 1.000000e+00 : f32
    %476 = vector.broadcast %cst_74 : f32 to vector<2x32xf32>
    %477 = arith.addf %476, %475 : vector<2x32xf32>
    %478 = arith.divf %476, %477 : vector<2x32xf32>
    %479 = vector.extract_strided_slice %460 {offsets = [0, 64], sizes = [2, 32], strides = [1, 1]} : vector<2x96xf32> to vector<2x32xf32>
    %480 = vector.extract_strided_slice %455 {offsets = [0, 64], sizes = [2, 32], strides = [1, 1]} : vector<2x96xf32> to vector<2x32xf32>
    %481 = arith.mulf %470, %480 : vector<2x32xf32>
    %482 = arith.addf %479, %481 : vector<2x32xf32>
    %483 = math.tanh %482 : vector<2x32xf32>
    %cst_75 = arith.constant 1.000000e+00 : f32
    %484 = vector.broadcast %cst_75 : f32 to vector<2x32xf32>
    %485 = arith.subf %484, %478 : vector<2x32xf32>
    %486 = arith.mulf %485, %483 : vector<2x32xf32>
    %487 = arith.mulf %478, %426 : vector<2x32xf32>
    %488 = arith.addf %486, %487 : vector<2x32xf32>
    %489 = vector.extract_strided_slice %462 {offsets = [0, 0], sizes = [2, 32], strides = [1, 1]} : vector<2x96xf32> to vector<2x32xf32>
    %490 = vector.extract_strided_slice %458 {offsets = [0, 0], sizes = [2, 32], strides = [1, 1]} : vector<2x96xf32> to vector<2x32xf32>
    %491 = arith.addf %489, %490 : vector<2x32xf32>
    %492 = arith.negf %491 : vector<2x32xf32>
    %493 = math.exp %492 : vector<2x32xf32>
    %cst_76 = arith.constant 1.000000e+00 : f32
    %494 = vector.broadcast %cst_76 : f32 to vector<2x32xf32>
    %495 = arith.addf %494, %493 : vector<2x32xf32>
    %496 = arith.divf %494, %495 : vector<2x32xf32>
    %497 = vector.extract_strided_slice %462 {offsets = [0, 32], sizes = [2, 32], strides = [1, 1]} : vector<2x96xf32> to vector<2x32xf32>
    %498 = vector.extract_strided_slice %458 {offsets = [0, 32], sizes = [2, 32], strides = [1, 1]} : vector<2x96xf32> to vector<2x32xf32>
    %499 = arith.addf %497, %498 : vector<2x32xf32>
    %500 = arith.negf %499 : vector<2x32xf32>
    %501 = math.exp %500 : vector<2x32xf32>
    %cst_77 = arith.constant 1.000000e+00 : f32
    %502 = vector.broadcast %cst_77 : f32 to vector<2x32xf32>
    %503 = arith.addf %502, %501 : vector<2x32xf32>
    %504 = arith.divf %502, %503 : vector<2x32xf32>
    %505 = vector.extract_strided_slice %462 {offsets = [0, 64], sizes = [2, 32], strides = [1, 1]} : vector<2x96xf32> to vector<2x32xf32>
    %506 = vector.extract_strided_slice %458 {offsets = [0, 64], sizes = [2, 32], strides = [1, 1]} : vector<2x96xf32> to vector<2x32xf32>
    %507 = arith.mulf %496, %506 : vector<2x32xf32>
    %508 = arith.addf %505, %507 : vector<2x32xf32>
    %509 = math.tanh %508 : vector<2x32xf32>
    %cst_78 = arith.constant 1.000000e+00 : f32
    %510 = vector.broadcast %cst_78 : f32 to vector<2x32xf32>
    %511 = arith.subf %510, %504 : vector<2x32xf32>
    %512 = arith.mulf %511, %509 : vector<2x32xf32>
    %513 = arith.mulf %504, %452 : vector<2x32xf32>
    %514 = arith.addf %512, %513 : vector<2x32xf32>
    %515 = vector.shape_cast %54 : vector<2x32xf32> to vector<2x1x32xf32>
    %516 = vector.shape_cast %116 : vector<2x32xf32> to vector<2x1x32xf32>
    %517 = vector.shape_cast %178 : vector<2x32xf32> to vector<2x1x32xf32>
    %518 = vector.shape_cast %240 : vector<2x32xf32> to vector<2x1x32xf32>
    %519 = vector.shape_cast %302 : vector<2x32xf32> to vector<2x1x32xf32>
    %520 = vector.shape_cast %364 : vector<2x32xf32> to vector<2x1x32xf32>
    %521 = vector.shape_cast %426 : vector<2x32xf32> to vector<2x1x32xf32>
    %522 = vector.shape_cast %488 : vector<2x32xf32> to vector<2x1x32xf32>
    %523 = tpu.concatenate %515, %516, %517, %518, %519, %520, %521, %522 in 1 : vector<2x1x32xf32>, vector<2x1x32xf32>, vector<2x1x32xf32>, vector<2x1x32xf32>, vector<2x1x32xf32>, vector<2x1x32xf32>, vector<2x1x32xf32>, vector<2x1x32xf32> -> vector<2x8x32xf32>
    %524 = vector.shape_cast %514 : vector<2x32xf32> to vector<2x1x32xf32>
    %525 = vector.shape_cast %452 : vector<2x32xf32> to vector<2x1x32xf32>
    %526 = vector.shape_cast %390 : vector<2x32xf32> to vector<2x1x32xf32>
    %527 = vector.shape_cast %328 : vector<2x32xf32> to vector<2x1x32xf32>
    %528 = vector.shape_cast %266 : vector<2x32xf32> to vector<2x1x32xf32>
    %529 = vector.shape_cast %204 : vector<2x32xf32> to vector<2x1x32xf32>
    %530 = vector.shape_cast %142 : vector<2x32xf32> to vector<2x1x32xf32>
    %531 = vector.shape_cast %80 : vector<2x32xf32> to vector<2x1x32xf32>
    %532 = tpu.concatenate %524, %525, %526, %527, %528, %529, %530, %531 in 1 : vector<2x1x32xf32>, vector<2x1x32xf32>, vector<2x1x32xf32>, vector<2x1x32xf32>, vector<2x1x32xf32>, vector<2x1x32xf32>, vector<2x1x32xf32>, vector<2x1x32xf32> -> vector<2x8x32xf32>
    %c384 = arith.constant 384 : index
    %c0_79 = arith.constant 0 : index
    %533 = vector.load %arg1[%c384, %c0_79] : memref<736x32xf32, #tpu.memory_space<vmem>>, vector<32x32xf32>
    %cst_80 = arith.constant dense<0.000000e+00> : vector<2x8x32xf32>
    %534 = tpu.matmul %523, %533, %cst_80 {dimension_numbers = #tpu.dot_dimension_numbers<[2], [1], [0, 1], [0], [0, 0, 0, 1, 1, 0], [], []>} : vector<2x8x32xf32>, vector<32x32xf32>, vector<2x8x32xf32> -> vector<2x8x32xf32>
    %c416 = arith.constant 416 : index
    %c0_81 = arith.constant 0 : index
    %535 = vector.load %arg1[%c416, %c0_81] : memref<736x32xf32, #tpu.memory_space<vmem>>, vector<32x32xf32>
    %cst_82 = arith.constant dense<0.000000e+00> : vector<2x8x32xf32>
    %536 = tpu.matmul %532, %535, %cst_82 {dimension_numbers = #tpu.dot_dimension_numbers<[2], [1], [0, 1], [0], [0, 0, 0, 1, 1, 0], [], []>} : vector<2x8x32xf32>, vector<32x32xf32>, vector<2x8x32xf32> -> vector<2x8x32xf32>
    %537 = arith.addf %534, %536 : vector<2x8x32xf32>
    %c4 = arith.constant 4 : index
    %c0_83 = arith.constant 0 : index
    %538 = vector.load %arg3[%c4, %c0_83] : memref<26x128xf32, #tpu.memory_space<vmem>>, vector<1x32xf32>
    %539 = vector.shape_cast %538 : vector<1x32xf32> to vector<1x1x32xf32>
    %540 = vector.broadcast %539 : vector<1x1x32xf32> to vector<2x8x32xf32>
    %541 = arith.addf %537, %540 : vector<2x8x32xf32>
    %542 = arith.addf %0, %541 : vector<2x8x32xf32>
    %c448 = arith.constant 448 : index
    %c0_84 = arith.constant 0 : index
    %543 = vector.load %arg1[%c448, %c0_84] : memref<736x32xf32, #tpu.memory_space<vmem>>, vector<192x32xf32>
    %cst_85 = arith.constant dense<0.000000e+00> : vector<2x8x192xf32>
    %544 = tpu.matmul %542, %543, %cst_85 {dimension_numbers = #tpu.dot_dimension_numbers<[2], [1], [0, 1], [0], [0, 0, 0, 1, 1, 0], [], []>} : vector<2x8x32xf32>, vector<192x32xf32>, vector<2x8x192xf32> -> vector<2x8x192xf32>
    %545 = vector.extract_strided_slice %544 {offsets = [0, 0, 0], sizes = [2, 8, 96], strides = [1, 1, 1]} : vector<2x8x192xf32> to vector<2x8x96xf32>
    %c5 = arith.constant 5 : index
    %c0_86 = arith.constant 0 : index
    %546 = vector.load %arg3[%c5, %c0_86] : memref<26x128xf32, #tpu.memory_space<vmem>>, vector<1x96xf32>
    %547 = vector.shape_cast %546 : vector<1x96xf32> to vector<1x1x96xf32>
    %548 = vector.broadcast %547 : vector<1x1x96xf32> to vector<2x8x96xf32>
    %549 = arith.addf %545, %548 : vector<2x8x96xf32>
    %550 = vector.extract_strided_slice %544 {offsets = [0, 0, 96], sizes = [2, 8, 96], strides = [1, 1, 1]} : vector<2x8x192xf32> to vector<2x8x96xf32>
    %c6 = arith.constant 6 : index
    %c0_87 = arith.constant 0 : index
    %551 = vector.load %arg3[%c6, %c0_87] : memref<26x128xf32, #tpu.memory_space<vmem>>, vector<1x96xf32>
    %552 = vector.shape_cast %551 : vector<1x96xf32> to vector<1x1x96xf32>
    %553 = vector.broadcast %552 : vector<1x1x96xf32> to vector<2x8x96xf32>
    %554 = arith.addf %550, %553 : vector<2x8x96xf32>
    %555 = vector.extract_strided_slice %549 {offsets = [0, 0, 0], sizes = [2, 8, 32], strides = [1, 1, 1]} : vector<2x8x96xf32> to vector<2x8x32xf32>
    %556 = vector.extract_strided_slice %549 {offsets = [0, 0, 32], sizes = [2, 8, 32], strides = [1, 1, 1]} : vector<2x8x96xf32> to vector<2x8x32xf32>
    %557 = vector.extract_strided_slice %549 {offsets = [0, 0, 64], sizes = [2, 8, 32], strides = [1, 1, 1]} : vector<2x8x96xf32> to vector<2x8x32xf32>
    "tpu.trace_start"() <{level = 10 : i32, message = "bqd,bkd->bqk"}> : () -> ()
    %cst_88 = arith.constant dense<0.000000e+00> : vector<2x8x8xf32>
    %558 = tpu.matmul %555, %556, %cst_88 {dimension_numbers = #tpu.dot_dimension_numbers<[2], [2], [1], [1], [0, 0, 0, 1, 1, 1], [0], [0]>} : vector<2x8x32xf32>, vector<2x8x32xf32>, vector<2x8x8xf32> -> vector<2x8x8xf32>
    "tpu.trace_stop"() : () -> ()
    %cst_89 = arith.constant 0.176776692 : f32
    %559 = vector.broadcast %cst_89 : f32 to vector<2x8x8xf32>
    %560 = arith.mulf %558, %559 : vector<2x8x8xf32>
    %cst_90 = arith.constant dense<0xFF800000> : vector<2x8xf32>
    %561 = vector.multi_reduction <maximumf>, %560, %cst_90 [2] : vector<2x8x8xf32> to vector<2x8xf32>
    %562 = vector.shape_cast %561 : vector<2x8xf32> to vector<2x8x1xf32>
    %563 = vector.broadcast %562 : vector<2x8x1xf32> to vector<2x8x8xf32>
    %564 = arith.subf %560, %563 : vector<2x8x8xf32>
    %565 = math.exp %564 : vector<2x8x8xf32>
    %cst_91 = arith.constant dense<0.000000e+00> : vector<2x8xf32>
    %566 = vector.multi_reduction <add>, %565, %cst_91 [2] : vector<2x8x8xf32> to vector<2x8xf32>
    %567 = vector.shape_cast %566 : vector<2x8xf32> to vector<2x8x1xf32>
    %568 = tpu.reciprocal %567 {approx = true} : vector<2x8x1xf32> -> vector<2x8x1xf32>
    %569 = vector.broadcast %568 : vector<2x8x1xf32> to vector<2x8x8xf32>
    %570 = arith.mulf %565, %569 : vector<2x8x8xf32>
    "tpu.trace_start"() <{level = 10 : i32, message = "bqk,bkd->bqd"}> : () -> ()
    %cst_92 = arith.constant dense<0.000000e+00> : vector<2x8x32xf32>
    %571 = tpu.matmul %570, %557, %cst_92 {dimension_numbers = #tpu.dot_dimension_numbers<[2], [1], [1], [2], [0, 0, 0, 1, 1, 2], [0], [0]>} : vector<2x8x8xf32>, vector<2x8x32xf32>, vector<2x8x32xf32> -> vector<2x8x32xf32>
    "tpu.trace_stop"() : () -> ()
    %572 = arith.addf %542, %571 : vector<2x8x32xf32>
    %cst_93 = arith.constant dense<0.000000e+00> : vector<2x8xf32>
    %573 = vector.multi_reduction <add>, %572, %cst_93 [2] : vector<2x8x32xf32> to vector<2x8xf32>
    %574 = vector.shape_cast %573 : vector<2x8xf32> to vector<2x8x1xf32>
    %cst_94 = arith.constant 3.200000e+01 : f32
    %575 = vector.broadcast %cst_94 : f32 to vector<2x8x1xf32>
    %576 = arith.divf %574, %575 : vector<2x8x1xf32>
    %577 = vector.broadcast %576 : vector<2x8x1xf32> to vector<2x8x32xf32>
    %578 = arith.subf %572, %577 : vector<2x8x32xf32>
    %579 = arith.mulf %578, %578 : vector<2x8x32xf32>
    %cst_95 = arith.constant dense<0.000000e+00> : vector<2x8xf32>
    %580 = vector.multi_reduction <add>, %579, %cst_95 [2] : vector<2x8x32xf32> to vector<2x8xf32>
    %581 = vector.shape_cast %580 : vector<2x8xf32> to vector<2x8x1xf32>
    %cst_96 = arith.constant 3.200000e+01 : f32
    %582 = vector.broadcast %cst_96 : f32 to vector<2x8x1xf32>
    %583 = arith.divf %581, %582 : vector<2x8x1xf32>
    %cst_97 = arith.constant 9.99999974E-6 : f32
    %584 = vector.broadcast %cst_97 : f32 to vector<2x8x1xf32>
    %585 = arith.addf %583, %584 : vector<2x8x1xf32>
    %586 = math.rsqrt %585 : vector<2x8x1xf32>
    %587 = vector.broadcast %586 : vector<2x8x1xf32> to vector<2x8x32xf32>
    %588 = arith.mulf %578, %587 : vector<2x8x32xf32>
    %c7 = arith.constant 7 : index
    %c0_98 = arith.constant 0 : index
    %589 = vector.load %arg3[%c7, %c0_98] : memref<26x128xf32, #tpu.memory_space<vmem>>, vector<1x32xf32>
    %590 = vector.shape_cast %589 : vector<1x32xf32> to vector<1x1x32xf32>
    %591 = vector.broadcast %590 : vector<1x1x32xf32> to vector<2x8x32xf32>
    %592 = arith.mulf %588, %591 : vector<2x8x32xf32>
    %c8 = arith.constant 8 : index
    %c0_99 = arith.constant 0 : index
    %593 = vector.load %arg3[%c8, %c0_99] : memref<26x128xf32, #tpu.memory_space<vmem>>, vector<1x32xf32>
    %594 = vector.shape_cast %593 : vector<1x32xf32> to vector<1x1x32xf32>
    %595 = vector.broadcast %594 : vector<1x1x32xf32> to vector<2x8x32xf32>
    %596 = arith.addf %592, %595 : vector<2x8x32xf32>
    %c640 = arith.constant 640 : index
    %c0_100 = arith.constant 0 : index
    %597 = vector.load %arg1[%c640, %c0_100] : memref<736x32xf32, #tpu.memory_space<vmem>>, vector<32x32xf32>
    %cst_101 = arith.constant dense<0.000000e+00> : vector<2x8x32xf32>
    %598 = tpu.matmul %596, %597, %cst_101 {dimension_numbers = #tpu.dot_dimension_numbers<[2], [1], [0, 1], [0], [0, 0, 0, 1, 1, 0], [], []>} : vector<2x8x32xf32>, vector<32x32xf32>, vector<2x8x32xf32> -> vector<2x8x32xf32>
    %c9 = arith.constant 9 : index
    %c0_102 = arith.constant 0 : index
    %599 = vector.load %arg3[%c9, %c0_102] : memref<26x128xf32, #tpu.memory_space<vmem>>, vector<1x32xf32>
    %600 = vector.shape_cast %599 : vector<1x32xf32> to vector<1x1x32xf32>
    %601 = vector.broadcast %600 : vector<1x1x32xf32> to vector<2x8x32xf32>
    %602 = arith.addf %598, %601 : vector<2x8x32xf32>
    %cst_103 = arith.constant 5.000000e-01 : f32
    %603 = vector.broadcast %cst_103 : f32 to vector<2x8x32xf32>
    %604 = arith.mulf %603, %602 : vector<2x8x32xf32>
    %cst_104 = arith.constant 0.707106769 : f32
    %605 = vector.broadcast %cst_104 : f32 to vector<2x8x32xf32>
    %606 = arith.mulf %602, %605 : vector<2x8x32xf32>
    %607 = math.erf %606 : vector<2x8x32xf32>
    %cst_105 = arith.constant 1.000000e+00 : f32
    %608 = vector.broadcast %cst_105 : f32 to vector<2x8x32xf32>
    %609 = arith.addf %608, %607 : vector<2x8x32xf32>
    %610 = arith.mulf %604, %609 : vector<2x8x32xf32>
    %611 = arith.addf %610, %596 : vector<2x8x32xf32>
    %cst_106 = arith.constant dense<0.000000e+00> : vector<2x8xf32>
    %612 = vector.multi_reduction <add>, %611, %cst_106 [2] : vector<2x8x32xf32> to vector<2x8xf32>
    %613 = vector.shape_cast %612 : vector<2x8xf32> to vector<2x8x1xf32>
    %cst_107 = arith.constant 3.200000e+01 : f32
    %614 = vector.broadcast %cst_107 : f32 to vector<2x8x1xf32>
    %615 = arith.divf %613, %614 : vector<2x8x1xf32>
    %616 = vector.broadcast %615 : vector<2x8x1xf32> to vector<2x8x32xf32>
    %617 = arith.subf %611, %616 : vector<2x8x32xf32>
    %618 = arith.mulf %617, %617 : vector<2x8x32xf32>
    %cst_108 = arith.constant dense<0.000000e+00> : vector<2x8xf32>
    %619 = vector.multi_reduction <add>, %618, %cst_108 [2] : vector<2x8x32xf32> to vector<2x8xf32>
    %620 = vector.shape_cast %619 : vector<2x8xf32> to vector<2x8x1xf32>
    %cst_109 = arith.constant 3.200000e+01 : f32
    %621 = vector.broadcast %cst_109 : f32 to vector<2x8x1xf32>
    %622 = arith.divf %620, %621 : vector<2x8x1xf32>
    %cst_110 = arith.constant 9.99999974E-6 : f32
    %623 = vector.broadcast %cst_110 : f32 to vector<2x8x1xf32>
    %624 = arith.addf %622, %623 : vector<2x8x1xf32>
    %625 = math.rsqrt %624 : vector<2x8x1xf32>
    %626 = vector.broadcast %625 : vector<2x8x1xf32> to vector<2x8x32xf32>
    %627 = arith.mulf %617, %626 : vector<2x8x32xf32>
    %c10 = arith.constant 10 : index
    %c0_111 = arith.constant 0 : index
    %628 = vector.load %arg3[%c10, %c0_111] : memref<26x128xf32, #tpu.memory_space<vmem>>, vector<1x32xf32>
    %629 = vector.shape_cast %628 : vector<1x32xf32> to vector<1x1x32xf32>
    %630 = vector.broadcast %629 : vector<1x1x32xf32> to vector<2x8x32xf32>
    %631 = arith.mulf %627, %630 : vector<2x8x32xf32>
    %c11 = arith.constant 11 : index
    %c0_112 = arith.constant 0 : index
    %632 = vector.load %arg3[%c11, %c0_112] : memref<26x128xf32, #tpu.memory_space<vmem>>, vector<1x32xf32>
    %633 = vector.shape_cast %632 : vector<1x32xf32> to vector<1x1x32xf32>
    %634 = vector.broadcast %633 : vector<1x1x32xf32> to vector<2x8x32xf32>
    %635 = arith.addf %631, %634 : vector<2x8x32xf32>
    %c704 = arith.constant 704 : index
    %c0_113 = arith.constant 0 : index
    %636 = vector.load %arg1[%c704, %c0_113] : memref<736x32xf32, #tpu.memory_space<vmem>>, vector<16x32xf32>
    %cst_114 = arith.constant dense<0.000000e+00> : vector<2x8x16xf32>
    %637 = tpu.matmul %635, %636, %cst_114 {dimension_numbers = #tpu.dot_dimension_numbers<[2], [1], [0, 1], [0], [0, 0, 0, 1, 1, 0], [], []>} : vector<2x8x32xf32>, vector<16x32xf32>, vector<2x8x16xf32> -> vector<2x8x16xf32>
    %c12 = arith.constant 12 : index
    %c0_115 = arith.constant 0 : index
    %638 = vector.load %arg3[%c12, %c0_115] : memref<26x128xf32, #tpu.memory_space<vmem>>, vector<1x16xf32>
    %639 = vector.shape_cast %638 : vector<1x16xf32> to vector<1x1x16xf32>
    %640 = vector.broadcast %639 : vector<1x1x16xf32> to vector<2x8x16xf32>
    %641 = arith.addf %637, %640 : vector<2x8x16xf32>
    %cst_116 = arith.constant 5.000000e-01 : f32
    %642 = vector.broadcast %cst_116 : f32 to vector<2x8x16xf32>
    %643 = arith.mulf %642, %641 : vector<2x8x16xf32>
    %cst_117 = arith.constant 0.707106769 : f32
    %644 = vector.broadcast %cst_117 : f32 to vector<2x8x16xf32>
    %645 = arith.mulf %641, %644 : vector<2x8x16xf32>
    %646 = math.erf %645 : vector<2x8x16xf32>
    %cst_118 = arith.constant 1.000000e+00 : f32
    %647 = vector.broadcast %cst_118 : f32 to vector<2x8x16xf32>
    %648 = arith.addf %647, %646 : vector<2x8x16xf32>
    %649 = arith.mulf %643, %648 : vector<2x8x16xf32>
    %cst_119 = arith.constant dense<0.000000e+00> : vector<2x8xf32>
    %650 = vector.multi_reduction <add>, %649, %cst_119 [2] : vector<2x8x16xf32> to vector<2x8xf32>
    %651 = vector.shape_cast %650 : vector<2x8xf32> to vector<2x8x1xf32>
    %cst_120 = arith.constant 1.600000e+01 : f32
    %652 = vector.broadcast %cst_120 : f32 to vector<2x8x1xf32>
    %653 = arith.divf %651, %652 : vector<2x8x1xf32>
    %654 = vector.broadcast %653 : vector<2x8x1xf32> to vector<2x8x16xf32>
    %655 = arith.subf %649, %654 : vector<2x8x16xf32>
    %656 = arith.mulf %655, %655 : vector<2x8x16xf32>
    %cst_121 = arith.constant dense<0.000000e+00> : vector<2x8xf32>
    %657 = vector.multi_reduction <add>, %656, %cst_121 [2] : vector<2x8x16xf32> to vector<2x8xf32>
    %658 = vector.shape_cast %657 : vector<2x8xf32> to vector<2x8x1xf32>
    %cst_122 = arith.constant 1.600000e+01 : f32
    %659 = vector.broadcast %cst_122 : f32 to vector<2x8x1xf32>
    %660 = arith.divf %658, %659 : vector<2x8x1xf32>
    %cst_123 = arith.constant 9.99999974E-6 : f32
    %661 = vector.broadcast %cst_123 : f32 to vector<2x8x1xf32>
    %662 = arith.addf %660, %661 : vector<2x8x1xf32>
    %663 = math.rsqrt %662 : vector<2x8x1xf32>
    %664 = vector.broadcast %663 : vector<2x8x1xf32> to vector<2x8x16xf32>
    %665 = arith.mulf %655, %664 : vector<2x8x16xf32>
    %c13 = arith.constant 13 : index
    %c0_124 = arith.constant 0 : index
    %666 = vector.load %arg3[%c13, %c0_124] : memref<26x128xf32, #tpu.memory_space<vmem>>, vector<1x16xf32>
    %667 = vector.shape_cast %666 : vector<1x16xf32> to vector<1x1x16xf32>
    %668 = vector.broadcast %667 : vector<1x1x16xf32> to vector<2x8x16xf32>
    %669 = arith.mulf %665, %668 : vector<2x8x16xf32>
    %c14 = arith.constant 14 : index
    %c0_125 = arith.constant 0 : index
    %670 = vector.load %arg3[%c14, %c0_125] : memref<26x128xf32, #tpu.memory_space<vmem>>, vector<1x16xf32>
    %671 = vector.shape_cast %670 : vector<1x16xf32> to vector<1x1x16xf32>
    %672 = vector.broadcast %671 : vector<1x1x16xf32> to vector<2x8x16xf32>
    %673 = arith.addf %669, %672 : vector<2x8x16xf32>
    %c0_126 = arith.constant 0 : index
    %c0_127 = arith.constant 0 : index
    %674 = vector.load %arg2[%c0_126, %c0_127] : memref<304x16xf32, #tpu.memory_space<vmem>>, vector<128x16xf32>
    %cst_128 = arith.constant dense<0.000000e+00> : vector<2x8x128xf32>
    %675 = tpu.matmul %673, %674, %cst_128 {dimension_numbers = #tpu.dot_dimension_numbers<[2], [1], [0, 1], [0], [0, 0, 0, 1, 1, 0], [], []>} : vector<2x8x16xf32>, vector<128x16xf32>, vector<2x8x128xf32> -> vector<2x8x128xf32>
    %c15 = arith.constant 15 : index
    %c0_129 = arith.constant 0 : index
    %676 = vector.load %arg3[%c15, %c0_129] : memref<26x128xf32, #tpu.memory_space<vmem>>, vector<1x128xf32>
    %677 = vector.shape_cast %676 : vector<1x128xf32> to vector<1x1x128xf32>
    %678 = vector.broadcast %677 : vector<1x1x128xf32> to vector<2x8x128xf32>
    %679 = arith.addf %675, %678 : vector<2x8x128xf32>
    %680 = vector.extract_strided_slice %554 {offsets = [0, 0, 0], sizes = [2, 8, 32], strides = [1, 1, 1]} : vector<2x8x96xf32> to vector<2x8x32xf32>
    %681 = vector.extract_strided_slice %554 {offsets = [0, 0, 32], sizes = [2, 8, 32], strides = [1, 1, 1]} : vector<2x8x96xf32> to vector<2x8x32xf32>
    %682 = vector.extract_strided_slice %554 {offsets = [0, 0, 64], sizes = [2, 8, 32], strides = [1, 1, 1]} : vector<2x8x96xf32> to vector<2x8x32xf32>
    "tpu.trace_start"() <{level = 10 : i32, message = "bqd,bkd->bqk"}> : () -> ()
    %cst_130 = arith.constant dense<0.000000e+00> : vector<2x8x8xf32>
    %683 = tpu.matmul %680, %681, %cst_130 {dimension_numbers = #tpu.dot_dimension_numbers<[2], [2], [1], [1], [0, 0, 0, 1, 1, 1], [0], [0]>} : vector<2x8x32xf32>, vector<2x8x32xf32>, vector<2x8x8xf32> -> vector<2x8x8xf32>
    "tpu.trace_stop"() : () -> ()
    %cst_131 = arith.constant 0.176776692 : f32
    %684 = vector.broadcast %cst_131 : f32 to vector<2x8x8xf32>
    %685 = arith.mulf %683, %684 : vector<2x8x8xf32>
    %cst_132 = arith.constant dense<0xFF800000> : vector<2x8xf32>
    %686 = vector.multi_reduction <maximumf>, %685, %cst_132 [2] : vector<2x8x8xf32> to vector<2x8xf32>
    %687 = vector.shape_cast %686 : vector<2x8xf32> to vector<2x8x1xf32>
    %688 = vector.broadcast %687 : vector<2x8x1xf32> to vector<2x8x8xf32>
    %689 = arith.subf %685, %688 : vector<2x8x8xf32>
    %690 = math.exp %689 : vector<2x8x8xf32>
    %cst_133 = arith.constant dense<0.000000e+00> : vector<2x8xf32>
    %691 = vector.multi_reduction <add>, %690, %cst_133 [2] : vector<2x8x8xf32> to vector<2x8xf32>
    %692 = vector.shape_cast %691 : vector<2x8xf32> to vector<2x8x1xf32>
    %693 = tpu.reciprocal %692 {approx = true} : vector<2x8x1xf32> -> vector<2x8x1xf32>
    %694 = vector.broadcast %693 : vector<2x8x1xf32> to vector<2x8x8xf32>
    %695 = arith.mulf %690, %694 : vector<2x8x8xf32>
    "tpu.trace_start"() <{level = 10 : i32, message = "bqk,bkd->bqd"}> : () -> ()
    %cst_134 = arith.constant dense<0.000000e+00> : vector<2x8x32xf32>
    %696 = tpu.matmul %695, %682, %cst_134 {dimension_numbers = #tpu.dot_dimension_numbers<[2], [1], [1], [2], [0, 0, 0, 1, 1, 2], [0], [0]>} : vector<2x8x8xf32>, vector<2x8x32xf32>, vector<2x8x32xf32> -> vector<2x8x32xf32>
    "tpu.trace_stop"() : () -> ()
    %697 = arith.addf %542, %696 : vector<2x8x32xf32>
    %cst_135 = arith.constant dense<0.000000e+00> : vector<2x8xf32>
    %698 = vector.multi_reduction <add>, %697, %cst_135 [2] : vector<2x8x32xf32> to vector<2x8xf32>
    %699 = vector.shape_cast %698 : vector<2x8xf32> to vector<2x8x1xf32>
    %cst_136 = arith.constant 3.200000e+01 : f32
    %700 = vector.broadcast %cst_136 : f32 to vector<2x8x1xf32>
    %701 = arith.divf %699, %700 : vector<2x8x1xf32>
    %702 = vector.broadcast %701 : vector<2x8x1xf32> to vector<2x8x32xf32>
    %703 = arith.subf %697, %702 : vector<2x8x32xf32>
    %704 = arith.mulf %703, %703 : vector<2x8x32xf32>
    %cst_137 = arith.constant dense<0.000000e+00> : vector<2x8xf32>
    %705 = vector.multi_reduction <add>, %704, %cst_137 [2] : vector<2x8x32xf32> to vector<2x8xf32>
    %706 = vector.shape_cast %705 : vector<2x8xf32> to vector<2x8x1xf32>
    %cst_138 = arith.constant 3.200000e+01 : f32
    %707 = vector.broadcast %cst_138 : f32 to vector<2x8x1xf32>
    %708 = arith.divf %706, %707 : vector<2x8x1xf32>
    %cst_139 = arith.constant 9.99999974E-6 : f32
    %709 = vector.broadcast %cst_139 : f32 to vector<2x8x1xf32>
    %710 = arith.addf %708, %709 : vector<2x8x1xf32>
    %711 = math.rsqrt %710 : vector<2x8x1xf32>
    %712 = vector.broadcast %711 : vector<2x8x1xf32> to vector<2x8x32xf32>
    %713 = arith.mulf %703, %712 : vector<2x8x32xf32>
    %c16 = arith.constant 16 : index
    %c0_140 = arith.constant 0 : index
    %714 = vector.load %arg3[%c16, %c0_140] : memref<26x128xf32, #tpu.memory_space<vmem>>, vector<1x32xf32>
    %715 = vector.shape_cast %714 : vector<1x32xf32> to vector<1x1x32xf32>
    %716 = vector.broadcast %715 : vector<1x1x32xf32> to vector<2x8x32xf32>
    %717 = arith.mulf %713, %716 : vector<2x8x32xf32>
    %c17 = arith.constant 17 : index
    %c0_141 = arith.constant 0 : index
    %718 = vector.load %arg3[%c17, %c0_141] : memref<26x128xf32, #tpu.memory_space<vmem>>, vector<1x32xf32>
    %719 = vector.shape_cast %718 : vector<1x32xf32> to vector<1x1x32xf32>
    %720 = vector.broadcast %719 : vector<1x1x32xf32> to vector<2x8x32xf32>
    %721 = arith.addf %717, %720 : vector<2x8x32xf32>
    %c256 = arith.constant 256 : index
    %c0_142 = arith.constant 0 : index
    %722 = vector.load %arg2[%c256, %c0_142] : memref<304x16xf32, #tpu.memory_space<vmem>>, vector<16x16xf32>
    %cst_143 = arith.constant dense<0.000000e+00> : vector<2x8x16xf32>
    %723 = tpu.matmul %673, %722, %cst_143 {dimension_numbers = #tpu.dot_dimension_numbers<[2], [1], [0, 1], [0], [0, 0, 0, 1, 1, 0], [], []>} : vector<2x8x16xf32>, vector<16x16xf32>, vector<2x8x16xf32> -> vector<2x8x16xf32>
    %c18 = arith.constant 18 : index
    %c0_144 = arith.constant 0 : index
    %724 = vector.load %arg3[%c18, %c0_144] : memref<26x128xf32, #tpu.memory_space<vmem>>, vector<1x16xf32>
    %725 = vector.shape_cast %724 : vector<1x16xf32> to vector<1x1x16xf32>
    %726 = vector.broadcast %725 : vector<1x1x16xf32> to vector<2x8x16xf32>
    %727 = arith.addf %723, %726 : vector<2x8x16xf32>
    %c672 = arith.constant 672 : index
    %c0_145 = arith.constant 0 : index
    %728 = vector.load %arg1[%c672, %c0_145] : memref<736x32xf32, #tpu.memory_space<vmem>>, vector<32x32xf32>
    %cst_146 = arith.constant dense<0.000000e+00> : vector<2x8x32xf32>
    %729 = tpu.matmul %721, %728, %cst_146 {dimension_numbers = #tpu.dot_dimension_numbers<[2], [1], [0, 1], [0], [0, 0, 0, 1, 1, 0], [], []>} : vector<2x8x32xf32>, vector<32x32xf32>, vector<2x8x32xf32> -> vector<2x8x32xf32>
    %c272 = arith.constant 272 : index
    %c0_147 = arith.constant 0 : index
    %730 = vector.load %arg2[%c272, %c0_147] : memref<304x16xf32, #tpu.memory_space<vmem>>, vector<32x16xf32>
    %cst_148 = arith.constant dense<0.000000e+00> : vector<2x8x32xf32>
    %731 = tpu.matmul %727, %730, %cst_148 {dimension_numbers = #tpu.dot_dimension_numbers<[2], [1], [0, 1], [0], [0, 0, 0, 1, 1, 0], [], []>} : vector<2x8x16xf32>, vector<32x16xf32>, vector<2x8x32xf32> -> vector<2x8x32xf32>
    %732 = arith.addf %729, %731 : vector<2x8x32xf32>
    %c19 = arith.constant 19 : index
    %c0_149 = arith.constant 0 : index
    %733 = vector.load %arg3[%c19, %c0_149] : memref<26x128xf32, #tpu.memory_space<vmem>>, vector<1x32xf32>
    %734 = vector.shape_cast %733 : vector<1x32xf32> to vector<1x1x32xf32>
    %735 = vector.broadcast %734 : vector<1x1x32xf32> to vector<2x8x32xf32>
    %736 = arith.addf %732, %735 : vector<2x8x32xf32>
    %cst_150 = arith.constant 5.000000e-01 : f32
    %737 = vector.broadcast %cst_150 : f32 to vector<2x8x32xf32>
    %738 = arith.mulf %737, %736 : vector<2x8x32xf32>
    %cst_151 = arith.constant 0.707106769 : f32
    %739 = vector.broadcast %cst_151 : f32 to vector<2x8x32xf32>
    %740 = arith.mulf %736, %739 : vector<2x8x32xf32>
    %741 = math.erf %740 : vector<2x8x32xf32>
    %cst_152 = arith.constant 1.000000e+00 : f32
    %742 = vector.broadcast %cst_152 : f32 to vector<2x8x32xf32>
    %743 = arith.addf %742, %741 : vector<2x8x32xf32>
    %744 = arith.mulf %738, %743 : vector<2x8x32xf32>
    %cst_153 = arith.constant dense<0.000000e+00> : vector<2x8xf32>
    %745 = vector.multi_reduction <add>, %744, %cst_153 [2] : vector<2x8x32xf32> to vector<2x8xf32>
    %746 = vector.shape_cast %745 : vector<2x8xf32> to vector<2x8x1xf32>
    %cst_154 = arith.constant 3.200000e+01 : f32
    %747 = vector.broadcast %cst_154 : f32 to vector<2x8x1xf32>
    %748 = arith.divf %746, %747 : vector<2x8x1xf32>
    %749 = vector.broadcast %748 : vector<2x8x1xf32> to vector<2x8x32xf32>
    %750 = arith.subf %744, %749 : vector<2x8x32xf32>
    %751 = arith.mulf %750, %750 : vector<2x8x32xf32>
    %cst_155 = arith.constant dense<0.000000e+00> : vector<2x8xf32>
    %752 = vector.multi_reduction <add>, %751, %cst_155 [2] : vector<2x8x32xf32> to vector<2x8xf32>
    %753 = vector.shape_cast %752 : vector<2x8xf32> to vector<2x8x1xf32>
    %cst_156 = arith.constant 3.200000e+01 : f32
    %754 = vector.broadcast %cst_156 : f32 to vector<2x8x1xf32>
    %755 = arith.divf %753, %754 : vector<2x8x1xf32>
    %cst_157 = arith.constant 9.99999974E-6 : f32
    %756 = vector.broadcast %cst_157 : f32 to vector<2x8x1xf32>
    %757 = arith.addf %755, %756 : vector<2x8x1xf32>
    %758 = math.rsqrt %757 : vector<2x8x1xf32>
    %759 = vector.broadcast %758 : vector<2x8x1xf32> to vector<2x8x32xf32>
    %760 = arith.mulf %750, %759 : vector<2x8x32xf32>
    %c20 = arith.constant 20 : index
    %c0_158 = arith.constant 0 : index
    %761 = vector.load %arg3[%c20, %c0_158] : memref<26x128xf32, #tpu.memory_space<vmem>>, vector<1x32xf32>
    %762 = vector.shape_cast %761 : vector<1x32xf32> to vector<1x1x32xf32>
    %763 = vector.broadcast %762 : vector<1x1x32xf32> to vector<2x8x32xf32>
    %764 = arith.mulf %760, %763 : vector<2x8x32xf32>
    %c21 = arith.constant 21 : index
    %c0_159 = arith.constant 0 : index
    %765 = vector.load %arg3[%c21, %c0_159] : memref<26x128xf32, #tpu.memory_space<vmem>>, vector<1x32xf32>
    %766 = vector.shape_cast %765 : vector<1x32xf32> to vector<1x1x32xf32>
    %767 = vector.broadcast %766 : vector<1x1x32xf32> to vector<2x8x32xf32>
    %768 = arith.addf %764, %767 : vector<2x8x32xf32>
    %c720 = arith.constant 720 : index
    %c0_160 = arith.constant 0 : index
    %769 = vector.load %arg1[%c720, %c0_160] : memref<736x32xf32, #tpu.memory_space<vmem>>, vector<16x32xf32>
    %cst_161 = arith.constant dense<0.000000e+00> : vector<2x8x16xf32>
    %770 = tpu.matmul %768, %769, %cst_161 {dimension_numbers = #tpu.dot_dimension_numbers<[2], [1], [0, 1], [0], [0, 0, 0, 1, 1, 0], [], []>} : vector<2x8x32xf32>, vector<16x32xf32>, vector<2x8x16xf32> -> vector<2x8x16xf32>
    %c22 = arith.constant 22 : index
    %c0_162 = arith.constant 0 : index
    %771 = vector.load %arg3[%c22, %c0_162] : memref<26x128xf32, #tpu.memory_space<vmem>>, vector<1x16xf32>
    %772 = vector.shape_cast %771 : vector<1x16xf32> to vector<1x1x16xf32>
    %773 = vector.broadcast %772 : vector<1x1x16xf32> to vector<2x8x16xf32>
    %774 = arith.addf %770, %773 : vector<2x8x16xf32>
    %cst_163 = arith.constant 5.000000e-01 : f32
    %775 = vector.broadcast %cst_163 : f32 to vector<2x8x16xf32>
    %776 = arith.mulf %775, %774 : vector<2x8x16xf32>
    %cst_164 = arith.constant 0.707106769 : f32
    %777 = vector.broadcast %cst_164 : f32 to vector<2x8x16xf32>
    %778 = arith.mulf %774, %777 : vector<2x8x16xf32>
    %779 = math.erf %778 : vector<2x8x16xf32>
    %cst_165 = arith.constant 1.000000e+00 : f32
    %780 = vector.broadcast %cst_165 : f32 to vector<2x8x16xf32>
    %781 = arith.addf %780, %779 : vector<2x8x16xf32>
    %782 = arith.mulf %776, %781 : vector<2x8x16xf32>
    %cst_166 = arith.constant dense<0.000000e+00> : vector<2x8xf32>
    %783 = vector.multi_reduction <add>, %782, %cst_166 [2] : vector<2x8x16xf32> to vector<2x8xf32>
    %784 = vector.shape_cast %783 : vector<2x8xf32> to vector<2x8x1xf32>
    %cst_167 = arith.constant 1.600000e+01 : f32
    %785 = vector.broadcast %cst_167 : f32 to vector<2x8x1xf32>
    %786 = arith.divf %784, %785 : vector<2x8x1xf32>
    %787 = vector.broadcast %786 : vector<2x8x1xf32> to vector<2x8x16xf32>
    %788 = arith.subf %782, %787 : vector<2x8x16xf32>
    %789 = arith.mulf %788, %788 : vector<2x8x16xf32>
    %cst_168 = arith.constant dense<0.000000e+00> : vector<2x8xf32>
    %790 = vector.multi_reduction <add>, %789, %cst_168 [2] : vector<2x8x16xf32> to vector<2x8xf32>
    %791 = vector.shape_cast %790 : vector<2x8xf32> to vector<2x8x1xf32>
    %cst_169 = arith.constant 1.600000e+01 : f32
    %792 = vector.broadcast %cst_169 : f32 to vector<2x8x1xf32>
    %793 = arith.divf %791, %792 : vector<2x8x1xf32>
    %cst_170 = arith.constant 9.99999974E-6 : f32
    %794 = vector.broadcast %cst_170 : f32 to vector<2x8x1xf32>
    %795 = arith.addf %793, %794 : vector<2x8x1xf32>
    %796 = math.rsqrt %795 : vector<2x8x1xf32>
    %797 = vector.broadcast %796 : vector<2x8x1xf32> to vector<2x8x16xf32>
    %798 = arith.mulf %788, %797 : vector<2x8x16xf32>
    %c23 = arith.constant 23 : index
    %c0_171 = arith.constant 0 : index
    %799 = vector.load %arg3[%c23, %c0_171] : memref<26x128xf32, #tpu.memory_space<vmem>>, vector<1x16xf32>
    %800 = vector.shape_cast %799 : vector<1x16xf32> to vector<1x1x16xf32>
    %801 = vector.broadcast %800 : vector<1x1x16xf32> to vector<2x8x16xf32>
    %802 = arith.mulf %798, %801 : vector<2x8x16xf32>
    %c24 = arith.constant 24 : index
    %c0_172 = arith.constant 0 : index
    %803 = vector.load %arg3[%c24, %c0_172] : memref<26x128xf32, #tpu.memory_space<vmem>>, vector<1x16xf32>
    %804 = vector.shape_cast %803 : vector<1x16xf32> to vector<1x1x16xf32>
    %805 = vector.broadcast %804 : vector<1x1x16xf32> to vector<2x8x16xf32>
    %806 = arith.addf %802, %805 : vector<2x8x16xf32>
    %c128 = arith.constant 128 : index
    %c0_173 = arith.constant 0 : index
    %807 = vector.load %arg2[%c128, %c0_173] : memref<304x16xf32, #tpu.memory_space<vmem>>, vector<128x16xf32>
    %cst_174 = arith.constant dense<0.000000e+00> : vector<2x8x128xf32>
    %808 = tpu.matmul %806, %807, %cst_174 {dimension_numbers = #tpu.dot_dimension_numbers<[2], [1], [0, 1], [0], [0, 0, 0, 1, 1, 0], [], []>} : vector<2x8x16xf32>, vector<128x16xf32>, vector<2x8x128xf32> -> vector<2x8x128xf32>
    %c25 = arith.constant 25 : index
    %c0_175 = arith.constant 0 : index
    %809 = vector.load %arg3[%c25, %c0_175] : memref<26x128xf32, #tpu.memory_space<vmem>>, vector<1x128xf32>
    %810 = vector.shape_cast %809 : vector<1x128xf32> to vector<1x1x128xf32>
    %811 = vector.broadcast %810 : vector<1x1x128xf32> to vector<2x8x128xf32>
    %812 = arith.addf %808, %811 : vector<2x8x128xf32>
    %cst_176 = arith.constant 0.000000e+00 : f32
    %813 = vector.broadcast %cst_176 : f32 to vector<2x8x96xf32>
    %814 = tpu.concatenate %542, %813 in 2 : vector<2x8x32xf32>, vector<2x8x96xf32> -> vector<2x8x128xf32>
    %815 = tpu.concatenate %814, %679, %812 in 2 : vector<2x8x128xf32>, vector<2x8x128xf32>, vector<2x8x128xf32> -> vector<2x8x384xf32>
    %c0_177 = arith.constant 0 : index
    %c0_178 = arith.constant 0 : index
    %c0_179 = arith.constant 0 : index
    %816 = vector.load %arg4[%c0_177, %c0_178, %c0_179] : memref<2x8x384xf32, #tpu.memory_space<vmem>>, vector<2x8x384xf32>
    tpu.vector_store %arg4[%c0_177, %c0_178, %c0_179], %815 {strides = array<i32>} : memref<2x8x384xf32, #tpu.memory_space<vmem>>, vector<2x8x384xf32>,
    return
  }
}

</mosaic_0001>

<llo_original>
// kernel: tpu_custom_call.1
$region0: #{tpu_custom_call.1}
  #allocation0 [shape = 'u32[]', space=smem, size = 0x4, offset = 0x4, fixed_abs, tag = 'smem constant byte address 0x4 - core index']
  #allocation1 [shape = 'u32[144,128]{1,0:T(1,128)}', space=vmem, size = 0x12000, scoped, tag = 'internal scratch']
  %s0 = inlined_call_operand.vmem [shape: f32[2,8,32], index: 0, kind: input, shape index: {}]
  %s1 = inlined_call_operand.vmem [shape: f32[736,32], index: 1, kind: input, shape index: {}]
  %s2 = inlined_call_operand.vmem [shape: f32[304,16], index: 2, kind: input, shape index: {}]
  %s3 = inlined_call_operand.vmem [shape: f32[26,128], index: 3, kind: input, shape index: {}]
  %s4 = inlined_call_operand.hbm [shape: f32[2,8,384], index: 4, kind: output, shape index: {}]
  %s5 = sld [smem:[#allocation0]]
  $region26: #{tpu_custom_call.1} parent=0
    _
  %s7 = ssub.s32 1, %s5
  %s8 = scalar_select 0, %s7, %s5
  $region1: #{tpu_custom_call.1} parent=0
    #allocation2 [shape = 'u8[24576]{0}', space=vmem, size = 0x6000, scoped, tag = 'output window, operand 0, single buffered']
    #allocation3 [shape = 's32[1]{0}', space=sflag, size = 0x4, scoped, tag = 'scoped memory for tpu_custom_call.1']
    %9 = vsyncpa [#allocation3], 0
    // Predicated region
    $region2: #{tpu_custom_call.1} parent=1 // pred_check
      _
    $region3: #{tpu_custom_call.1} parent=1 // pred_check_branch
      %11 = sbr.rel (0) target = $region5
    $region4: #{tpu_custom_call.1} parent=1 // pred_region
      _
    $region5: #{tpu_custom_call.1} parent=1 // pred_fallthru
      _
    // Predicated region
    $region6: #{tpu_custom_call.1} parent=1 // pred_check
      _
    $region7: #{tpu_custom_call.1} parent=1 // pred_check_branch
      %13 = sbr.rel (0) target = $region9
    $region8: #{tpu_custom_call.1} parent=1 // pred_region
      _
    $region9: #{tpu_custom_call.1} parent=1 // pred_fallthru
      _
    // Predicated region
    $region10: #{tpu_custom_call.1} parent=1 // pred_check
      _
    $region11: #{tpu_custom_call.1} parent=1 // pred_check_branch
      %15 = sbr.rel (0) target = $region13
    $region12: #{tpu_custom_call.1} parent=1 // pred_region
      _
    $region13: #{tpu_custom_call.1} parent=1 // pred_fallthru
      _
    // Predicated region
    $region14: #{tpu_custom_call.1} parent=1 // pred_check
      _
    $region15: #{tpu_custom_call.1} parent=1 // pred_check_branch
      %17 = sbr.rel (0) target = $region17
    $region16: #{tpu_custom_call.1} parent=1 // pred_region
      _
    $region17: #{tpu_custom_call.1} parent=1 // pred_fallthru
      _
    %v18 = vld [vmem:[%s0] sm:$0xff]
    %v19 = vld [vmem:[%s0 + $0x8] sm:$0xff]
    %v20 = vld [vmem:[%s1] sm:$0xff]
    %v21 = vld [vmem:[%s1 + $0x8] sm:$0xff]
    %v22 = vld [vmem:[%s1 + $0x10] sm:$0xff]
    %v23 = vld [vmem:[%s1 + $0x18] sm:$0xff]
    %v24 = vld [vmem:[%s1 + $0x20] sm:$0xff]
    %v25 = vld [vmem:[%s1 + $0x28] sm:$0xff]
    %v26 = vld [vmem:[%s1 + $0x30] sm:$0xff]
    %v27 = vld [vmem:[%s1 + $0x38] sm:$0xff]
    %v28 = vld [vmem:[%s1 + $0x40] sm:$0xff]
    %v29 = vld [vmem:[%s1 + $0x48] sm:$0xff]
    %v30 = vld [vmem:[%s1 + $0x50] sm:$0xff]
    %v31 = vld [vmem:[%s1 + $0x58] sm:$0xff]
    %v32 = vld [vmem:[%s3] sm:$0x1]
    %v33 = vlaneseq
    %v34 = vshrl.u32 %v33, 7
    %v35 = vsub.s32 0, %v34
    %v36 = vrot.slane %v32, %v35
    %vm37 = vcmask 261120
    %v39 = vsel %vm37, %v18, 0
    %v42 = vsel %vm37, %v19, 0
    %v45 = vsel %vm37, %v20, 0
    %v48 = vsel %vm37, %v21, 0
    %v51 = vsel %vm37, %v22, 0
    %v54 = vsel %vm37, %v23, 0
    %v57 = vsel %vm37, %v24, 0
    %v60 = vsel %vm37, %v25, 0
    %v63 = vsel %vm37, %v26, 0
    %v66 = vsel %vm37, %v27, 0
    %v69 = vsel %vm37, %v28, 0
    %v72 = vsel %vm37, %v29, 0
    %v75 = vsel %vm37, %v30, 0
    %v78 = vsel %vm37, %v31, 0
    %80 = vmatprep.subr.mxu0 0.0
    %81 = vmatpush1.xpose.msra.mxu0 %v45
    %82 = vmatprep.subr.mxu0 0.0
    %83 = vmatpush1.xpose.msra.mxu0 %v48
    %84 = vmatprep.subr.mxu0 0.0
    %85 = vmatpush1.xpose.msra.mxu0 %v51
    %86 = vmatprep.subr.mxu0 0.0
    %87 = vmatpush1.xpose.msra.mxu0 %v54
    %88 = vmatprep.subr.mxu0 0.0
    %89 = vmatpush1.xpose.msra.mxu0 %v57
    %90 = vmatprep.subr.mxu0 0.0
    %91 = vmatpush1.xpose.msra.mxu0 %v60
    %92 = vmatprep.subr.mxu0 0.0
    %93 = vmatpush1.xpose.msra.mxu0 %v63
    %94 = vmatprep.subr.mxu0 0.0
    %95 = vmatpush1.xpose.msra.mxu0 %v66
    %96 = vmatprep.subr.mxu0 0.0
    %97 = vmatpush1.xpose.msra.mxu0 %v69
    %98 = vmatprep.subr.mxu0 0.0
    %99 = vmatpush1.xpose.msra.mxu0 %v72
    %100 = vmatprep.subr.mxu0 0.0
    %101 = vmatpush1.xpose.msra.mxu0 %v75
    %102 = vmatprep.subr.mxu0 0.0
    %103 = vmatpush1.xpose.msra.mxu0 %v78
    %104 = vmatprep.subr.mxu0 0.0
    %105 = vmatpush1.xpose.msra.mxu0 0.0
    %106 = vmatprep.subr.mxu0 0.0
    %107 = vmatpush1.xpose.msra.mxu0 0.0
    %108 = vmatprep.subr.mxu0 0.0
    %109 = vmatpush1.xpose.msra.mxu0 0.0
    %110 = vmatprep.subr.mxu0 0.0
    %111 = vmatpush1.xpose.msra.mxu0 0.0
    %112 = vmatprep.subr.mxu0 0.0
    %113 = vmatpush1.xpose.msra.mxu0 0.0
    %114 = vmatprep.subr.mxu0 0.0
    %115 = vmatpush1.xpose.msra.mxu0 0.0
    %116 = vmatprep.subr.mxu0 0.0
    %117 = vmatpush1.xpose.msra.mxu0 0.0
    %118 = vmatprep.subr.mxu0 0.0
    %119 = vmatpush1.xpose.msra.mxu0 0.0
    %120 = vmatprep.subr.mxu0 0.0
    %121 = vmatpush1.xpose.msra.mxu0 0.0
    %122 = vmatprep.subr.mxu0 0.0
    %123 = vmatpush1.xpose.msra.mxu0 0.0
    %124 = vmatprep.subr.mxu0 0.0
    %125 = vmatpush1.xpose.msra.mxu0 0.0
    %126 = vmatprep.subr.mxu0 0.0
    %127 = vmatpush1.xpose.msra.mxu0 0.0
    %128 = vmatprep.subr.mxu0 0.0
    %129 = vmatpush1.xpose.msra.mxu0 0.0
    %130 = vmatprep.subr.mxu0 0.0
    %131 = vmatpush1.xpose.msra.mxu0 0.0
    %132 = vmatprep.subr.mxu0 0.0
    %133 = vmatpush1.xpose.msra.mxu0 0.0
    %134 = vmatprep.subr.mxu0 0.0
    %135 = vmatpush1.xpose.msra.mxu0 0.0
    %136 = vmatprep.subr.mxu0 0.0
    %137 = vmatpush1.xpose.msra.mxu0 0.0
    %138 = vmatprep.subr.mxu0 0.0
    %139 = vmatpush1.xpose.msra.mxu0 0.0
    %140 = vmatprep.subr.mxu0 0.0
    %141 = vmatpush1.xpose.msra.mxu0 0.0
    %142 = vmatprep.subr.mxu0 0.0
    %143 = vmatpush1.xpose.msra.mxu0 0.0
    %144 = vmatprep.mubr.f32.mxu0 0.0
    %145 = vmatmul.mubr.f32.gmra.mrb[0].mxu0 %v39
    %v146 = vpop.f32.mrb[0].mxu0
    %v147 = vadd.f32 %v36, %v146
    %v148 = vpop.f32.mrb[0].mxu0
    %149 = vmatprep.mubr.f32.mxu0 0.0
    %150 = vmatmul.mubr.f32.gmra.mrb[0].mxu0 %v42
    %v151 = vpop.f32.mrb[0].mxu0
    %v152 = vadd.f32 %v36, %v151
    %v153 = vpop.f32.mrb[0].mxu0
    %154 = vdwg.mxu0
    %v155 = vld [vmem:[%s1 + $0xc0] sm:$0xff]
    %v156 = vld [vmem:[%s1 + $0xc8] sm:$0xff]
    %v157 = vld [vmem:[%s1 + $0xd0] sm:$0xff]
    %v158 = vld [vmem:[%s1 + $0xd8] sm:$0xff]
    %v159 = vld [vmem:[%s1 + $0xe0] sm:$0xff]
    %v160 = vld [vmem:[%s1 + $0xe8] sm:$0xff]
    %v161 = vld [vmem:[%s1 + $0xf0] sm:$0xff]
    %v162 = vld [vmem:[%s1 + $0xf8] sm:$0xff]
    %v163 = vld [vmem:[%s1 + $0x100] sm:$0xff]
    %v164 = vld [vmem:[%s1 + $0x108] sm:$0xff]
    %v165 = vld [vmem:[%s1 + $0x110] sm:$0xff]
    %v166 = vld [vmem:[%s1 + $0x118] sm:$0xff]
    %v167 = vld [vmem:[%s3 + $0x2] sm:$0x1]
    %v168 = vlaneseq
    %v169 = vshrl.u32 %v168, 7
    %v170 = vsub.s32 0, %v169
    %v171 = vrot.slane %v167, %v170
    %v173 = vsel %vm37, %v155, 0
    %v176 = vsel %vm37, %v156, 0
    %v179 = vsel %vm37, %v157, 0
    %v182 = vsel %vm37, %v158, 0
    %v185 = vsel %vm37, %v159, 0
    %v188 = vsel %vm37, %v160, 0
    %v191 = vsel %vm37, %v161, 0
    %v194 = vsel %vm37, %v162, 0
    %v197 = vsel %vm37, %v163, 0
    %v200 = vsel %vm37, %v164, 0
    %v203 = vsel %vm37, %v165, 0
    %v206 = vsel %vm37, %v166, 0
    %208 = vmatprep.subr.mxu0 0.0
    %209 = vmatpush1.xpose.msra.mxu0 %v173
    %210 = vmatprep.subr.mxu0 0.0
    %211 = vmatpush1.xpose.msra.mxu0 %v176
    %212 = vmatprep.subr.mxu0 0.0
    %213 = vmatpush1.xpose.msra.mxu0 %v179
    %214 = vmatprep.subr.mxu0 0.0
    %215 = vmatpush1.xpose.msra.mxu0 %v182
    %216 = vmatprep.subr.mxu0 0.0
    %217 = vmatpush1.xpose.msra.mxu0 %v185
    %218 = vmatprep.subr.mxu0 0.0
    %219 = vmatpush1.xpose.msra.mxu0 %v188
    %220 = vmatprep.subr.mxu0 0.0
    %221 = vmatpush1.xpose.msra.mxu0 %v191
    %222 = vmatprep.subr.mxu0 0.0
    %223 = vmatpush1.xpose.msra.mxu0 %v194
    %224 = vmatprep.subr.mxu0 0.0
    %225 = vmatpush1.xpose.msra.mxu0 %v197
    %226 = vmatprep.subr.mxu0 0.0
    %227 = vmatpush1.xpose.msra.mxu0 %v200
    %228 = vmatprep.subr.mxu0 0.0
    %229 = vmatpush1.xpose.msra.mxu0 %v203
    %230 = vmatprep.subr.mxu0 0.0
    %231 = vmatpush1.xpose.msra.mxu0 %v206
    %232 = vmatprep.subr.mxu0 0.0
    %233 = vmatpush1.xpose.msra.mxu0 0.0
    %234 = vmatprep.subr.mxu0 0.0
    %235 = vmatpush1.xpose.msra.mxu0 0.0
    %236 = vmatprep.subr.mxu0 0.0
    %237 = vmatpush1.xpose.msra.mxu0 0.0
    %238 = vmatprep.subr.mxu0 0.0
    %239 = vmatpush1.xpose.msra.mxu0 0.0
    %240 = vmatprep.subr.mxu0 0.0
    %241 = vmatpush1.xpose.msra.mxu0 0.0
    %242 = vmatprep.subr.mxu0 0.0
    %243 = vmatpush1.xpose.msra.mxu0 0.0
    %244 = vmatprep.subr.mxu0 0.0
    %245 = vmatpush1.xpose.msra.mxu0 0.0
    %246 = vmatprep.subr.mxu0 0.0
    %247 = vmatpush1.xpose.msra.mxu0 0.0
    %248 = vmatprep.subr.mxu0 0.0
    %249 = vmatpush1.xpose.msra.mxu0 0.0
    %250 = vmatprep.subr.mxu0 0.0
    %251 = vmatpush1.xpose.msra.mxu0 0.0
    %252 = vmatprep.subr.mxu0 0.0
    %253 = vmatpush1.xpose.msra.mxu0 0.0
    %254 = vmatprep.subr.mxu0 0.0
    %255 = vmatpush1.xpose.msra.mxu0 0.0
    %256 = vmatprep.subr.mxu0 0.0
    %257 = vmatpush1.xpose.msra.mxu0 0.0
    %258 = vmatprep.subr.mxu0 0.0
    %259 = vmatpush1.xpose.msra.mxu0 0.0
    %260 = vmatprep.subr.mxu0 0.0
    %261 = vmatpush1.xpose.msra.mxu0 0.0
    %262 = vmatprep.subr.mxu0 0.0
    %263 = vmatpush1.xpose.msra.mxu0 0.0
    %264 = vmatprep.subr.mxu0 0.0
    %265 = vmatpush1.xpose.msra.mxu0 0.0
    %266 = vmatprep.subr.mxu0 0.0
    %267 = vmatpush1.xpose.msra.mxu0 0.0
    %268 = vmatprep.subr.mxu0 0.0
    %269 = vmatpush1.xpose.msra.mxu0 0.0
    %270 = vmatprep.subr.mxu0 0.0
    %271 = vmatpush1.xpose.msra.mxu0 0.0
    %272 = vmatprep.mubr.f32.mxu0 0.0
    %273 = vmatmul.mubr.f32.gmra.mrb[0].mxu0 %v39
    %v274 = vpop.f32.mrb[0].mxu0
    %v275 = vadd.f32 %v171, %v274
    %v276 = vpop.f32.mrb[0].mxu0
    %277 = vmatprep.mubr.f32.mxu0 0.0
    %278 = vmatmul.mubr.f32.gmra.mrb[0].mxu0 %v42
    %v279 = vpop.f32.mrb[0].mxu0
    %v280 = vadd.f32 %v171, %v279
    %v281 = vpop.f32.mrb[0].mxu0
    %282 = vdwg.mxu0
    %v283 = vld [vmem:[%s1 + $0x60] sm:$0xff]
    %v284 = vld [vmem:[%s1 + $0x68] sm:$0xff]
    %v285 = vld [vmem:[%s1 + $0x70] sm:$0xff]
    %v286 = vld [vmem:[%s1 + $0x78] sm:$0xff]
    %v287 = vld [vmem:[%s1 + $0x80] sm:$0xff]
    %v288 = vld [vmem:[%s1 + $0x88] sm:$0xff]
    %v289 = vld [vmem:[%s1 + $0x90] sm:$0xff]
    %v290 = vld [vmem:[%s1 + $0x98] sm:$0xff]
    %v291 = vld [vmem:[%s1 + $0xa0] sm:$0xff]
    %v292 = vld [vmem:[%s1 + $0xa8] sm:$0xff]
    %v293 = vld [vmem:[%s1 + $0xb0] sm:$0xff]
    %v294 = vld [vmem:[%s1 + $0xb8] sm:$0xff]
    %v295 = vld [vmem:[%s3 + $0x1] sm:$0x1]
    %v296 = vld [vmem:[%s1 + $0x120] sm:$0xff]
    %v297 = vld [vmem:[%s1 + $0x128] sm:$0xff]
    %v298 = vld [vmem:[%s1 + $0x130] sm:$0xff]
    %v299 = vld [vmem:[%s1 + $0x138] sm:$0xff]
    %v300 = vld [vmem:[%s1 + $0x140] sm:$0xff]
    %v301 = vld [vmem:[%s1 + $0x148] sm:$0xff]
    %v302 = vld [vmem:[%s1 + $0x150] sm:$0xff]
    %v303 = vld [vmem:[%s1 + $0x158] sm:$0xff]
    %v304 = vld [vmem:[%s1 + $0x160] sm:$0xff]
    %v305 = vld [vmem:[%s1 + $0x168] sm:$0xff]
    %v306 = vld [vmem:[%s1 + $0x170] sm:$0xff]
    %v307 = vld [vmem:[%s1 + $0x178] sm:$0xff]
    %v308 = vld [vmem:[%s3 + $0x3] sm:$0x1]
    %v309 = vlaneseq
    %v310 = vshrl.u32 %v309, 7
    %v311 = vsub.s32 0, %v310
    %v312 = vrot.slane %v295, %v311
    %v314 = vsel %vm37, 0.0, 0
    %v317 = vsel %vm37, %v283, 0
    %v320 = vsel %vm37, %v284, 0
    %v323 = vsel %vm37, %v285, 0
    %v326 = vsel %vm37, %v286, 0
    %v329 = vsel %vm37, %v287, 0
    %v332 = vsel %vm37, %v288, 0
    %v335 = vsel %vm37, %v289, 0
    %v338 = vsel %vm37, %v290, 0
    %v341 = vsel %vm37, %v291, 0
    %v344 = vsel %vm37, %v292, 0
    %v347 = vsel %vm37, %v293, 0
    %v350 = vsel %vm37, %v294, 0
    %352 = vmatprep.subr.mxu0 0.0
    %353 = vmatpush1.xpose.msra.mxu0 %v317
    %354 = vmatprep.subr.mxu0 0.0
    %355 = vmatpush1.xpose.msra.mxu0 %v320
    %356 = vmatprep.subr.mxu0 0.0
    %357 = vmatpush1.xpose.msra.mxu0 %v323
    %358 = vmatprep.subr.mxu0 0.0
    %359 = vmatpush1.xpose.msra.mxu0 %v326
    %360 = vmatprep.subr.mxu0 0.0
    %361 = vmatpush1.xpose.msra.mxu0 %v329
    %362 = vmatprep.subr.mxu0 0.0
    %363 = vmatpush1.xpose.msra.mxu0 %v332
    %364 = vmatprep.subr.mxu0 0.0
    %365 = vmatpush1.xpose.msra.mxu0 %v335
    %366 = vmatprep.subr.mxu0 0.0
    %367 = vmatpush1.xpose.msra.mxu0 %v338
    %368 = vmatprep.subr.mxu0 0.0
    %369 = vmatpush1.xpose.msra.mxu0 %v341
    %370 = vmatprep.subr.mxu0 0.0
    %371 = vmatpush1.xpose.msra.mxu0 %v344
    %372 = vmatprep.subr.mxu0 0.0
    %373 = vmatpush1.xpose.msra.mxu0 %v347
    %374 = vmatprep.subr.mxu0 0.0
    %375 = vmatpush1.xpose.msra.mxu0 %v350
    %376 = vmatprep.subr.mxu0 0.0
    %377 = vmatpush1.xpose.msra.mxu0 0.0
    %378 = vmatprep.subr.mxu0 0.0
    %379 = vmatpush1.xpose.msra.mxu0 0.0
    %380 = vmatprep.subr.mxu0 0.0
    %381 = vmatpush1.xpose.msra.mxu0 0.0
    %382 = vmatprep.subr.mxu0 0.0
    %383 = vmatpush1.xpose.msra.mxu0 0.0
    %384 = vmatprep.subr.mxu0 0.0
    %385 = vmatpush1.xpose.msra.mxu0 0.0
    %386 = vmatprep.subr.mxu0 0.0
    %387 = vmatpush1.xpose.msra.mxu0 0.0
    %388 = vmatprep.subr.mxu0 0.0
    %389 = vmatpush1.xpose.msra.mxu0 0.0
    %390 = vmatprep.subr.mxu0 0.0
    %391 = vmatpush1.xpose.msra.mxu0 0.0
    %392 = vmatprep.subr.mxu0 0.0
    %393 = vmatpush1.xpose.msra.mxu0 0.0
    %394 = vmatprep.subr.mxu0 0.0
    %395 = vmatpush1.xpose.msra.mxu0 0.0
    %396 = vmatprep.subr.mxu0 0.0
    %397 = vmatpush1.xpose.msra.mxu0 0.0
    %398 = vmatprep.subr.mxu0 0.0
    %399 = vmatpush1.xpose.msra.mxu0 0.0
    %400 = vmatprep.subr.mxu0 0.0
    %401 = vmatpush1.xpose.msra.mxu0 0.0
    %402 = vmatprep.subr.mxu0 0.0
    %403 = vmatpush1.xpose.msra.mxu0 0.0
    %404 = vmatprep.subr.mxu0 0.0
    %405 = vmatpush1.xpose.msra.mxu0 0.0
    %406 = vmatprep.subr.mxu0 0.0
    %407 = vmatpush1.xpose.msra.mxu0 0.0
    %408 = vmatprep.subr.mxu0 0.0
    %409 = vmatpush1.xpose.msra.mxu0 0.0
    %410 = vmatprep.subr.mxu0 0.0
    %411 = vmatpush1.xpose.msra.mxu0 0.0
    %412 = vmatprep.subr.mxu0 0.0
    %413 = vmatpush1.xpose.msra.mxu0 0.0
    %414 = vmatprep.subr.mxu0 0.0
    %415 = vmatpush1.xpose.msra.mxu0 0.0
    %416 = vmatprep.mubr.f32.mxu0 0.0
    %417 = vmatmul.mubr.f32.gmra.mrb[0].mxu0 %v314
    %v418 = vpop.f32.mrb[0].mxu0
    %v419 = vadd.f32 %v312, %v418
    %v420 = vpop.f32.mrb[0].mxu0
    %421 = vdwg.mxu0
    %v422 = vlaneseq
    %v423 = vshrl.u32 %v422, 7
    %v424 = vsub.s32 0, %v423
    %v425 = vrot.slane %v308, %v424
    %v427 = vsel %vm37, %v296, 0
    %v430 = vsel %vm37, %v297, 0
    %v433 = vsel %vm37, %v298, 0
    %v436 = vsel %vm37, %v299, 0
    %v439 = vsel %vm37, %v300, 0
    %v442 = vsel %vm37, %v301, 0
    %v445 = vsel %vm37, %v302, 0
    %v448 = vsel %vm37, %v303, 0
    %v451 = vsel %vm37, %v304, 0
    %v454 = vsel %vm37, %v305, 0
    %v457 = vsel %vm37, %v306, 0
    %v460 = vsel %vm37, %v307, 0
    %462 = vmatprep.subr.mxu0 0.0
    %463 = vmatpush1.xpose.msra.mxu0 %v427
    %464 = vmatprep.subr.mxu0 0.0
    %465 = vmatpush1.xpose.msra.mxu0 %v430
    %466 = vmatprep.subr.mxu0 0.0
    %467 = vmatpush1.xpose.msra.mxu0 %v433
    %468 = vmatprep.subr.mxu0 0.0
    %469 = vmatpush1.xpose.msra.mxu0 %v436
    %470 = vmatprep.subr.mxu0 0.0
    %471 = vmatpush1.xpose.msra.mxu0 %v439
    %472 = vmatprep.subr.mxu0 0.0
    %473 = vmatpush1.xpose.msra.mxu0 %v442
    %474 = vmatprep.subr.mxu0 0.0
    %475 = vmatpush1.xpose.msra.mxu0 %v445
    %476 = vmatprep.subr.mxu0 0.0
    %477 = vmatpush1.xpose.msra.mxu0 %v448
    %478 = vmatprep.subr.mxu0 0.0
    %479 = vmatpush1.xpose.msra.mxu0 %v451
    %480 = vmatprep.subr.mxu0 0.0
    %481 = vmatpush1.xpose.msra.mxu0 %v454
    %482 = vmatprep.subr.mxu0 0.0
    %483 = vmatpush1.xpose.msra.mxu0 %v457
    %484 = vmatprep.subr.mxu0 0.0
    %485 = vmatpush1.xpose.msra.mxu0 %v460
    %486 = vmatprep.subr.mxu0 0.0
    %487 = vmatpush1.xpose.msra.mxu0 0.0
    %488 = vmatprep.subr.mxu0 0.0
    %489 = vmatpush1.xpose.msra.mxu0 0.0
    %490 = vmatprep.subr.mxu0 0.0
    %491 = vmatpush1.xpose.msra.mxu0 0.0
    %492 = vmatprep.subr.mxu0 0.0
    %493 = vmatpush1.xpose.msra.mxu0 0.0
    %494 = vmatprep.subr.mxu0 0.0
    %495 = vmatpush1.xpose.msra.mxu0 0.0
    %496 = vmatprep.subr.mxu0 0.0
    %497 = vmatpush1.xpose.msra.mxu0 0.0
    %498 = vmatprep.subr.mxu0 0.0
    %499 = vmatpush1.xpose.msra.mxu0 0.0
    %500 = vmatprep.subr.mxu0 0.0
    %501 = vmatpush1.xpose.msra.mxu0 0.0
    %502 = vmatprep.subr.mxu0 0.0
    %503 = vmatpush1.xpose.msra.mxu0 0.0
    %504 = vmatprep.subr.mxu0 0.0
    %505 = vmatpush1.xpose.msra.mxu0 0.0
    %506 = vmatprep.subr.mxu0 0.0
    %507 = vmatpush1.xpose.msra.mxu0 0.0
    %508 = vmatprep.subr.mxu0 0.0
    %509 = vmatpush1.xpose.msra.mxu0 0.0
    %510 = vmatprep.subr.mxu0 0.0
    %511 = vmatpush1.xpose.msra.mxu0 0.0
    %512 = vmatprep.subr.mxu0 0.0
    %513 = vmatpush1.xpose.msra.mxu0 0.0
    %514 = vmatprep.subr.mxu0 0.0
    %515 = vmatpush1.xpose.msra.mxu0 0.0
    %516 = vmatprep.subr.mxu0 0.0
    %517 = vmatpush1.xpose.msra.mxu0 0.0
    %518 = vmatprep.subr.mxu0 0.0
    %519 = vmatpush1.xpose.msra.mxu0 0.0
    %520 = vmatprep.subr.mxu0 0.0
    %521 = vmatpush1.xpose.msra.mxu0 0.0
    %522 = vmatprep.subr.mxu0 0.0
    %523 = vmatpush1.xpose.msra.mxu0 0.0
    %524 = vmatprep.subr.mxu0 0.0
    %525 = vmatpush1.xpose.msra.mxu0 0.0
    %526 = vmatprep.mubr.f32.mxu0 0.0
    %527 = vmatmul.mubr.f32.gmra.mrb[0].mxu0 %v314
    %v528 = vpop.f32.mrb[0].mxu0
    %v529 = vadd.f32 %v425, %v528
    %v530 = vpop.f32.mrb[0].mxu0
    %531 = vdwg.mxu0
    %v533 = vrot.slane %v419, 1
    %v536 = vadd.f32 %v147, %v419
    %v537 = vadd.f32 %v152, %v533
    %v538 = vxor.u32 %v536, 2147483648
    %v539 = vxor.u32 %v537, 2147483648
    %v540 = vmul.f32 %v538, 1.442695
    %v541 = vpow.pop %v540
    %v542 = vmul.f32 %v539, 1.442695
    %v543 = vpow.pop %v542
    %v544 = vadd.f32 %v541, 1.0
    %v545 = vadd.f32 %v543, 1.0
    %v546 = vrcp.pop %v544
    %v547 = vmul.f32 1.0, %v546
    %v548 = vrcp.pop %v545
    %v549 = vmul.f32 1.0, %v548
    %550 = vrot.lane.b32.xlu0 %v419, 64
    %v551 = vpop.permute.xlu0 %550
    %552 = vrot.lane.b32.xlu0 %v533, 64
    %v553 = vpop.permute.xlu0 %552
    %v556 = vmul.f32 %v547, %v551
    %v557 = vmul.f32 %v549, %v553
    %560 = vrot.lane.b32.xlu0 %v556, 64
    %v561 = vpop.permute.xlu0 %560
    %562 = vrot.lane.b32.xlu0 %v557, 64
    %v563 = vpop.permute.xlu0 %562
    %v566 = vadd.f32 %v147, %v561
    %v567 = vadd.f32 %v152, %v563
    %v568 = vtanh.pop %v566
    %v569 = vtanh.pop %v567
    %v570 = vsub.f32 1.0, %v547
    %v571 = vsub.f32 1.0, %v549
    %574 = vrot.lane.b32.xlu0 %v568, 96
    %v575 = vpop.permute.xlu0 %574
    %576 = vrot.lane.b32.xlu0 %v569, 96
    %v577 = vpop.permute.xlu0 %576
    %v580 = vmul.f32 %v570, %v575
    %v581 = vmul.f32 %v571, %v577
    %v582 = vmul.f32 %v547, 0.0
    %v583 = vmul.f32 %v549, 0.0
    %v584 = vadd.f32 %v580, %v582
    %v585 = vadd.f32 %v581, %v583
    %v587 = vrot.slane %v529, 1
    %v588 = vrot.slane %v529, 2
    %v591 = vadd.f32 %v275, %v587
    %v592 = vadd.f32 %v280, %v588
    %v593 = vxor.u32 %v591, 2147483648
    %v594 = vxor.u32 %v592, 2147483648
    %v595 = vmul.f32 %v593, 1.442695
    %v596 = vpow.pop %v595
    %v597 = vmul.f32 %v594, 1.442695
    %v598 = vpow.pop %v597
    %v599 = vadd.f32 %v596, 1.0
    %v600 = vadd.f32 %v598, 1.0
    %v601 = vrcp.pop %v599
    %v602 = vmul.f32 1.0, %v601
    %v603 = vrcp.pop %v600
    %v604 = vmul.f32 1.0, %v603
    %605 = vrot.lane.b32.xlu0 %v587, 64
    %v606 = vpop.permute.xlu0 %605
    %607 = vrot.lane.b32.xlu0 %v588, 64
    %v608 = vpop.permute.xlu0 %607
    %v611 = vmul.f32 %v602, %v606
    %v612 = vmul.f32 %v604, %v608
    %615 = vrot.lane.b32.xlu0 %v611, 64
    %v616 = vpop.permute.xlu0 %615
    %617 = vrot.lane.b32.xlu0 %v612, 64
    %v618 = vpop.permute.xlu0 %617
    %v621 = vadd.f32 %v275, %v616
    %v622 = vadd.f32 %v280, %v618
    %v623 = vtanh.pop %v621
    %v624 = vtanh.pop %v622
    %v625 = vsub.f32 1.0, %v602
    %v626 = vsub.f32 1.0, %v604
    %629 = vrot.lane.b32.xlu0 %v623, 96
    %v630 = vpop.permute.xlu0 %629
    %631 = vrot.lane.b32.xlu0 %v624, 96
    %v632 = vpop.permute.xlu0 %631
    %v635 = vmul.f32 %v625, %v630
    %v636 = vmul.f32 %v626, %v632
    %v637 = vmul.f32 %v602, 0.0
    %v638 = vmul.f32 %v604, 0.0
    %v639 = vadd.f32 %v635, %v637
    %v640 = vadd.f32 %v636, %v638
    %v643 = vrot.slane %v585, 7
    %vm644 = vcmask 1041409
    %v645 = vsel %vm644, %v643, %v584
    %646 = vrot.lane.b32.xlu0 %v645, 96
    %v647 = vpop.permute.xlu0 %646
    %v648 = vsel %vm37, %v647, 0
    %650 = vmatprep.subr.mxu0 0.0
    %651 = vmatpush1.xpose.msra.mxu0 %v317
    %652 = vmatprep.subr.mxu0 0.0
    %653 = vmatpush1.xpose.msra.mxu0 %v320
    %654 = vmatprep.subr.mxu0 0.0
    %655 = vmatpush1.xpose.msra.mxu0 %v323
    %656 = vmatprep.subr.mxu0 0.0
    %657 = vmatpush1.xpose.msra.mxu0 %v326
    %658 = vmatprep.subr.mxu0 0.0
    %659 = vmatpush1.xpose.msra.mxu0 %v329
    %660 = vmatprep.subr.mxu0 0.0
    %661 = vmatpush1.xpose.msra.mxu0 %v332
    %662 = vmatprep.subr.mxu0 0.0
    %663 = vmatpush1.xpose.msra.mxu0 %v335
    %664 = vmatprep.subr.mxu0 0.0
    %665 = vmatpush1.xpose.msra.mxu0 %v338
    %666 = vmatprep.subr.mxu0 0.0
    %667 = vmatpush1.xpose.msra.mxu0 %v341
    %668 = vmatprep.subr.mxu0 0.0
    %669 = vmatpush1.xpose.msra.mxu0 %v344
    %670 = vmatprep.subr.mxu0 0.0
    %671 = vmatpush1.xpose.msra.mxu0 %v347
    %672 = vmatprep.subr.mxu0 0.0
    %673 = vmatpush1.xpose.msra.mxu0 %v350
    %674 = vmatprep.subr.mxu0 0.0
    %675 = vmatpush1.xpose.msra.mxu0 0.0
    %676 = vmatprep.subr.mxu0 0.0
    %677 = vmatpush1.xpose.msra.mxu0 0.0
    %678 = vmatprep.subr.mxu0 0.0
    %679 = vmatpush1.xpose.msra.mxu0 0.0
    %680 = vmatprep.subr.mxu0 0.0
    %681 = vmatpush1.xpose.msra.mxu0 0.0
    %682 = vmatprep.subr.mxu0 0.0
    %683 = vmatpush1.xpose.msra.mxu0 0.0
    %684 = vmatprep.subr.mxu0 0.0
    %685 = vmatpush1.xpose.msra.mxu0 0.0
    %686 = vmatprep.subr.mxu0 0.0
    %687 = vmatpush1.xpose.msra.mxu0 0.0
    %688 = vmatprep.subr.mxu0 0.0
    %689 = vmatpush1.xpose.msra.mxu0 0.0
    %690 = vmatprep.subr.mxu0 0.0
    %691 = vmatpush1.xpose.msra.mxu0 0.0
    %692 = vmatprep.subr.mxu0 0.0
    %693 = vmatpush1.xpose.msra.mxu0 0.0
    %694 = vmatprep.subr.mxu0 0.0
    %695 = vmatpush1.xpose.msra.mxu0 0.0
    %696 = vmatprep.subr.mxu0 0.0
    %697 = vmatpush1.xpose.msra.mxu0 0.0
    %698 = vmatprep.subr.mxu0 0.0
    %699 = vmatpush1.xpose.msra.mxu0 0.0
    %700 = vmatprep.subr.mxu0 0.0
    %701 = vmatpush1.xpose.msra.mxu0 0.0
    %702 = vmatprep.subr.mxu0 0.0
    %703 = vmatpush1.xpose.msra.mxu0 0.0
    %704 = vmatprep.subr.mxu0 0.0
    %705 = vmatpush1.xpose.msra.mxu0 0.0
    %706 = vmatprep.subr.mxu0 0.0
    %707 = vmatpush1.xpose.msra.mxu0 0.0
    %708 = vmatprep.subr.mxu0 0.0
    %709 = vmatpush1.xpose.msra.mxu0 0.0
    %710 = vmatprep.subr.mxu0 0.0
    %711 = vmatpush1.xpose.msra.mxu0 0.0
    %712 = vmatprep.subr.mxu0 0.0
    %713 = vmatpush1.xpose.msra.mxu0 0.0
    %714 = vmatprep.mubr.f32.mxu0 0.0
    %715 = vmatmul.mubr.f32.gmra.mrb[0].mxu0 %v648
    %v716 = vpop.f32.mrb[0].mxu0
    %v717 = vadd.f32 %v312, %v716
    %v718 = vpop.f32.mrb[0].mxu0
    %719 = vdwg.mxu0
    %v722 = vrot.slane %v639, 7
    %v723 = vrot.slane %v640, 6
    %v724 = vsel %vm644, %v723, %v722
    %725 = vrot.lane.b32.xlu0 %v724, 96
    %v726 = vpop.permute.xlu0 %725
    %v727 = vsel %vm37, %v726, 0
    %729 = vmatprep.subr.mxu0 0.0
    %730 = vmatpush1.xpose.msra.mxu0 %v427
    %731 = vmatprep.subr.mxu0 0.0
    %732 = vmatpush1.xpose.msra.mxu0 %v430
    %733 = vmatprep.subr.mxu0 0.0
    %734 = vmatpush1.xpose.msra.mxu0 %v433
    %735 = vmatprep.subr.mxu0 0.0
    %736 = vmatpush1.xpose.msra.mxu0 %v436
    %737 = vmatprep.subr.mxu0 0.0
    %738 = vmatpush1.xpose.msra.mxu0 %v439
    %739 = vmatprep.subr.mxu0 0.0
    %740 = vmatpush1.xpose.msra.mxu0 %v442
    %741 = vmatprep.subr.mxu0 0.0
    %742 = vmatpush1.xpose.msra.mxu0 %v445
    %743 = vmatprep.subr.mxu0 0.0
    %744 = vmatpush1.xpose.msra.mxu0 %v448
    %745 = vmatprep.subr.mxu0 0.0
    %746 = vmatpush1.xpose.msra.mxu0 %v451
    %747 = vmatprep.subr.mxu0 0.0
    %748 = vmatpush1.xpose.msra.mxu0 %v454
    %749 = vmatprep.subr.mxu0 0.0
    %750 = vmatpush1.xpose.msra.mxu0 %v457
    %751 = vmatprep.subr.mxu0 0.0
    %752 = vmatpush1.xpose.msra.mxu0 %v460
    %753 = vmatprep.subr.mxu0 0.0
    %754 = vmatpush1.xpose.msra.mxu0 0.0
    %755 = vmatprep.subr.mxu0 0.0
    %756 = vmatpush1.xpose.msra.mxu0 0.0
    %757 = vmatprep.subr.mxu0 0.0
    %758 = vmatpush1.xpose.msra.mxu0 0.0
    %759 = vmatprep.subr.mxu0 0.0
    %760 = vmatpush1.xpose.msra.mxu0 0.0
    %761 = vmatprep.subr.mxu0 0.0
    %762 = vmatpush1.xpose.msra.mxu0 0.0
    %763 = vmatprep.subr.mxu0 0.0
    %764 = vmatpush1.xpose.msra.mxu0 0.0
    %765 = vmatprep.subr.mxu0 0.0
    %766 = vmatpush1.xpose.msra.mxu0 0.0
    %767 = vmatprep.subr.mxu0 0.0
    %768 = vmatpush1.xpose.msra.mxu0 0.0
    %769 = vmatprep.subr.mxu0 0.0
    %770 = vmatpush1.xpose.msra.mxu0 0.0
    %771 = vmatprep.subr.mxu0 0.0
    %772 = vmatpush1.xpose.msra.mxu0 0.0
    %773 = vmatprep.subr.mxu0 0.0
    %774 = vmatpush1.xpose.msra.mxu0 0.0
    %775 = vmatprep.subr.mxu0 0.0
    %776 = vmatpush1.xpose.msra.mxu0 0.0
    %777 = vmatprep.subr.mxu0 0.0
    %778 = vmatpush1.xpose.msra.mxu0 0.0
    %779 = vmatprep.subr.mxu0 0.0
    %780 = vmatpush1.xpose.msra.mxu0 0.0
    %781 = vmatprep.subr.mxu0 0.0
    %782 = vmatpush1.xpose.msra.mxu0 0.0
    %783 = vmatprep.subr.mxu0 0.0
    %784 = vmatpush1.xpose.msra.mxu0 0.0
    %785 = vmatprep.subr.mxu0 0.0
    %786 = vmatpush1.xpose.msra.mxu0 0.0
    %787 = vmatprep.subr.mxu0 0.0
    %788 = vmatpush1.xpose.msra.mxu0 0.0
    %789 = vmatprep.subr.mxu0 0.0
    %790 = vmatpush1.xpose.msra.mxu0 0.0
    %791 = vmatprep.subr.mxu0 0.0
    %792 = vmatpush1.xpose.msra.mxu0 0.0
    %793 = vmatprep.mubr.f32.mxu0 0.0
    %794 = vmatmul.mubr.f32.gmra.mrb[0].mxu0 %v727
    %v795 = vpop.f32.mrb[0].mxu0
    %v796 = vadd.f32 %v425, %v795
    %v797 = vpop.f32.mrb[0].mxu0
    %798 = vdwg.mxu0
    %v800 = vrot.slane %v717, 7
    %v803 = vadd.f32 %v147, %v800
    %v804 = vadd.f32 %v152, %v717
    %v805 = vxor.u32 %v803, 2147483648
    %v806 = vxor.u32 %v804, 2147483648
    %v807 = vmul.f32 %v805, 1.442695
    %v808 = vpow.pop %v807
    %v809 = vmul.f32 %v806, 1.442695
    %v810 = vpow.pop %v809
    %v811 = vadd.f32 %v808, 1.0
    %v812 = vadd.f32 %v810, 1.0
    %v813 = vrcp.pop %v811
    %v814 = vmul.f32 1.0, %v813
    %v815 = vrcp.pop %v812
    %v816 = vmul.f32 1.0, %v815
    %817 = vrot.lane.b32.xlu0 %v800, 64
    %v818 = vpop.permute.xlu0 %817
    %819 = vrot.lane.b32.xlu0 %v717, 64
    %v820 = vpop.permute.xlu0 %819
    %v823 = vmul.f32 %v814, %v818
    %v824 = vmul.f32 %v816, %v820
    %827 = vrot.lane.b32.xlu0 %v823, 64
    %v828 = vpop.permute.xlu0 %827
    %829 = vrot.lane.b32.xlu0 %v824, 64
    %v830 = vpop.permute.xlu0 %829
    %v833 = vadd.f32 %v147, %v828
    %v834 = vadd.f32 %v152, %v830
    %v835 = vtanh.pop %v833
    %v836 = vtanh.pop %v834
    %v837 = vsub.f32 1.0, %v814
    %v838 = vsub.f32 1.0, %v816
    %841 = vrot.lane.b32.xlu0 %v835, 96
    %v842 = vpop.permute.xlu0 %841
    %843 = vrot.lane.b32.xlu0 %v836, 96
    %v844 = vpop.permute.xlu0 %843
    %v847 = vmul.f32 %v837, %v842
    %v848 = vmul.f32 %v838, %v844
    %v849 = vrot.slane %v584, 7
    %v852 = vmul.f32 %v814, %v849
    %v853 = vmul.f32 %v816, %v643
    %v854 = vadd.f32 %v847, %v852
    %v855 = vadd.f32 %v848, %v853
    %v857 = vrot.slane %v796, 2
    %v858 = vrot.slane %v796, 3
    %v861 = vadd.f32 %v275, %v857
    %v862 = vadd.f32 %v280, %v858
    %v863 = vxor.u32 %v861, 2147483648
    %v864 = vxor.u32 %v862, 2147483648
    %v865 = vmul.f32 %v863, 1.442695
    %v866 = vpow.pop %v865
    %v867 = vmul.f32 %v864, 1.442695
    %v868 = vpow.pop %v867
    %v869 = vadd.f32 %v866, 1.0
    %v870 = vadd.f32 %v868, 1.0
    %v871 = vrcp.pop %v869
    %v872 = vmul.f32 1.0, %v871
    %v873 = vrcp.pop %v870
    %v874 = vmul.f32 1.0, %v873
    %875 = vrot.lane.b32.xlu0 %v857, 64
    %v876 = vpop.permute.xlu0 %875
    %877 = vrot.lane.b32.xlu0 %v858, 64
    %v878 = vpop.permute.xlu0 %877
    %v881 = vmul.f32 %v872, %v876
    %v882 = vmul.f32 %v874, %v878
    %885 = vrot.lane.b32.xlu0 %v881, 64
    %v886 = vpop.permute.xlu0 %885
    %887 = vrot.lane.b32.xlu0 %v882, 64
    %v888 = vpop.permute.xlu0 %887
    %v891 = vadd.f32 %v275, %v886
    %v892 = vadd.f32 %v280, %v888
    %v893 = vtanh.pop %v891
    %v894 = vtanh.pop %v892
    %v895 = vsub.f32 1.0, %v872
    %v896 = vsub.f32 1.0, %v874
    %899 = vrot.lane.b32.xlu0 %v893, 96
    %v900 = vpop.permute.xlu0 %899
    %901 = vrot.lane.b32.xlu0 %v894, 96
    %v902 = vpop.permute.xlu0 %901
    %v905 = vmul.f32 %v895, %v900
    %v906 = vmul.f32 %v896, %v902
    %v907 = vrot.slane %v639, 1
    %v908 = vrot.slane %v640, 1
    %v911 = vmul.f32 %v872, %v907
    %v912 = vmul.f32 %v874, %v908
    %v913 = vadd.f32 %v905, %v911
    %v914 = vadd.f32 %v906, %v912
    %v917 = vrot.slane %v854, 1
    %v918 = vsel %vm644, %v855, %v917
    %919 = vrot.lane.b32.xlu0 %v918, 96
    %v920 = vpop.permute.xlu0 %919
    %v921 = vsel %vm37, %v920, 0
    %923 = vmatprep.subr.mxu0 0.0
    %924 = vmatpush1.xpose.msra.mxu0 %v317
    %925 = vmatprep.subr.mxu0 0.0
    %926 = vmatpush1.xpose.msra.mxu0 %v320
    %927 = vmatprep.subr.mxu0 0.0
    %928 = vmatpush1.xpose.msra.mxu0 %v323
    %929 = vmatprep.subr.mxu0 0.0
    %930 = vmatpush1.xpose.msra.mxu0 %v326
    %931 = vmatprep.subr.mxu0 0.0
    %932 = vmatpush1.xpose.msra.mxu0 %v329
    %933 = vmatprep.subr.mxu0 0.0
    %934 = vmatpush1.xpose.msra.mxu0 %v332
    %935 = vmatprep.subr.mxu0 0.0
    %936 = vmatpush1.xpose.msra.mxu0 %v335
    %937 = vmatprep.subr.mxu0 0.0
    %938 = vmatpush1.xpose.msra.mxu0 %v338
    %939 = vmatprep.subr.mxu0 0.0
    %940 = vmatpush1.xpose.msra.mxu0 %v341
    %941 = vmatprep.subr.mxu0 0.0
    %942 = vmatpush1.xpose.msra.mxu0 %v344
    %943 = vmatprep.subr.mxu0 0.0
    %944 = vmatpush1.xpose.msra.mxu0 %v347
    %945 = vmatprep.subr.mxu0 0.0
    %946 = vmatpush1.xpose.msra.mxu0 %v350
    %947 = vmatprep.subr.mxu0 0.0
    %948 = vmatpush1.xpose.msra.mxu0 0.0
    %949 = vmatprep.subr.mxu0 0.0
    %950 = vmatpush1.xpose.msra.mxu0 0.0
    %951 = vmatprep.subr.mxu0 0.0
    %952 = vmatpush1.xpose.msra.mxu0 0.0
    %953 = vmatprep.subr.mxu0 0.0
    %954 = vmatpush1.xpose.msra.mxu0 0.0
    %955 = vmatprep.subr.mxu0 0.0
    %956 = vmatpush1.xpose.msra.mxu0 0.0
    %957 = vmatprep.subr.mxu0 0.0
    %958 = vmatpush1.xpose.msra.mxu0 0.0
    %959 = vmatprep.subr.mxu0 0.0
    %960 = vmatpush1.xpose.msra.mxu0 0.0
    %961 = vmatprep.subr.mxu0 0.0
    %962 = vmatpush1.xpose.msra.mxu0 0.0
    %963 = vmatprep.subr.mxu0 0.0
    %964 = vmatpush1.xpose.msra.mxu0 0.0
    %965 = vmatprep.subr.mxu0 0.0
    %966 = vmatpush1.xpose.msra.mxu0 0.0
    %967 = vmatprep.subr.mxu0 0.0
    %968 = vmatpush1.xpose.msra.mxu0 0.0
    %969 = vmatprep.subr.mxu0 0.0
    %970 = vmatpush1.xpose.msra.mxu0 0.0
    %971 = vmatprep.subr.mxu0 0.0
    %972 = vmatpush1.xpose.msra.mxu0 0.0
    %973 = vmatprep.subr.mxu0 0.0
    %974 = vmatpush1.xpose.msra.mxu0 0.0
    %975 = vmatprep.subr.mxu0 0.0
    %976 = vmatpush1.xpose.msra.mxu0 0.0
    %977 = vmatprep.subr.mxu0 0.0
    %978 = vmatpush1.xpose.msra.mxu0 0.0
    %979 = vmatprep.subr.mxu0 0.0
    %980 = vmatpush1.xpose.msra.mxu0 0.0
    %981 = vmatprep.subr.mxu0 0.0
    %982 = vmatpush1.xpose.msra.mxu0 0.0
    %983 = vmatprep.subr.mxu0 0.0
    %984 = vmatpush1.xpose.msra.mxu0 0.0
    %985 = vmatprep.subr.mxu0 0.0
    %986 = vmatpush1.xpose.msra.mxu0 0.0
    %987 = vmatprep.mubr.f32.mxu0 0.0
    %988 = vmatmul.mubr.f32.gmra.mrb[0].mxu0 %v921
    %v989 = vpop.f32.mrb[0].mxu0
    %v990 = vadd.f32 %v312, %v989
    %v991 = vpop.f32.mrb[0].mxu0
    %992 = vdwg.mxu0
    %v995 = vrot.slane %v913, 6
    %v996 = vrot.slane %v914, 5
    %v997 = vsel %vm644, %v996, %v995
    %998 = vrot.lane.b32.xlu0 %v997, 96
    %v999 = vpop.permute.xlu0 %998
    %v1000 = vsel %vm37, %v999, 0
    %1002 = vmatprep.subr.mxu0 0.0
    %1003 = vmatpush1.xpose.msra.mxu0 %v427
    %1004 = vmatprep.subr.mxu0 0.0
    %1005 = vmatpush1.xpose.msra.mxu0 %v430
    %1006 = vmatprep.subr.mxu0 0.0
    %1007 = vmatpush1.xpose.msra.mxu0 %v433
    %1008 = vmatprep.subr.mxu0 0.0
    %1009 = vmatpush1.xpose.msra.mxu0 %v436
    %1010 = vmatprep.subr.mxu0 0.0
    %1011 = vmatpush1.xpose.msra.mxu0 %v439
    %1012 = vmatprep.subr.mxu0 0.0
    %1013 = vmatpush1.xpose.msra.mxu0 %v442
    %1014 = vmatprep.subr.mxu0 0.0
    %1015 = vmatpush1.xpose.msra.mxu0 %v445
    %1016 = vmatprep.subr.mxu0 0.0
    %1017 = vmatpush1.xpose.msra.mxu0 %v448
    %1018 = vmatprep.subr.mxu0 0.0
    %1019 = vmatpush1.xpose.msra.mxu0 %v451
    %1020 = vmatprep.subr.mxu0 0.0
    %1021 = vmatpush1.xpose.msra.mxu0 %v454
    %1022 = vmatprep.subr.mxu0 0.0
    %1023 = vmatpush1.xpose.msra.mxu0 %v457
    %1024 = vmatprep.subr.mxu0 0.0
    %1025 = vmatpush1.xpose.msra.mxu0 %v460
    %1026 = vmatprep.subr.mxu0 0.0
    %1027 = vmatpush1.xpose.msra.mxu0 0.0
    %1028 = vmatprep.subr.mxu0 0.0
    %1029 = vmatpush1.xpose.msra.mxu0 0.0
    %1030 = vmatprep.subr.mxu0 0.0
    %1031 = vmatpush1.xpose.msra.mxu0 0.0
    %1032 = vmatprep.subr.mxu0 0.0
    %1033 = vmatpush1.xpose.msra.mxu0 0.0
    %1034 = vmatprep.subr.mxu0 0.0
    %1035 = vmatpush1.xpose.msra.mxu0 0.0
    %1036 = vmatprep.subr.mxu0 0.0
    %1037 = vmatpush1.xpose.msra.mxu0 0.0
    %1038 = vmatprep.subr.mxu0 0.0
    %1039 = vmatpush1.xpose.msra.mxu0 0.0
    %1040 = vmatprep.subr.mxu0 0.0
    %1041 = vmatpush1.xpose.msra.mxu0 0.0
    %1042 = vmatprep.subr.mxu0 0.0
    %1043 = vmatpush1.xpose.msra.mxu0 0.0
    %1044 = vmatprep.subr.mxu0 0.0
    %1045 = vmatpush1.xpose.msra.mxu0 0.0
    %1046 = vmatprep.subr.mxu0 0.0
    %1047 = vmatpush1.xpose.msra.mxu0 0.0
    %1048 = vmatprep.subr.mxu0 0.0
    %1049 = vmatpush1.xpose.msra.mxu0 0.0
    %1050 = vmatprep.subr.mxu0 0.0
    %1051 = vmatpush1.xpose.msra.mxu0 0.0
    %1052 = vmatprep.subr.mxu0 0.0
    %1053 = vmatpush1.xpose.msra.mxu0 0.0
    %1054 = vmatprep.subr.mxu0 0.0
    %1055 = vmatpush1.xpose.msra.mxu0 0.0
    %1056 = vmatprep.subr.mxu0 0.0
    %1057 = vmatpush1.xpose.msra.mxu0 0.0
    %1058 = vmatprep.subr.mxu0 0.0
    %1059 = vmatpush1.xpose.msra.mxu0 0.0
    %1060 = vmatprep.subr.mxu0 0.0
    %1061 = vmatpush1.xpose.msra.mxu0 0.0
    %1062 = vmatprep.subr.mxu0 0.0
    %1063 = vmatpush1.xpose.msra.mxu0 0.0
    %1064 = vmatprep.subr.mxu0 0.0
    %1065 = vmatpush1.xpose.msra.mxu0 0.0
    %1066 = vmatprep.mubr.f32.mxu0 0.0
    %1067 = vmatmul.mubr.f32.gmra.mrb[0].mxu0 %v1000
    %v1068 = vpop.f32.mrb[0].mxu0
    %v1069 = vadd.f32 %v425, %v1068
    %v1070 = vpop.f32.mrb[0].mxu0
    %1071 = vdwg.mxu0
    %v1073 = vrot.slane %v990, 6
    %v1074 = vrot.slane %v990, 7
    %v1077 = vadd.f32 %v147, %v1073
    %v1078 = vadd.f32 %v152, %v1074
    %v1079 = vxor.u32 %v1077, 2147483648
    %v1080 = vxor.u32 %v1078, 2147483648
    %v1081 = vmul.f32 %v1079, 1.442695
    %v1082 = vpow.pop %v1081
    %v1083 = vmul.f32 %v1080, 1.442695
    %v1084 = vpow.pop %v1083
    %v1085 = vadd.f32 %v1082, 1.0
    %v1086 = vadd.f32 %v1084, 1.0
    %v1087 = vrcp.pop %v1085
    %v1088 = vmul.f32 1.0, %v1087
    %v1089 = vrcp.pop %v1086
    %v1090 = vmul.f32 1.0, %v1089
    %1091 = vrot.lane.b32.xlu0 %v1073, 64
    %v1092 = vpop.permute.xlu0 %1091
    %1093 = vrot.lane.b32.xlu0 %v1074, 64
    %v1094 = vpop.permute.xlu0 %1093
    %v1097 = vmul.f32 %v1088, %v1092
    %v1098 = vmul.f32 %v1090, %v1094
    %1101 = vrot.lane.b32.xlu0 %v1097, 64
    %v1102 = vpop.permute.xlu0 %1101
    %1103 = vrot.lane.b32.xlu0 %v1098, 64
    %v1104 = vpop.permute.xlu0 %1103
    %v1107 = vadd.f32 %v147, %v1102
    %v1108 = vadd.f32 %v152, %v1104
    %v1109 = vtanh.pop %v1107
    %v1110 = vtanh.pop %v1108
    %v1111 = vsub.f32 1.0, %v1088
    %v1112 = vsub.f32 1.0, %v1090
    %1115 = vrot.lane.b32.xlu0 %v1109, 96
    %v1116 = vpop.permute.xlu0 %1115
    %1117 = vrot.lane.b32.xlu0 %v1110, 96
    %v1118 = vpop.permute.xlu0 %1117
    %v1121 = vmul.f32 %v1111, %v1116
    %v1122 = vmul.f32 %v1112, %v1118
    %v1123 = vrot.slane %v854, 7
    %v1124 = vrot.slane %v855, 7
    %v1127 = vmul.f32 %v1088, %v1123
    %v1128 = vmul.f32 %v1090, %v1124
    %v1129 = vadd.f32 %v1121, %v1127
    %v1130 = vadd.f32 %v1122, %v1128
    %v1132 = vrot.slane %v1069, 3
    %v1133 = vrot.slane %v1069, 4
    %v1136 = vadd.f32 %v275, %v1132
    %v1137 = vadd.f32 %v280, %v1133
    %v1138 = vxor.u32 %v1136, 2147483648
    %v1139 = vxor.u32 %v1137, 2147483648
    %v1140 = vmul.f32 %v1138, 1.442695
    %v1141 = vpow.pop %v1140
    %v1142 = vmul.f32 %v1139, 1.442695
    %v1143 = vpow.pop %v1142
    %v1144 = vadd.f32 %v1141, 1.0
    %v1145 = vadd.f32 %v1143, 1.0
    %v1146 = vrcp.pop %v1144
    %v1147 = vmul.f32 1.0, %v1146
    %v1148 = vrcp.pop %v1145
    %v1149 = vmul.f32 1.0, %v1148
    %1150 = vrot.lane.b32.xlu0 %v1132, 64
    %v1151 = vpop.permute.xlu0 %1150
    %1152 = vrot.lane.b32.xlu0 %v1133, 64
    %v1153 = vpop.permute.xlu0 %1152
    %v1156 = vmul.f32 %v1147, %v1151
    %v1157 = vmul.f32 %v1149, %v1153
    %1160 = vrot.lane.b32.xlu0 %v1156, 64
    %v1161 = vpop.permute.xlu0 %1160
    %1162 = vrot.lane.b32.xlu0 %v1157, 64
    %v1163 = vpop.permute.xlu0 %1162
    %v1166 = vadd.f32 %v275, %v1161
    %v1167 = vadd.f32 %v280, %v1163
    %v1168 = vtanh.pop %v1166
    %v1169 = vtanh.pop %v1167
    %v1170 = vsub.f32 1.0, %v1147
    %v1171 = vsub.f32 1.0, %v1149
    %1174 = vrot.lane.b32.xlu0 %v1168, 96
    %v1175 = vpop.permute.xlu0 %1174
    %1176 = vrot.lane.b32.xlu0 %v1169, 96
    %v1177 = vpop.permute.xlu0 %1176
    %v1180 = vmul.f32 %v1170, %v1175
    %v1181 = vmul.f32 %v1171, %v1177
    %v1182 = vrot.slane %v913, 1
    %v1183 = vrot.slane %v914, 1
    %v1186 = vmul.f32 %v1147, %v1182
    %v1187 = vmul.f32 %v1149, %v1183
    %v1188 = vadd.f32 %v1180, %v1186
    %v1189 = vadd.f32 %v1181, %v1187
    %v1192 = vrot.slane %v1129, 2
    %v1193 = vrot.slane %v1130, 1
    %v1194 = vsel %vm644, %v1193, %v1192
    %1195 = vrot.lane.b32.xlu0 %v1194, 96
    %v1196 = vpop.permute.xlu0 %1195
    %v1197 = vsel %vm37, %v1196, 0
    %1199 = vmatprep.subr.mxu0 0.0
    %1200 = vmatpush1.xpose.msra.mxu0 %v317
    %1201 = vmatprep.subr.mxu0 0.0
    %1202 = vmatpush1.xpose.msra.mxu0 %v320
    %1203 = vmatprep.subr.mxu0 0.0
    %1204 = vmatpush1.xpose.msra.mxu0 %v323
    %1205 = vmatprep.subr.mxu0 0.0
    %1206 = vmatpush1.xpose.msra.mxu0 %v326
    %1207 = vmatprep.subr.mxu0 0.0
    %1208 = vmatpush1.xpose.msra.mxu0 %v329
    %1209 = vmatprep.subr.mxu0 0.0
    %1210 = vmatpush1.xpose.msra.mxu0 %v332
    %1211 = vmatprep.subr.mxu0 0.0
    %1212 = vmatpush1.xpose.msra.mxu0 %v335
    %1213 = vmatprep.subr.mxu0 0.0
    %1214 = vmatpush1.xpose.msra.mxu0 %v338
    %1215 = vmatprep.subr.mxu0 0.0
    %1216 = vmatpush1.xpose.msra.mxu0 %v341
    %1217 = vmatprep.subr.mxu0 0.0
    %1218 = vmatpush1.xpose.msra.mxu0 %v344
    %1219 = vmatprep.subr.mxu0 0.0
    %1220 = vmatpush1.xpose.msra.mxu0 %v347
    %1221 = vmatprep.subr.mxu0 0.0
    %1222 = vmatpush1.xpose.msra.mxu0 %v350
    %1223 = vmatprep.subr.mxu0 0.0
    %1224 = vmatpush1.xpose.msra.mxu0 0.0
    %1225 = vmatprep.subr.mxu0 0.0
    %1226 = vmatpush1.xpose.msra.mxu0 0.0
    %1227 = vmatprep.subr.mxu0 0.0
    %1228 = vmatpush1.xpose.msra.mxu0 0.0
    %1229 = vmatprep.subr.mxu0 0.0
    %1230 = vmatpush1.xpose.msra.mxu0 0.0
    %1231 = vmatprep.subr.mxu0 0.0
    %1232 = vmatpush1.xpose.msra.mxu0 0.0
    %1233 = vmatprep.subr.mxu0 0.0
    %1234 = vmatpush1.xpose.msra.mxu0 0.0
    %1235 = vmatprep.subr.mxu0 0.0
    %1236 = vmatpush1.xpose.msra.mxu0 0.0
    %1237 = vmatprep.subr.mxu0 0.0
    %1238 = vmatpush1.xpose.msra.mxu0 0.0
    %1239 = vmatprep.subr.mxu0 0.0
    %1240 = vmatpush1.xpose.msra.mxu0 0.0
    %1241 = vmatprep.subr.mxu0 0.0
    %1242 = vmatpush1.xpose.msra.mxu0 0.0
    %1243 = vmatprep.subr.mxu0 0.0
    %1244 = vmatpush1.xpose.msra.mxu0 0.0
    %1245 = vmatprep.subr.mxu0 0.0
    %1246 = vmatpush1.xpose.msra.mxu0 0.0
    %1247 = vmatprep.subr.mxu0 0.0
    %1248 = vmatpush1.xpose.msra.mxu0 0.0
    %1249 = vmatprep.subr.mxu0 0.0
    %1250 = vmatpush1.xpose.msra.mxu0 0.0
    %1251 = vmatprep.subr.mxu0 0.0
    %1252 = vmatpush1.xpose.msra.mxu0 0.0
    %1253 = vmatprep.subr.mxu0 0.0
    %1254 = vmatpush1.xpose.msra.mxu0 0.0
    %1255 = vmatprep.subr.mxu0 0.0
    %1256 = vmatpush1.xpose.msra.mxu0 0.0
    %1257 = vmatprep.subr.mxu0 0.0
    %1258 = vmatpush1.xpose.msra.mxu0 0.0
    %1259 = vmatprep.subr.mxu0 0.0
    %1260 = vmatpush1.xpose.msra.mxu0 0.0
    %1261 = vmatprep.subr.mxu0 0.0
    %1262 = vmatpush1.xpose.msra.mxu0 0.0
    %1263 = vmatprep.mubr.f32.mxu0 0.0
    %1264 = vmatmul.mubr.f32.gmra.mrb[0].mxu0 %v1197
    %v1265 = vpop.f32.mrb[0].mxu0
    %v1266 = vadd.f32 %v312, %v1265
    %v1267 = vpop.f32.mrb[0].mxu0
    %1268 = vdwg.mxu0
    %v1271 = vrot.slane %v1188, 5
    %v1272 = vrot.slane %v1189, 4
    %v1273 = vsel %vm644, %v1272, %v1271
    %1274 = vrot.lane.b32.xlu0 %v1273, 96
    %v1275 = vpop.permute.xlu0 %1274
    %v1276 = vsel %vm37, %v1275, 0
    %1278 = vmatprep.subr.mxu0 0.0
    %1279 = vmatpush1.xpose.msra.mxu0 %v427
    %1280 = vmatprep.subr.mxu0 0.0
    %1281 = vmatpush1.xpose.msra.mxu0 %v430
    %1282 = vmatprep.subr.mxu0 0.0
    %1283 = vmatpush1.xpose.msra.mxu0 %v433
    %1284 = vmatprep.subr.mxu0 0.0
    %1285 = vmatpush1.xpose.msra.mxu0 %v436
    %1286 = vmatprep.subr.mxu0 0.0
    %1287 = vmatpush1.xpose.msra.mxu0 %v439
    %1288 = vmatprep.subr.mxu0 0.0
    %1289 = vmatpush1.xpose.msra.mxu0 %v442
    %1290 = vmatprep.subr.mxu0 0.0
    %1291 = vmatpush1.xpose.msra.mxu0 %v445
    %1292 = vmatprep.subr.mxu0 0.0
    %1293 = vmatpush1.xpose.msra.mxu0 %v448
    %1294 = vmatprep.subr.mxu0 0.0
    %1295 = vmatpush1.xpose.msra.mxu0 %v451
    %1296 = vmatprep.subr.mxu0 0.0
    %1297 = vmatpush1.xpose.msra.mxu0 %v454
    %1298 = vmatprep.subr.mxu0 0.0
    %1299 = vmatpush1.xpose.msra.mxu0 %v457
    %1300 = vmatprep.subr.mxu0 0.0
    %1301 = vmatpush1.xpose.msra.mxu0 %v460
    %1302 = vmatprep.subr.mxu0 0.0
    %1303 = vmatpush1.xpose.msra.mxu0 0.0
    %1304 = vmatprep.subr.mxu0 0.0
    %1305 = vmatpush1.xpose.msra.mxu0 0.0
    %1306 = vmatprep.subr.mxu0 0.0
    %1307 = vmatpush1.xpose.msra.mxu0 0.0
    %1308 = vmatprep.subr.mxu0 0.0
    %1309 = vmatpush1.xpose.msra.mxu0 0.0
    %1310 = vmatprep.subr.mxu0 0.0
    %1311 = vmatpush1.xpose.msra.mxu0 0.0
    %1312 = vmatprep.subr.mxu0 0.0
    %1313 = vmatpush1.xpose.msra.mxu0 0.0
    %1314 = vmatprep.subr.mxu0 0.0
    %1315 = vmatpush1.xpose.msra.mxu0 0.0
    %1316 = vmatprep.subr.mxu0 0.0
    %1317 = vmatpush1.xpose.msra.mxu0 0.0
    %1318 = vmatprep.subr.mxu0 0.0
    %1319 = vmatpush1.xpose.msra.mxu0 0.0
    %1320 = vmatprep.subr.mxu0 0.0
    %1321 = vmatpush1.xpose.msra.mxu0 0.0
    %1322 = vmatprep.subr.mxu0 0.0
    %1323 = vmatpush1.xpose.msra.mxu0 0.0
    %1324 = vmatprep.subr.mxu0 0.0
    %1325 = vmatpush1.xpose.msra.mxu0 0.0
    %1326 = vmatprep.subr.mxu0 0.0
    %1327 = vmatpush1.xpose.msra.mxu0 0.0
    %1328 = vmatprep.subr.mxu0 0.0
    %1329 = vmatpush1.xpose.msra.mxu0 0.0
    %1330 = vmatprep.subr.mxu0 0.0
    %1331 = vmatpush1.xpose.msra.mxu0 0.0
    %1332 = vmatprep.subr.mxu0 0.0
    %1333 = vmatpush1.xpose.msra.mxu0 0.0
    %1334 = vmatprep.subr.mxu0 0.0
    %1335 = vmatpush1.xpose.msra.mxu0 0.0
    %1336 = vmatprep.subr.mxu0 0.0
    %1337 = vmatpush1.xpose.msra.mxu0 0.0
    %1338 = vmatprep.subr.mxu0 0.0
    %1339 = vmatpush1.xpose.msra.mxu0 0.0
    %1340 = vmatprep.subr.mxu0 0.0
    %1341 = vmatpush1.xpose.msra.mxu0 0.0
    %1342 = vmatprep.mubr.f32.mxu0 0.0
    %1343 = vmatmul.mubr.f32.gmra.mrb[0].mxu0 %v1276
    %v1344 = vpop.f32.mrb[0].mxu0
    %v1345 = vadd.f32 %v425, %v1344
    %v1346 = vpop.f32.mrb[0].mxu0
    %1347 = vdwg.mxu0
    %v1349 = vrot.slane %v1266, 5
    %v1350 = vrot.slane %v1266, 6
    %v1353 = vadd.f32 %v147, %v1349
    %v1354 = vadd.f32 %v152, %v1350
    %v1355 = vxor.u32 %v1353, 2147483648
    %v1356 = vxor.u32 %v1354, 2147483648
    %v1357 = vmul.f32 %v1355, 1.442695
    %v1358 = vpow.pop %v1357
    %v1359 = vmul.f32 %v1356, 1.442695
    %v1360 = vpow.pop %v1359
    %v1361 = vadd.f32 %v1358, 1.0
    %v1362 = vadd.f32 %v1360, 1.0
    %v1363 = vrcp.pop %v1361
    %v1364 = vmul.f32 1.0, %v1363
    %v1365 = vrcp.pop %v1362
    %v1366 = vmul.f32 1.0, %v1365
    %1367 = vrot.lane.b32.xlu0 %v1349, 64
    %v1368 = vpop.permute.xlu0 %1367
    %1369 = vrot.lane.b32.xlu0 %v1350, 64
    %v1370 = vpop.permute.xlu0 %1369
    %v1373 = vmul.f32 %v1364, %v1368
    %v1374 = vmul.f32 %v1366, %v1370
    %1377 = vrot.lane.b32.xlu0 %v1373, 64
    %v1378 = vpop.permute.xlu0 %1377
    %1379 = vrot.lane.b32.xlu0 %v1374, 64
    %v1380 = vpop.permute.xlu0 %1379
    %v1383 = vadd.f32 %v147, %v1378
    %v1384 = vadd.f32 %v152, %v1380
    %v1385 = vtanh.pop %v1383
    %v1386 = vtanh.pop %v1384
    %v1387 = vsub.f32 1.0, %v1364
    %v1388 = vsub.f32 1.0, %v1366
    %1391 = vrot.lane.b32.xlu0 %v1385, 96
    %v1392 = vpop.permute.xlu0 %1391
    %1393 = vrot.lane.b32.xlu0 %v1386, 96
    %v1394 = vpop.permute.xlu0 %1393
    %v1397 = vmul.f32 %v1387, %v1392
    %v1398 = vmul.f32 %v1388, %v1394
    %v1399 = vrot.slane %v1129, 7
    %v1400 = vrot.slane %v1130, 7
    %v1403 = vmul.f32 %v1364, %v1399
    %v1404 = vmul.f32 %v1366, %v1400
    %v1405 = vadd.f32 %v1397, %v1403
    %v1406 = vadd.f32 %v1398, %v1404
    %v1408 = vrot.slane %v1345, 4
    %v1409 = vrot.slane %v1345, 5
    %v1412 = vadd.f32 %v275, %v1408
    %v1413 = vadd.f32 %v280, %v1409
    %v1414 = vxor.u32 %v1412, 2147483648
    %v1415 = vxor.u32 %v1413, 2147483648
    %v1416 = vmul.f32 %v1414, 1.442695
    %v1417 = vpow.pop %v1416
    %v1418 = vmul.f32 %v1415, 1.442695
    %v1419 = vpow.pop %v1418
    %v1420 = vadd.f32 %v1417, 1.0
    %v1421 = vadd.f32 %v1419, 1.0
    %v1422 = vrcp.pop %v1420
    %v1423 = vmul.f32 1.0, %v1422
    %v1424 = vrcp.pop %v1421
    %v1425 = vmul.f32 1.0, %v1424
    %1426 = vrot.lane.b32.xlu0 %v1408, 64
    %v1427 = vpop.permute.xlu0 %1426
    %1428 = vrot.lane.b32.xlu0 %v1409, 64
    %v1429 = vpop.permute.xlu0 %1428
    %v1432 = vmul.f32 %v1423, %v1427
    %v1433 = vmul.f32 %v1425, %v1429
    %1436 = vrot.lane.b32.xlu0 %v1432, 64
    %v1437 = vpop.permute.xlu0 %1436
    %1438 = vrot.lane.b32.xlu0 %v1433, 64
    %v1439 = vpop.permute.xlu0 %1438
    %v1442 = vadd.f32 %v275, %v1437
    %v1443 = vadd.f32 %v280, %v1439
    %v1444 = vtanh.pop %v1442
    %v1445 = vtanh.pop %v1443
    %v1446 = vsub.f32 1.0, %v1423
    %v1447 = vsub.f32 1.0, %v1425
    %1450 = vrot.lane.b32.xlu0 %v1444, 96
    %v1451 = vpop.permute.xlu0 %1450
    %1452 = vrot.lane.b32.xlu0 %v1445, 96
    %v1453 = vpop.permute.xlu0 %1452
    %v1456 = vmul.f32 %v1446, %v1451
    %v1457 = vmul.f32 %v1447, %v1453
    %v1458 = vrot.slane %v1188, 1
    %v1459 = vrot.slane %v1189, 1
    %v1462 = vmul.f32 %v1423, %v1458
    %v1463 = vmul.f32 %v1425, %v1459
    %v1464 = vadd.f32 %v1456, %v1462
    %v1465 = vadd.f32 %v1457, %v1463
    %v1468 = vrot.slane %v1405, 3
    %v1469 = vrot.slane %v1406, 2
    %v1470 = vsel %vm644, %v1469, %v1468
    %1471 = vrot.lane.b32.xlu0 %v1470, 96
    %v1472 = vpop.permute.xlu0 %1471
    %v1473 = vsel %vm37, %v1472, 0
    %1475 = vmatprep.subr.mxu0 0.0
    %1476 = vmatpush1.xpose.msra.mxu0 %v317
    %1477 = vmatprep.subr.mxu0 0.0
    %1478 = vmatpush1.xpose.msra.mxu0 %v320
    %1479 = vmatprep.subr.mxu0 0.0
    %1480 = vmatpush1.xpose.msra.mxu0 %v323
    %1481 = vmatprep.subr.mxu0 0.0
    %1482 = vmatpush1.xpose.msra.mxu0 %v326
    %1483 = vmatprep.subr.mxu0 0.0
    %1484 = vmatpush1.xpose.msra.mxu0 %v329
    %1485 = vmatprep.subr.mxu0 0.0
    %1486 = vmatpush1.xpose.msra.mxu0 %v332
    %1487 = vmatprep.subr.mxu0 0.0
    %1488 = vmatpush1.xpose.msra.mxu0 %v335
    %1489 = vmatprep.subr.mxu0 0.0
    %1490 = vmatpush1.xpose.msra.mxu0 %v338
    %1491 = vmatprep.subr.mxu0 0.0
    %1492 = vmatpush1.xpose.msra.mxu0 %v341
    %1493 = vmatprep.subr.mxu0 0.0
    %1494 = vmatpush1.xpose.msra.mxu0 %v344
    %1495 = vmatprep.subr.mxu0 0.0
    %1496 = vmatpush1.xpose.msra.mxu0 %v347
    %1497 = vmatprep.subr.mxu0 0.0
    %1498 = vmatpush1.xpose.msra.mxu0 %v350
    %1499 = vmatprep.subr.mxu0 0.0
    %1500 = vmatpush1.xpose.msra.mxu0 0.0
    %1501 = vmatprep.subr.mxu0 0.0
    %1502 = vmatpush1.xpose.msra.mxu0 0.0
    %1503 = vmatprep.subr.mxu0 0.0
    %1504 = vmatpush1.xpose.msra.mxu0 0.0
    %1505 = vmatprep.subr.mxu0 0.0
    %1506 = vmatpush1.xpose.msra.mxu0 0.0
    %1507 = vmatprep.subr.mxu0 0.0
    %1508 = vmatpush1.xpose.msra.mxu0 0.0
    %1509 = vmatprep.subr.mxu0 0.0
    %1510 = vmatpush1.xpose.msra.mxu0 0.0
    %1511 = vmatprep.subr.mxu0 0.0
    %1512 = vmatpush1.xpose.msra.mxu0 0.0
    %1513 = vmatprep.subr.mxu0 0.0
    %1514 = vmatpush1.xpose.msra.mxu0 0.0
    %1515 = vmatprep.subr.mxu0 0.0
    %1516 = vmatpush1.xpose.msra.mxu0 0.0
    %1517 = vmatprep.subr.mxu0 0.0
    %1518 = vmatpush1.xpose.msra.mxu0 0.0
    %1519 = vmatprep.subr.mxu0 0.0
    %1520 = vmatpush1.xpose.msra.mxu0 0.0
    %1521 = vmatprep.subr.mxu0 0.0
    %1522 = vmatpush1.xpose.msra.mxu0 0.0
    %1523 = vmatprep.subr.mxu0 0.0
    %1524 = vmatpush1.xpose.msra.mxu0 0.0
    %1525 = vmatprep.subr.mxu0 0.0
    %1526 = vmatpush1.xpose.msra.mxu0 0.0
    %1527 = vmatprep.subr.mxu0 0.0
    %1528 = vmatpush1.xpose.msra.mxu0 0.0
    %1529 = vmatprep.subr.mxu0 0.0
    %1530 = vmatpush1.xpose.msra.mxu0 0.0
    %1531 = vmatprep.subr.mxu0 0.0
    %1532 = vmatpush1.xpose.msra.mxu0 0.0
    %1533 = vmatprep.subr.mxu0 0.0
    %1534 = vmatpush1.xpose.msra.mxu0 0.0
    %1535 = vmatprep.subr.mxu0 0.0
    %1536 = vmatpush1.xpose.msra.mxu0 0.0
    %1537 = vmatprep.subr.mxu0 0.0
    %1538 = vmatpush1.xpose.msra.mxu0 0.0
    %1539 = vmatprep.mubr.f32.mxu0 0.0
    %1540 = vmatmul.mubr.f32.gmra.mrb[0].mxu0 %v1473
    %v1541 = vpop.f32.mrb[0].mxu0
    %v1542 = vadd.f32 %v312, %v1541
    %v1543 = vpop.f32.mrb[0].mxu0
    %1544 = vdwg.mxu0
    %v1547 = vrot.slane %v1464, 4
    %v1548 = vrot.slane %v1465, 3
    %v1549 = vsel %vm644, %v1548, %v1547
    %1550 = vrot.lane.b32.xlu0 %v1549, 96
    %v1551 = vpop.permute.xlu0 %1550
    %v1552 = vsel %vm37, %v1551, 0
    %1554 = vmatprep.subr.mxu0 0.0
    %1555 = vmatpush1.xpose.msra.mxu0 %v427
    %1556 = vmatprep.subr.mxu0 0.0
    %1557 = vmatpush1.xpose.msra.mxu0 %v430
    %1558 = vmatprep.subr.mxu0 0.0
    %1559 = vmatpush1.xpose.msra.mxu0 %v433
    %1560 = vmatprep.subr.mxu0 0.0
    %1561 = vmatpush1.xpose.msra.mxu0 %v436
    %1562 = vmatprep.subr.mxu0 0.0
    %1563 = vmatpush1.xpose.msra.mxu0 %v439
    %1564 = vmatprep.subr.mxu0 0.0
    %1565 = vmatpush1.xpose.msra.mxu0 %v442
    %1566 = vmatprep.subr.mxu0 0.0
    %1567 = vmatpush1.xpose.msra.mxu0 %v445
    %1568 = vmatprep.subr.mxu0 0.0
    %1569 = vmatpush1.xpose.msra.mxu0 %v448
    %1570 = vmatprep.subr.mxu0 0.0
    %1571 = vmatpush1.xpose.msra.mxu0 %v451
    %1572 = vmatprep.subr.mxu0 0.0
    %1573 = vmatpush1.xpose.msra.mxu0 %v454
    %1574 = vmatprep.subr.mxu0 0.0
    %1575 = vmatpush1.xpose.msra.mxu0 %v457
    %1576 = vmatprep.subr.mxu0 0.0
    %1577 = vmatpush1.xpose.msra.mxu0 %v460
    %1578 = vmatprep.subr.mxu0 0.0
    %1579 = vmatpush1.xpose.msra.mxu0 0.0
    %1580 = vmatprep.subr.mxu0 0.0
    %1581 = vmatpush1.xpose.msra.mxu0 0.0
    %1582 = vmatprep.subr.mxu0 0.0
    %1583 = vmatpush1.xpose.msra.mxu0 0.0
    %1584 = vmatprep.subr.mxu0 0.0
    %1585 = vmatpush1.xpose.msra.mxu0 0.0
    %1586 = vmatprep.subr.mxu0 0.0
    %1587 = vmatpush1.xpose.msra.mxu0 0.0
    %1588 = vmatprep.subr.mxu0 0.0
    %1589 = vmatpush1.xpose.msra.mxu0 0.0
    %1590 = vmatprep.subr.mxu0 0.0
    %1591 = vmatpush1.xpose.msra.mxu0 0.0
    %1592 = vmatprep.subr.mxu0 0.0
    %1593 = vmatpush1.xpose.msra.mxu0 0.0
    %1594 = vmatprep.subr.mxu0 0.0
    %1595 = vmatpush1.xpose.msra.mxu0 0.0
    %1596 = vmatprep.subr.mxu0 0.0
    %1597 = vmatpush1.xpose.msra.mxu0 0.0
    %1598 = vmatprep.subr.mxu0 0.0
    %1599 = vmatpush1.xpose.msra.mxu0 0.0
    %1600 = vmatprep.subr.mxu0 0.0
    %1601 = vmatpush1.xpose.msra.mxu0 0.0
    %1602 = vmatprep.subr.mxu0 0.0
    %1603 = vmatpush1.xpose.msra.mxu0 0.0
    %1604 = vmatprep.subr.mxu0 0.0
    %1605 = vmatpush1.xpose.msra.mxu0 0.0
    %1606 = vmatprep.subr.mxu0 0.0
    %1607 = vmatpush1.xpose.msra.mxu0 0.0
    %1608 = vmatprep.subr.mxu0 0.0
    %1609 = vmatpush1.xpose.msra.mxu0 0.0
    %1610 = vmatprep.subr.mxu0 0.0
    %1611 = vmatpush1.xpose.msra.mxu0 0.0
    %1612 = vmatprep.subr.mxu0 0.0
    %1613 = vmatpush1.xpose.msra.mxu0 0.0
    %1614 = vmatprep.subr.mxu0 0.0
    %1615 = vmatpush1.xpose.msra.mxu0 0.0
    %1616 = vmatprep.subr.mxu0 0.0
    %1617 = vmatpush1.xpose.msra.mxu0 0.0
    %1618 = vmatprep.mubr.f32.mxu0 0.0
    %1619 = vmatmul.mubr.f32.gmra.mrb[0].mxu0 %v1552
    %v1620 = vpop.f32.mrb[0].mxu0
    %v1621 = vadd.f32 %v425, %v1620
    %v1622 = vpop.f32.mrb[0].mxu0
    %1623 = vdwg.mxu0
    %v1625 = vrot.slane %v1542, 4
    %v1626 = vrot.slane %v1542, 5
    %v1629 = vadd.f32 %v147, %v1625
    %v1630 = vadd.f32 %v152, %v1626
    %v1631 = vxor.u32 %v1629, 2147483648
    %v1632 = vxor.u32 %v1630, 2147483648
    %v1633 = vmul.f32 %v1631, 1.442695
    %v1634 = vpow.pop %v1633
    %v1635 = vmul.f32 %v1632, 1.442695
    %v1636 = vpow.pop %v1635
    %v1637 = vadd.f32 %v1634, 1.0
    %v1638 = vadd.f32 %v1636, 1.0
    %v1639 = vrcp.pop %v1637
    %v1640 = vmul.f32 1.0, %v1639
    %v1641 = vrcp.pop %v1638
    %v1642 = vmul.f32 1.0, %v1641
    %1643 = vrot.lane.b32.xlu0 %v1625, 64
    %v1644 = vpop.permute.xlu0 %1643
    %1645 = vrot.lane.b32.xlu0 %v1626, 64
    %v1646 = vpop.permute.xlu0 %1645
    %v1649 = vmul.f32 %v1640, %v1644
    %v1650 = vmul.f32 %v1642, %v1646
    %1653 = vrot.lane.b32.xlu0 %v1649, 64
    %v1654 = vpop.permute.xlu0 %1653
    %1655 = vrot.lane.b32.xlu0 %v1650, 64
    %v1656 = vpop.permute.xlu0 %1655
    %v1659 = vadd.f32 %v147, %v1654
    %v1660 = vadd.f32 %v152, %v1656
    %v1661 = vtanh.pop %v1659
    %v1662 = vtanh.pop %v1660
    %v1663 = vsub.f32 1.0, %v1640
    %v1664 = vsub.f32 1.0, %v1642
    %1667 = vrot.lane.b32.xlu0 %v1661, 96
    %v1668 = vpop.permute.xlu0 %1667
    %1669 = vrot.lane.b32.xlu0 %v1662, 96
    %v1670 = vpop.permute.xlu0 %1669
    %v1673 = vmul.f32 %v1663, %v1668
    %v1674 = vmul.f32 %v1664, %v1670
    %v1675 = vrot.slane %v1405, 7
    %v1676 = vrot.slane %v1406, 7
    %v1679 = vmul.f32 %v1640, %v1675
    %v1680 = vmul.f32 %v1642, %v1676
    %v1681 = vadd.f32 %v1673, %v1679
    %v1682 = vadd.f32 %v1674, %v1680
    %v1684 = vrot.slane %v1621, 5
    %v1685 = vrot.slane %v1621, 6
    %v1688 = vadd.f32 %v275, %v1684
    %v1689 = vadd.f32 %v280, %v1685
    %v1690 = vxor.u32 %v1688, 2147483648
    %v1691 = vxor.u32 %v1689, 2147483648
    %v1692 = vmul.f32 %v1690, 1.442695
    %v1693 = vpow.pop %v1692
    %v1694 = vmul.f32 %v1691, 1.442695
    %v1695 = vpow.pop %v1694
    %v1696 = vadd.f32 %v1693, 1.0
    %v1697 = vadd.f32 %v1695, 1.0
    %v1698 = vrcp.pop %v1696
    %v1699 = vmul.f32 1.0, %v1698
    %v1700 = vrcp.pop %v1697
    %v1701 = vmul.f32 1.0, %v1700
    %1702 = vrot.lane.b32.xlu0 %v1684, 64
    %v1703 = vpop.permute.xlu0 %1702
    %1704 = vrot.lane.b32.xlu0 %v1685, 64
    %v1705 = vpop.permute.xlu0 %1704
    %v1708 = vmul.f32 %v1699, %v1703
    %v1709 = vmul.f32 %v1701, %v1705
    %1712 = vrot.lane.b32.xlu0 %v1708, 64
    %v1713 = vpop.permute.xlu0 %1712
    %1714 = vrot.lane.b32.xlu0 %v1709, 64
    %v1715 = vpop.permute.xlu0 %1714
    %v1718 = vadd.f32 %v275, %v1713
    %v1719 = vadd.f32 %v280, %v1715
    %v1720 = vtanh.pop %v1718
    %v1721 = vtanh.pop %v1719
    %v1722 = vsub.f32 1.0, %v1699
    %v1723 = vsub.f32 1.0, %v1701
    %1726 = vrot.lane.b32.xlu0 %v1720, 96
    %v1727 = vpop.permute.xlu0 %1726
    %1728 = vrot.lane.b32.xlu0 %v1721, 96
    %v1729 = vpop.permute.xlu0 %1728
    %v1732 = vmul.f32 %v1722, %v1727
    %v1733 = vmul.f32 %v1723, %v1729
    %v1734 = vrot.slane %v1464, 1
    %v1735 = vrot.slane %v1465, 1
    %v1738 = vmul.f32 %v1699, %v1734
    %v1739 = vmul.f32 %v1701, %v1735
    %v1740 = vadd.f32 %v1732, %v1738
    %v1741 = vadd.f32 %v1733, %v1739
    %v1744 = vrot.slane %v1681, 4
    %v1745 = vrot.slane %v1682, 3
    %v1746 = vsel %vm644, %v1745, %v1744
    %1747 = vrot.lane.b32.xlu0 %v1746, 96
    %v1748 = vpop.permute.xlu0 %1747
    %v1749 = vsel %vm37, %v1748, 0
    %1751 = vmatprep.subr.mxu0 0.0
    %1752 = vmatpush1.xpose.msra.mxu0 %v317
    %1753 = vmatprep.subr.mxu0 0.0
    %1754 = vmatpush1.xpose.msra.mxu0 %v320
    %1755 = vmatprep.subr.mxu0 0.0
    %1756 = vmatpush1.xpose.msra.mxu0 %v323
    %1757 = vmatprep.subr.mxu0 0.0
    %1758 = vmatpush1.xpose.msra.mxu0 %v326
    %1759 = vmatprep.subr.mxu0 0.0
    %1760 = vmatpush1.xpose.msra.mxu0 %v329
    %1761 = vmatprep.subr.mxu0 0.0
    %1762 = vmatpush1.xpose.msra.mxu0 %v332
    %1763 = vmatprep.subr.mxu0 0.0
    %1764 = vmatpush1.xpose.msra.mxu0 %v335
    %1765 = vmatprep.subr.mxu0 0.0
    %1766 = vmatpush1.xpose.msra.mxu0 %v338
    %1767 = vmatprep.subr.mxu0 0.0
    %1768 = vmatpush1.xpose.msra.mxu0 %v341
    %1769 = vmatprep.subr.mxu0 0.0
    %1770 = vmatpush1.xpose.msra.mxu0 %v344
    %1771 = vmatprep.subr.mxu0 0.0
    %1772 = vmatpush1.xpose.msra.mxu0 %v347
    %1773 = vmatprep.subr.mxu0 0.0
    %1774 = vmatpush1.xpose.msra.mxu0 %v350
    %1775 = vmatprep.subr.mxu0 0.0
    %1776 = vmatpush1.xpose.msra.mxu0 0.0
    %1777 = vmatprep.subr.mxu0 0.0
    %1778 = vmatpush1.xpose.msra.mxu0 0.0
    %1779 = vmatprep.subr.mxu0 0.0
    %1780 = vmatpush1.xpose.msra.mxu0 0.0
    %1781 = vmatprep.subr.mxu0 0.0
    %1782 = vmatpush1.xpose.msra.mxu0 0.0
    %1783 = vmatprep.subr.mxu0 0.0
    %1784 = vmatpush1.xpose.msra.mxu0 0.0
    %1785 = vmatprep.subr.mxu0 0.0
    %1786 = vmatpush1.xpose.msra.mxu0 0.0
    %1787 = vmatprep.subr.mxu0 0.0
    %1788 = vmatpush1.xpose.msra.mxu0 0.0
    %1789 = vmatprep.subr.mxu0 0.0
    %1790 = vmatpush1.xpose.msra.mxu0 0.0
    %1791 = vmatprep.subr.mxu0 0.0
    %1792 = vmatpush1.xpose.msra.mxu0 0.0
    %1793 = vmatprep.subr.mxu0 0.0
    %1794 = vmatpush1.xpose.msra.mxu0 0.0
    %1795 = vmatprep.subr.mxu0 0.0
    %1796 = vmatpush1.xpose.msra.mxu0 0.0
    %1797 = vmatprep.subr.mxu0 0.0
    %1798 = vmatpush1.xpose.msra.mxu0 0.0
    %1799 = vmatprep.subr.mxu0 0.0
    %1800 = vmatpush1.xpose.msra.mxu0 0.0
    %1801 = vmatprep.subr.mxu0 0.0
    %1802 = vmatpush1.xpose.msra.mxu0 0.0
    %1803 = vmatprep.subr.mxu0 0.0
    %1804 = vmatpush1.xpose.msra.mxu0 0.0
    %1805 = vmatprep.subr.mxu0 0.0
    %1806 = vmatpush1.xpose.msra.mxu0 0.0
    %1807 = vmatprep.subr.mxu0 0.0
    %1808 = vmatpush1.xpose.msra.mxu0 0.0
    %1809 = vmatprep.subr.mxu0 0.0
    %1810 = vmatpush1.xpose.msra.mxu0 0.0
    %1811 = vmatprep.subr.mxu0 0.0
    %1812 = vmatpush1.xpose.msra.mxu0 0.0
    %1813 = vmatprep.subr.mxu0 0.0
    %1814 = vmatpush1.xpose.msra.mxu0 0.0
    %1815 = vmatprep.mubr.f32.mxu0 0.0
    %1816 = vmatmul.mubr.f32.gmra.mrb[0].mxu0 %v1749
    %v1817 = vpop.f32.mrb[0].mxu0
    %v1818 = vadd.f32 %v312, %v1817
    %v1819 = vpop.f32.mrb[0].mxu0
    %1820 = vdwg.mxu0
    %v1823 = vrot.slane %v1740, 3
    %v1824 = vrot.slane %v1741, 2
    %v1825 = vsel %vm644, %v1824, %v1823
    %1826 = vrot.lane.b32.xlu0 %v1825, 96
    %v1827 = vpop.permute.xlu0 %1826
    %v1828 = vsel %vm37, %v1827, 0
    %1830 = vmatprep.subr.mxu0 0.0
    %1831 = vmatpush1.xpose.msra.mxu0 %v427
    %1832 = vmatprep.subr.mxu0 0.0
    %1833 = vmatpush1.xpose.msra.mxu0 %v430
    %1834 = vmatprep.subr.mxu0 0.0
    %1835 = vmatpush1.xpose.msra.mxu0 %v433
    %1836 = vmatprep.subr.mxu0 0.0
    %1837 = vmatpush1.xpose.msra.mxu0 %v436
    %1838 = vmatprep.subr.mxu0 0.0
    %1839 = vmatpush1.xpose.msra.mxu0 %v439
    %1840 = vmatprep.subr.mxu0 0.0
    %1841 = vmatpush1.xpose.msra.mxu0 %v442
    %1842 = vmatprep.subr.mxu0 0.0
    %1843 = vmatpush1.xpose.msra.mxu0 %v445
    %1844 = vmatprep.subr.mxu0 0.0
    %1845 = vmatpush1.xpose.msra.mxu0 %v448
    %1846 = vmatprep.subr.mxu0 0.0
    %1847 = vmatpush1.xpose.msra.mxu0 %v451
    %1848 = vmatprep.subr.mxu0 0.0
    %1849 = vmatpush1.xpose.msra.mxu0 %v454
    %1850 = vmatprep.subr.mxu0 0.0
    %1851 = vmatpush1.xpose.msra.mxu0 %v457
    %1852 = vmatprep.subr.mxu0 0.0
    %1853 = vmatpush1.xpose.msra.mxu0 %v460
    %1854 = vmatprep.subr.mxu0 0.0
    %1855 = vmatpush1.xpose.msra.mxu0 0.0
    %1856 = vmatprep.subr.mxu0 0.0
    %1857 = vmatpush1.xpose.msra.mxu0 0.0
    %1858 = vmatprep.subr.mxu0 0.0
    %1859 = vmatpush1.xpose.msra.mxu0 0.0
    %1860 = vmatprep.subr.mxu0 0.0
    %1861 = vmatpush1.xpose.msra.mxu0 0.0
    %1862 = vmatprep.subr.mxu0 0.0
    %1863 = vmatpush1.xpose.msra.mxu0 0.0
    %1864 = vmatprep.subr.mxu0 0.0
    %1865 = vmatpush1.xpose.msra.mxu0 0.0
    %1866 = vmatprep.subr.mxu0 0.0
    %1867 = vmatpush1.xpose.msra.mxu0 0.0
    %1868 = vmatprep.subr.mxu0 0.0
    %1869 = vmatpush1.xpose.msra.mxu0 0.0
    %1870 = vmatprep.subr.mxu0 0.0
    %1871 = vmatpush1.xpose.msra.mxu0 0.0
    %1872 = vmatprep.subr.mxu0 0.0
    %1873 = vmatpush1.xpose.msra.mxu0 0.0
    %1874 = vmatprep.subr.mxu0 0.0
    %1875 = vmatpush1.xpose.msra.mxu0 0.0
    %1876 = vmatprep.subr.mxu0 0.0
    %1877 = vmatpush1.xpose.msra.mxu0 0.0
    %1878 = vmatprep.subr.mxu0 0.0
    %1879 = vmatpush1.xpose.msra.mxu0 0.0
    %1880 = vmatprep.subr.mxu0 0.0
    %1881 = vmatpush1.xpose.msra.mxu0 0.0
    %1882 = vmatprep.subr.mxu0 0.0
    %1883 = vmatpush1.xpose.msra.mxu0 0.0
    %1884 = vmatprep.subr.mxu0 0.0
    %1885 = vmatpush1.xpose.msra.mxu0 0.0
    %1886 = vmatprep.subr.mxu0 0.0
    %1887 = vmatpush1.xpose.msra.mxu0 0.0
    %1888 = vmatprep.subr.mxu0 0.0
    %1889 = vmatpush1.xpose.msra.mxu0 0.0
    %1890 = vmatprep.subr.mxu0 0.0
    %1891 = vmatpush1.xpose.msra.mxu0 0.0
    %1892 = vmatprep.subr.mxu0 0.0
    %1893 = vmatpush1.xpose.msra.mxu0 0.0
    %1894 = vmatprep.mubr.f32.mxu0 0.0
    %1895 = vmatmul.mubr.f32.gmra.mrb[0].mxu0 %v1828
    %v1896 = vpop.f32.mrb[0].mxu0
    %v1897 = vadd.f32 %v425, %v1896
    %v1898 = vpop.f32.mrb[0].mxu0
    %1899 = vdwg.mxu0
    %v1901 = vrot.slane %v1818, 3
    %v1902 = vrot.slane %v1818, 4
    %v1905 = vadd.f32 %v147, %v1901
    %v1906 = vadd.f32 %v152, %v1902
    %v1907 = vxor.u32 %v1905, 2147483648
    %v1908 = vxor.u32 %v1906, 2147483648
    %v1909 = vmul.f32 %v1907, 1.442695
    %v1910 = vpow.pop %v1909
    %v1911 = vmul.f32 %v1908, 1.442695
    %v1912 = vpow.pop %v1911
    %v1913 = vadd.f32 %v1910, 1.0
    %v1914 = vadd.f32 %v1912, 1.0
    %v1915 = vrcp.pop %v1913
    %v1916 = vmul.f32 1.0, %v1915
    %v1917 = vrcp.pop %v1914
    %v1918 = vmul.f32 1.0, %v1917
    %1919 = vrot.lane.b32.xlu0 %v1901, 64
    %v1920 = vpop.permute.xlu0 %1919
    %1921 = vrot.lane.b32.xlu0 %v1902, 64
    %v1922 = vpop.permute.xlu0 %1921
    %v1925 = vmul.f32 %v1916, %v1920
    %v1926 = vmul.f32 %v1918, %v1922
    %1929 = vrot.lane.b32.xlu0 %v1925, 64
    %v1930 = vpop.permute.xlu0 %1929
    %1931 = vrot.lane.b32.xlu0 %v1926, 64
    %v1932 = vpop.permute.xlu0 %1931
    %v1935 = vadd.f32 %v147, %v1930
    %v1936 = vadd.f32 %v152, %v1932
    %v1937 = vtanh.pop %v1935
    %v1938 = vtanh.pop %v1936
    %v1939 = vsub.f32 1.0, %v1916
    %v1940 = vsub.f32 1.0, %v1918
    %1943 = vrot.lane.b32.xlu0 %v1937, 96
    %v1944 = vpop.permute.xlu0 %1943
    %1945 = vrot.lane.b32.xlu0 %v1938, 96
    %v1946 = vpop.permute.xlu0 %1945
    %v1949 = vmul.f32 %v1939, %v1944
    %v1950 = vmul.f32 %v1940, %v1946
    %v1951 = vrot.slane %v1681, 7
    %v1952 = vrot.slane %v1682, 7
    %v1955 = vmul.f32 %v1916, %v1951
    %v1956 = vmul.f32 %v1918, %v1952
    %v1957 = vadd.f32 %v1949, %v1955
    %v1958 = vadd.f32 %v1950, %v1956
    %v1960 = vrot.slane %v1897, 6
    %v1961 = vrot.slane %v1897, 7
    %v1964 = vadd.f32 %v275, %v1960
    %v1965 = vadd.f32 %v280, %v1961
    %v1966 = vxor.u32 %v1964, 2147483648
    %v1967 = vxor.u32 %v1965, 2147483648
    %v1968 = vmul.f32 %v1966, 1.442695
    %v1969 = vpow.pop %v1968
    %v1970 = vmul.f32 %v1967, 1.442695
    %v1971 = vpow.pop %v1970
    %v1972 = vadd.f32 %v1969, 1.0
    %v1973 = vadd.f32 %v1971, 1.0
    %v1974 = vrcp.pop %v1972
    %v1975 = vmul.f32 1.0, %v1974
    %v1976 = vrcp.pop %v1973
    %v1977 = vmul.f32 1.0, %v1976
    %1978 = vrot.lane.b32.xlu0 %v1960, 64
    %v1979 = vpop.permute.xlu0 %1978
    %1980 = vrot.lane.b32.xlu0 %v1961, 64
    %v1981 = vpop.permute.xlu0 %1980
    %v1984 = vmul.f32 %v1975, %v1979
    %v1985 = vmul.f32 %v1977, %v1981
    %1988 = vrot.lane.b32.xlu0 %v1984, 64
    %v1989 = vpop.permute.xlu0 %1988
    %1990 = vrot.lane.b32.xlu0 %v1985, 64
    %v1991 = vpop.permute.xlu0 %1990
    %v1994 = vadd.f32 %v275, %v1989
    %v1995 = vadd.f32 %v280, %v1991
    %v1996 = vtanh.pop %v1994
    %v1997 = vtanh.pop %v1995
    %v1998 = vsub.f32 1.0, %v1975
    %v1999 = vsub.f32 1.0, %v1977
    %2002 = vrot.lane.b32.xlu0 %v1996, 96
    %v2003 = vpop.permute.xlu0 %2002
    %2004 = vrot.lane.b32.xlu0 %v1997, 96
    %v2005 = vpop.permute.xlu0 %2004
    %v2008 = vmul.f32 %v1998, %v2003
    %v2009 = vmul.f32 %v1999, %v2005
    %v2010 = vrot.slane %v1740, 1
    %v2011 = vrot.slane %v1741, 1
    %v2014 = vmul.f32 %v1975, %v2010
    %v2015 = vmul.f32 %v1977, %v2011
    %v2016 = vadd.f32 %v2008, %v2014
    %v2017 = vadd.f32 %v2009, %v2015
    %v2020 = vrot.slane %v1957, 5
    %v2021 = vrot.slane %v1958, 4
    %v2022 = vsel %vm644, %v2021, %v2020
    %2023 = vrot.lane.b32.xlu0 %v2022, 96
    %v2024 = vpop.permute.xlu0 %2023
    %v2025 = vsel %vm37, %v2024, 0
    %2027 = vmatprep.subr.mxu0 0.0
    %2028 = vmatpush1.xpose.msra.mxu0 %v317
    %2029 = vmatprep.subr.mxu0 0.0
    %2030 = vmatpush1.xpose.msra.mxu0 %v320
    %2031 = vmatprep.subr.mxu0 0.0
    %2032 = vmatpush1.xpose.msra.mxu0 %v323
    %2033 = vmatprep.subr.mxu0 0.0
    %2034 = vmatpush1.xpose.msra.mxu0 %v326
    %2035 = vmatprep.subr.mxu0 0.0
    %2036 = vmatpush1.xpose.msra.mxu0 %v329
    %2037 = vmatprep.subr.mxu0 0.0
    %2038 = vmatpush1.xpose.msra.mxu0 %v332
    %2039 = vmatprep.subr.mxu0 0.0
    %2040 = vmatpush1.xpose.msra.mxu0 %v335
    %2041 = vmatprep.subr.mxu0 0.0
    %2042 = vmatpush1.xpose.msra.mxu0 %v338
    %2043 = vmatprep.subr.mxu0 0.0
    %2044 = vmatpush1.xpose.msra.mxu0 %v341
    %2045 = vmatprep.subr.mxu0 0.0
    %2046 = vmatpush1.xpose.msra.mxu0 %v344
    %2047 = vmatprep.subr.mxu0 0.0
    %2048 = vmatpush1.xpose.msra.mxu0 %v347
    %2049 = vmatprep.subr.mxu0 0.0
    %2050 = vmatpush1.xpose.msra.mxu0 %v350
    %2051 = vmatprep.subr.mxu0 0.0
    %2052 = vmatpush1.xpose.msra.mxu0 0.0
    %2053 = vmatprep.subr.mxu0 0.0
    %2054 = vmatpush1.xpose.msra.mxu0 0.0
    %2055 = vmatprep.subr.mxu0 0.0
    %2056 = vmatpush1.xpose.msra.mxu0 0.0
    %2057 = vmatprep.subr.mxu0 0.0
    %2058 = vmatpush1.xpose.msra.mxu0 0.0
    %2059 = vmatprep.subr.mxu0 0.0
    %2060 = vmatpush1.xpose.msra.mxu0 0.0
    %2061 = vmatprep.subr.mxu0 0.0
    %2062 = vmatpush1.xpose.msra.mxu0 0.0
    %2063 = vmatprep.subr.mxu0 0.0
    %2064 = vmatpush1.xpose.msra.mxu0 0.0
    %2065 = vmatprep.subr.mxu0 0.0
    %2066 = vmatpush1.xpose.msra.mxu0 0.0
    %2067 = vmatprep.subr.mxu0 0.0
    %2068 = vmatpush1.xpose.msra.mxu0 0.0
    %2069 = vmatprep.subr.mxu0 0.0
    %2070 = vmatpush1.xpose.msra.mxu0 0.0
    %2071 = vmatprep.subr.mxu0 0.0
    %2072 = vmatpush1.xpose.msra.mxu0 0.0
    %2073 = vmatprep.subr.mxu0 0.0
    %2074 = vmatpush1.xpose.msra.mxu0 0.0
    %2075 = vmatprep.subr.mxu0 0.0
    %2076 = vmatpush1.xpose.msra.mxu0 0.0
    %2077 = vmatprep.subr.mxu0 0.0
    %2078 = vmatpush1.xpose.msra.mxu0 0.0
    %2079 = vmatprep.subr.mxu0 0.0
    %2080 = vmatpush1.xpose.msra.mxu0 0.0
    %2081 = vmatprep.subr.mxu0 0.0
    %2082 = vmatpush1.xpose.msra.mxu0 0.0
    %2083 = vmatprep.subr.mxu0 0.0
    %2084 = vmatpush1.xpose.msra.mxu0 0.0
    %2085 = vmatprep.subr.mxu0 0.0
    %2086 = vmatpush1.xpose.msra.mxu0 0.0
    %2087 = vmatprep.subr.mxu0 0.0
    %2088 = vmatpush1.xpose.msra.mxu0 0.0
    %2089 = vmatprep.subr.mxu0 0.0
    %2090 = vmatpush1.xpose.msra.mxu0 0.0
    %2091 = vmatprep.mubr.f32.mxu0 0.0
    %2092 = vmatmul.mubr.f32.gmra.mrb[0].mxu0 %v2025
    %v2093 = vpop.f32.mrb[0].mxu0
    %v2094 = vadd.f32 %v312, %v2093
    %v2095 = vpop.f32.mrb[0].mxu0
    %2096 = vdwg.mxu0
    %v2099 = vrot.slane %v2016, 2
    %v2100 = vrot.slane %v2017, 1
    %v2101 = vsel %vm644, %v2100, %v2099
    %2102 = vrot.lane.b32.xlu0 %v2101, 96
    %v2103 = vpop.permute.xlu0 %2102
    %v2104 = vsel %vm37, %v2103, 0
    %2106 = vmatprep.subr.mxu0 0.0
    %2107 = vmatpush1.xpose.msra.mxu0 %v427
    %2108 = vmatprep.subr.mxu0 0.0
    %2109 = vmatpush1.xpose.msra.mxu0 %v430
    %2110 = vmatprep.subr.mxu0 0.0
    %2111 = vmatpush1.xpose.msra.mxu0 %v433
    %2112 = vmatprep.subr.mxu0 0.0
    %2113 = vmatpush1.xpose.msra.mxu0 %v436
    %2114 = vmatprep.subr.mxu0 0.0
    %2115 = vmatpush1.xpose.msra.mxu0 %v439
    %2116 = vmatprep.subr.mxu0 0.0
    %2117 = vmatpush1.xpose.msra.mxu0 %v442
    %2118 = vmatprep.subr.mxu0 0.0
    %2119 = vmatpush1.xpose.msra.mxu0 %v445
    %2120 = vmatprep.subr.mxu0 0.0
    %2121 = vmatpush1.xpose.msra.mxu0 %v448
    %2122 = vmatprep.subr.mxu0 0.0
    %2123 = vmatpush1.xpose.msra.mxu0 %v451
    %2124 = vmatprep.subr.mxu0 0.0
    %2125 = vmatpush1.xpose.msra.mxu0 %v454
    %2126 = vmatprep.subr.mxu0 0.0
    %2127 = vmatpush1.xpose.msra.mxu0 %v457
    %2128 = vmatprep.subr.mxu0 0.0
    %2129 = vmatpush1.xpose.msra.mxu0 %v460
    %2130 = vmatprep.subr.mxu0 0.0
    %2131 = vmatpush1.xpose.msra.mxu0 0.0
    %2132 = vmatprep.subr.mxu0 0.0
    %2133 = vmatpush1.xpose.msra.mxu0 0.0
    %2134 = vmatprep.subr.mxu0 0.0
    %2135 = vmatpush1.xpose.msra.mxu0 0.0
    %2136 = vmatprep.subr.mxu0 0.0
    %2137 = vmatpush1.xpose.msra.mxu0 0.0
    %2138 = vmatprep.subr.mxu0 0.0
    %2139 = vmatpush1.xpose.msra.mxu0 0.0
    %2140 = vmatprep.subr.mxu0 0.0
    %2141 = vmatpush1.xpose.msra.mxu0 0.0
    %2142 = vmatprep.subr.mxu0 0.0
    %2143 = vmatpush1.xpose.msra.mxu0 0.0
    %2144 = vmatprep.subr.mxu0 0.0
    %2145 = vmatpush1.xpose.msra.mxu0 0.0
    %2146 = vmatprep.subr.mxu0 0.0
    %2147 = vmatpush1.xpose.msra.mxu0 0.0
    %2148 = vmatprep.subr.mxu0 0.0
    %2149 = vmatpush1.xpose.msra.mxu0 0.0
    %2150 = vmatprep.subr.mxu0 0.0
    %2151 = vmatpush1.xpose.msra.mxu0 0.0
    %2152 = vmatprep.subr.mxu0 0.0
    %2153 = vmatpush1.xpose.msra.mxu0 0.0
    %2154 = vmatprep.subr.mxu0 0.0
    %2155 = vmatpush1.xpose.msra.mxu0 0.0
    %2156 = vmatprep.subr.mxu0 0.0
    %2157 = vmatpush1.xpose.msra.mxu0 0.0
    %2158 = vmatprep.subr.mxu0 0.0
    %2159 = vmatpush1.xpose.msra.mxu0 0.0
    %2160 = vmatprep.subr.mxu0 0.0
    %2161 = vmatpush1.xpose.msra.mxu0 0.0
    %2162 = vmatprep.subr.mxu0 0.0
    %2163 = vmatpush1.xpose.msra.mxu0 0.0
    %2164 = vmatprep.subr.mxu0 0.0
    %2165 = vmatpush1.xpose.msra.mxu0 0.0
    %2166 = vmatprep.subr.mxu0 0.0
    %2167 = vmatpush1.xpose.msra.mxu0 0.0
    %2168 = vmatprep.subr.mxu0 0.0
    %2169 = vmatpush1.xpose.msra.mxu0 0.0
    %2170 = vmatprep.mubr.f32.mxu0 0.0
    %2171 = vmatmul.mubr.f32.gmra.mrb[0].mxu0 %v2104
    %v2172 = vpop.f32.mrb[0].mxu0
    %v2173 = vadd.f32 %v425, %v2172
    %v2174 = vpop.f32.mrb[0].mxu0
    %2175 = vdwg.mxu0
    %v2177 = vrot.slane %v2094, 2
    %v2178 = vrot.slane %v2094, 3
    %v2181 = vadd.f32 %v147, %v2177
    %v2182 = vadd.f32 %v152, %v2178
    %v2183 = vxor.u32 %v2181, 2147483648
    %v2184 = vxor.u32 %v2182, 2147483648
    %v2185 = vmul.f32 %v2183, 1.442695
    %v2186 = vpow.pop %v2185
    %v2187 = vmul.f32 %v2184, 1.442695
    %v2188 = vpow.pop %v2187
    %v2189 = vadd.f32 %v2186, 1.0
    %v2190 = vadd.f32 %v2188, 1.0
    %v2191 = vrcp.pop %v2189
    %v2192 = vmul.f32 1.0, %v2191
    %v2193 = vrcp.pop %v2190
    %v2194 = vmul.f32 1.0, %v2193
    %2195 = vrot.lane.b32.xlu0 %v2177, 64
    %v2196 = vpop.permute.xlu0 %2195
    %2197 = vrot.lane.b32.xlu0 %v2178, 64
    %v2198 = vpop.permute.xlu0 %2197
    %v2201 = vmul.f32 %v2192, %v2196
    %v2202 = vmul.f32 %v2194, %v2198
    %2205 = vrot.lane.b32.xlu0 %v2201, 64
    %v2206 = vpop.permute.xlu0 %2205
    %2207 = vrot.lane.b32.xlu0 %v2202, 64
    %v2208 = vpop.permute.xlu0 %2207
    %v2211 = vadd.f32 %v147, %v2206
    %v2212 = vadd.f32 %v152, %v2208
    %v2213 = vtanh.pop %v2211
    %v2214 = vtanh.pop %v2212
    %v2215 = vsub.f32 1.0, %v2192
    %v2216 = vsub.f32 1.0, %v2194
    %2219 = vrot.lane.b32.xlu0 %v2213, 96
    %v2220 = vpop.permute.xlu0 %2219
    %2221 = vrot.lane.b32.xlu0 %v2214, 96
    %v2222 = vpop.permute.xlu0 %2221
    %v2225 = vmul.f32 %v2215, %v2220
    %v2226 = vmul.f32 %v2216, %v2222
    %v2227 = vrot.slane %v1957, 7
    %v2228 = vrot.slane %v1958, 7
    %v2231 = vmul.f32 %v2192, %v2227
    %v2232 = vmul.f32 %v2194, %v2228
    %v2233 = vadd.f32 %v2225, %v2231
    %v2234 = vadd.f32 %v2226, %v2232
    %v2236 = vrot.slane %v2173, 7
    %v2239 = vadd.f32 %v275, %v2236
    %v2240 = vadd.f32 %v280, %v2173
    %v2241 = vxor.u32 %v2239, 2147483648
    %v2242 = vxor.u32 %v2240, 2147483648
    %v2243 = vmul.f32 %v2241, 1.442695
    %v2244 = vpow.pop %v2243
    %v2245 = vmul.f32 %v2242, 1.442695
    %v2246 = vpow.pop %v2245
    %v2247 = vadd.f32 %v2244, 1.0
    %v2248 = vadd.f32 %v2246, 1.0
    %v2249 = vrcp.pop %v2247
    %v2250 = vmul.f32 1.0, %v2249
    %v2251 = vrcp.pop %v2248
    %v2252 = vmul.f32 1.0, %v2251
    %2253 = vrot.lane.b32.xlu0 %v2236, 64
    %v2254 = vpop.permute.xlu0 %2253
    %2255 = vrot.lane.b32.xlu0 %v2173, 64
    %v2256 = vpop.permute.xlu0 %2255
    %v2259 = vmul.f32 %v2250, %v2254
    %v2260 = vmul.f32 %v2252, %v2256
    %2263 = vrot.lane.b32.xlu0 %v2259, 64
    %v2264 = vpop.permute.xlu0 %2263
    %2265 = vrot.lane.b32.xlu0 %v2260, 64
    %v2266 = vpop.permute.xlu0 %2265
    %v2269 = vadd.f32 %v275, %v2264
    %v2270 = vadd.f32 %v280, %v2266
    %v2271 = vtanh.pop %v2269
    %v2272 = vtanh.pop %v2270
    %v2273 = vsub.f32 1.0, %v2250
    %v2274 = vsub.f32 1.0, %v2252
    %2277 = vrot.lane.b32.xlu0 %v2271, 96
    %v2278 = vpop.permute.xlu0 %2277
    %2279 = vrot.lane.b32.xlu0 %v2272, 96
    %v2280 = vpop.permute.xlu0 %2279
    %v2283 = vmul.f32 %v2273, %v2278
    %v2284 = vmul.f32 %v2274, %v2280
    %v2285 = vrot.slane %v2016, 1
    %v2288 = vmul.f32 %v2250, %v2285
    %v2289 = vmul.f32 %v2252, %v2100
    %v2290 = vadd.f32 %v2283, %v2288
    %v2291 = vadd.f32 %v2284, %v2289
    %v2294 = vrot.slane %v2233, 6
    %v2295 = vrot.slane %v2234, 5
    %v2296 = vsel %vm644, %v2295, %v2294
    %2297 = vrot.lane.b32.xlu0 %v2296, 96
    %v2298 = vpop.permute.xlu0 %2297
    %v2299 = vsel %vm37, %v2298, 0
    %2301 = vmatprep.subr.mxu0 0.0
    %2302 = vmatpush1.xpose.msra.mxu0 %v317
    %2303 = vmatprep.subr.mxu0 0.0
    %2304 = vmatpush1.xpose.msra.mxu0 %v320
    %2305 = vmatprep.subr.mxu0 0.0
    %2306 = vmatpush1.xpose.msra.mxu0 %v323
    %2307 = vmatprep.subr.mxu0 0.0
    %2308 = vmatpush1.xpose.msra.mxu0 %v326
    %2309 = vmatprep.subr.mxu0 0.0
    %2310 = vmatpush1.xpose.msra.mxu0 %v329
    %2311 = vmatprep.subr.mxu0 0.0
    %2312 = vmatpush1.xpose.msra.mxu0 %v332
    %2313 = vmatprep.subr.mxu0 0.0
    %2314 = vmatpush1.xpose.msra.mxu0 %v335
    %2315 = vmatprep.subr.mxu0 0.0
    %2316 = vmatpush1.xpose.msra.mxu0 %v338
    %2317 = vmatprep.subr.mxu0 0.0
    %2318 = vmatpush1.xpose.msra.mxu0 %v341
    %2319 = vmatprep.subr.mxu0 0.0
    %2320 = vmatpush1.xpose.msra.mxu0 %v344
    %2321 = vmatprep.subr.mxu0 0.0
    %2322 = vmatpush1.xpose.msra.mxu0 %v347
    %2323 = vmatprep.subr.mxu0 0.0
    %2324 = vmatpush1.xpose.msra.mxu0 %v350
    %2325 = vmatprep.subr.mxu0 0.0
    %2326 = vmatpush1.xpose.msra.mxu0 0.0
    %2327 = vmatprep.subr.mxu0 0.0
    %2328 = vmatpush1.xpose.msra.mxu0 0.0
    %2329 = vmatprep.subr.mxu0 0.0
    %2330 = vmatpush1.xpose.msra.mxu0 0.0
    %2331 = vmatprep.subr.mxu0 0.0
    %2332 = vmatpush1.xpose.msra.mxu0 0.0
    %2333 = vmatprep.subr.mxu0 0.0
    %2334 = vmatpush1.xpose.msra.mxu0 0.0
    %2335 = vmatprep.subr.mxu0 0.0
    %2336 = vmatpush1.xpose.msra.mxu0 0.0
    %2337 = vmatprep.subr.mxu0 0.0
    %2338 = vmatpush1.xpose.msra.mxu0 0.0
    %2339 = vmatprep.subr.mxu0 0.0
    %2340 = vmatpush1.xpose.msra.mxu0 0.0
    %2341 = vmatprep.subr.mxu0 0.0
    %2342 = vmatpush1.xpose.msra.mxu0 0.0
    %2343 = vmatprep.subr.mxu0 0.0
    %2344 = vmatpush1.xpose.msra.mxu0 0.0
    %2345 = vmatprep.subr.mxu0 0.0
    %2346 = vmatpush1.xpose.msra.mxu0 0.0
    %2347 = vmatprep.subr.mxu0 0.0
    %2348 = vmatpush1.xpose.msra.mxu0 0.0
    %2349 = vmatprep.subr.mxu0 0.0
    %2350 = vmatpush1.xpose.msra.mxu0 0.0
    %2351 = vmatprep.subr.mxu0 0.0
    %2352 = vmatpush1.xpose.msra.mxu0 0.0
    %2353 = vmatprep.subr.mxu0 0.0
    %2354 = vmatpush1.xpose.msra.mxu0 0.0
    %2355 = vmatprep.subr.mxu0 0.0
    %2356 = vmatpush1.xpose.msra.mxu0 0.0
    %2357 = vmatprep.subr.mxu0 0.0
    %2358 = vmatpush1.xpose.msra.mxu0 0.0
    %2359 = vmatprep.subr.mxu0 0.0
    %2360 = vmatpush1.xpose.msra.mxu0 0.0
    %2361 = vmatprep.subr.mxu0 0.0
    %2362 = vmatpush1.xpose.msra.mxu0 0.0
    %2363 = vmatprep.subr.mxu0 0.0
    %2364 = vmatpush1.xpose.msra.mxu0 0.0
    %2365 = vmatprep.mubr.f32.mxu0 0.0
    %2366 = vmatmul.mubr.f32.gmra.mrb[0].mxu0 %v2299
    %v2367 = vpop.f32.mrb[0].mxu0
    %v2368 = vadd.f32 %v312, %v2367
    %v2369 = vpop.f32.mrb[0].mxu0
    %2370 = vdwg.mxu0
    %v2373 = vrot.slane %v2290, 1
    %v2374 = vsel %vm644, %v2291, %v2373
    %2375 = vrot.lane.b32.xlu0 %v2374, 96
    %v2376 = vpop.permute.xlu0 %2375
    %v2377 = vsel %vm37, %v2376, 0
    %2379 = vmatprep.subr.mxu0 0.0
    %2380 = vmatpush1.xpose.msra.mxu0 %v427
    %2381 = vmatprep.subr.mxu0 0.0
    %2382 = vmatpush1.xpose.msra.mxu0 %v430
    %2383 = vmatprep.subr.mxu0 0.0
    %2384 = vmatpush1.xpose.msra.mxu0 %v433
    %2385 = vmatprep.subr.mxu0 0.0
    %2386 = vmatpush1.xpose.msra.mxu0 %v436
    %2387 = vmatprep.subr.mxu0 0.0
    %2388 = vmatpush1.xpose.msra.mxu0 %v439
    %2389 = vmatprep.subr.mxu0 0.0
    %2390 = vmatpush1.xpose.msra.mxu0 %v442
    %2391 = vmatprep.subr.mxu0 0.0
    %2392 = vmatpush1.xpose.msra.mxu0 %v445
    %2393 = vmatprep.subr.mxu0 0.0
    %2394 = vmatpush1.xpose.msra.mxu0 %v448
    %2395 = vmatprep.subr.mxu0 0.0
    %2396 = vmatpush1.xpose.msra.mxu0 %v451
    %2397 = vmatprep.subr.mxu0 0.0
    %2398 = vmatpush1.xpose.msra.mxu0 %v454
    %2399 = vmatprep.subr.mxu0 0.0
    %2400 = vmatpush1.xpose.msra.mxu0 %v457
    %2401 = vmatprep.subr.mxu0 0.0
    %2402 = vmatpush1.xpose.msra.mxu0 %v460
    %2403 = vmatprep.subr.mxu0 0.0
    %2404 = vmatpush1.xpose.msra.mxu0 0.0
    %2405 = vmatprep.subr.mxu0 0.0
    %2406 = vmatpush1.xpose.msra.mxu0 0.0
    %2407 = vmatprep.subr.mxu0 0.0
    %2408 = vmatpush1.xpose.msra.mxu0 0.0
    %2409 = vmatprep.subr.mxu0 0.0
    %2410 = vmatpush1.xpose.msra.mxu0 0.0
    %2411 = vmatprep.subr.mxu0 0.0
    %2412 = vmatpush1.xpose.msra.mxu0 0.0
    %2413 = vmatprep.subr.mxu0 0.0
    %2414 = vmatpush1.xpose.msra.mxu0 0.0
    %2415 = vmatprep.subr.mxu0 0.0
    %2416 = vmatpush1.xpose.msra.mxu0 0.0
    %2417 = vmatprep.subr.mxu0 0.0
    %2418 = vmatpush1.xpose.msra.mxu0 0.0
    %2419 = vmatprep.subr.mxu0 0.0
    %2420 = vmatpush1.xpose.msra.mxu0 0.0
    %2421 = vmatprep.subr.mxu0 0.0
    %2422 = vmatpush1.xpose.msra.mxu0 0.0
    %2423 = vmatprep.subr.mxu0 0.0
    %2424 = vmatpush1.xpose.msra.mxu0 0.0
    %2425 = vmatprep.subr.mxu0 0.0
    %2426 = vmatpush1.xpose.msra.mxu0 0.0
    %2427 = vmatprep.subr.mxu0 0.0
    %2428 = vmatpush1.xpose.msra.mxu0 0.0
    %2429 = vmatprep.subr.mxu0 0.0
    %2430 = vmatpush1.xpose.msra.mxu0 0.0
    %2431 = vmatprep.subr.mxu0 0.0
    %2432 = vmatpush1.xpose.msra.mxu0 0.0
    %2433 = vmatprep.subr.mxu0 0.0
    %2434 = vmatpush1.xpose.msra.mxu0 0.0
    %2435 = vmatprep.subr.mxu0 0.0
    %2436 = vmatpush1.xpose.msra.mxu0 0.0
    %2437 = vmatprep.subr.mxu0 0.0
    %2438 = vmatpush1.xpose.msra.mxu0 0.0
    %2439 = vmatprep.subr.mxu0 0.0
    %2440 = vmatpush1.xpose.msra.mxu0 0.0
    %2441 = vmatprep.subr.mxu0 0.0
    %2442 = vmatpush1.xpose.msra.mxu0 0.0
    %2443 = vmatprep.mubr.f32.mxu0 0.0
    %2444 = vmatmul.mubr.f32.gmra.mrb[0].mxu0 %v2377
    %v2445 = vpop.f32.mrb[0].mxu0
    %v2446 = vadd.f32 %v425, %v2445
    %v2447 = vpop.f32.mrb[0].mxu0
    %2448 = vdwg.mxu0
    %v2450 = vrot.slane %v2368, 1
    %v2451 = vrot.slane %v2368, 2
    %v2454 = vadd.f32 %v147, %v2450
    %v2455 = vadd.f32 %v152, %v2451
    %v2456 = vxor.u32 %v2454, 2147483648
    %v2457 = vxor.u32 %v2455, 2147483648
    %v2458 = vmul.f32 %v2456, 1.442695
    %v2459 = vpow.pop %v2458
    %v2460 = vmul.f32 %v2457, 1.442695
    %v2461 = vpow.pop %v2460
    %v2462 = vadd.f32 %v2459, 1.0
    %v2463 = vadd.f32 %v2461, 1.0
    %v2464 = vrcp.pop %v2462
    %v2465 = vmul.f32 1.0, %v2464
    %v2466 = vrcp.pop %v2463
    %v2467 = vmul.f32 1.0, %v2466
    %2468 = vrot.lane.b32.xlu0 %v2450, 64
    %v2469 = vpop.permute.xlu0 %2468
    %2470 = vrot.lane.b32.xlu0 %v2451, 64
    %v2471 = vpop.permute.xlu0 %2470
    %v2474 = vmul.f32 %v2465, %v2469
    %v2475 = vmul.f32 %v2467, %v2471
    %2478 = vrot.lane.b32.xlu0 %v2474, 64
    %v2479 = vpop.permute.xlu0 %2478
    %2480 = vrot.lane.b32.xlu0 %v2475, 64
    %v2481 = vpop.permute.xlu0 %2480
    %v2484 = vadd.f32 %v147, %v2479
    %v2485 = vadd.f32 %v152, %v2481
    %v2486 = vtanh.pop %v2484
    %v2487 = vtanh.pop %v2485
    %v2488 = vsub.f32 1.0, %v2465
    %v2489 = vsub.f32 1.0, %v2467
    %2492 = vrot.lane.b32.xlu0 %v2486, 96
    %v2493 = vpop.permute.xlu0 %2492
    %2494 = vrot.lane.b32.xlu0 %v2487, 96
    %v2495 = vpop.permute.xlu0 %2494
    %v2498 = vmul.f32 %v2488, %v2493
    %v2499 = vmul.f32 %v2489, %v2495
    %v2500 = vrot.slane %v2233, 7
    %v2501 = vrot.slane %v2234, 7
    %v2504 = vmul.f32 %v2465, %v2500
    %v2505 = vmul.f32 %v2467, %v2501
    %v2506 = vadd.f32 %v2498, %v2504
    %v2507 = vadd.f32 %v2499, %v2505
    %v2509 = vrot.slane %v2446, 1
    %v2512 = vadd.f32 %v275, %v2446
    %v2513 = vadd.f32 %v280, %v2509
    %v2514 = vxor.u32 %v2512, 2147483648
    %v2515 = vxor.u32 %v2513, 2147483648
    %v2516 = vmul.f32 %v2514, 1.442695
    %v2517 = vpow.pop %v2516
    %v2518 = vmul.f32 %v2515, 1.442695
    %v2519 = vpow.pop %v2518
    %v2520 = vadd.f32 %v2517, 1.0
    %v2521 = vadd.f32 %v2519, 1.0
    %v2522 = vrcp.pop %v2520
    %v2523 = vmul.f32 1.0, %v2522
    %v2524 = vrcp.pop %v2521
    %v2525 = vmul.f32 1.0, %v2524
    %2526 = vrot.lane.b32.xlu0 %v2446, 64
    %v2527 = vpop.permute.xlu0 %2526
    %2528 = vrot.lane.b32.xlu0 %v2509, 64
    %v2529 = vpop.permute.xlu0 %2528
    %v2532 = vmul.f32 %v2523, %v2527
    %v2533 = vmul.f32 %v2525, %v2529
    %2536 = vrot.lane.b32.xlu0 %v2532, 64
    %v2537 = vpop.permute.xlu0 %2536
    %2538 = vrot.lane.b32.xlu0 %v2533, 64
    %v2539 = vpop.permute.xlu0 %2538
    %v2542 = vadd.f32 %v275, %v2537
    %v2543 = vadd.f32 %v280, %v2539
    %v2544 = vtanh.pop %v2542
    %v2545 = vtanh.pop %v2543
    %v2546 = vsub.f32 1.0, %v2523
    %v2547 = vsub.f32 1.0, %v2525
    %2550 = vrot.lane.b32.xlu0 %v2544, 96
    %v2551 = vpop.permute.xlu0 %2550
    %2552 = vrot.lane.b32.xlu0 %v2545, 96
    %v2553 = vpop.permute.xlu0 %2552
    %v2556 = vmul.f32 %v2546, %v2551
    %v2557 = vmul.f32 %v2547, %v2553
    %v2558 = vrot.slane %v2291, 1
    %v2561 = vmul.f32 %v2523, %v2373
    %v2562 = vmul.f32 %v2525, %v2558
    %v2563 = vadd.f32 %v2556, %v2561
    %v2564 = vadd.f32 %v2557, %v2562
    %vm2565 = vcmask 1040384
    %v2566 = vsel %vm2565, %v584, %v854
    %v2567 = vsel %vm2565, %v585, %v855
    %vm2568 = vcmask 1041408
    %v2569 = vsel %vm2568, %v2566, %v1129
    %v2570 = vsel %vm2568, %v2567, %v1130
    %vm2571 = vcmask 1042432
    %v2572 = vsel %vm2571, %v2569, %v1405
    %v2573 = vsel %vm2571, %v2570, %v1406
    %vm2574 = vcmask 1043456
    %v2575 = vsel %vm2574, %v2572, %v1681
    %v2576 = vsel %vm2574, %v2573, %v1682
    %vm2577 = vcmask 1044480
    %v2578 = vsel %vm2577, %v2575, %v1957
    %v2579 = vsel %vm2577, %v2576, %v1958
    %vm2580 = vcmask 1045504
    %v2581 = vsel %vm2580, %v2578, %v2233
    %v2582 = vsel %vm2580, %v2579, %v2234
    %vm2583 = vcmask 1046528
    %v2584 = vsel %vm2583, %v2581, %v2506
    %v2585 = vsel %vm2583, %v2582, %v2507
    %v2586 = vsel %vm2565, %v2563, %v2290
    %v2587 = vsel %vm2565, %v2564, %v2291
    %v2588 = vsel %vm2568, %v2586, %v2016
    %v2589 = vsel %vm2568, %v2587, %v2017
    %v2590 = vsel %vm2571, %v2588, %v1740
    %v2591 = vsel %vm2571, %v2589, %v1741
    %v2592 = vsel %vm2574, %v2590, %v1464
    %v2593 = vsel %vm2574, %v2591, %v1465
    %v2594 = vsel %vm2577, %v2592, %v1188
    %v2595 = vsel %vm2577, %v2593, %v1189
    %v2596 = vsel %vm2580, %v2594, %v913
    %v2597 = vsel %vm2580, %v2595, %v914
    %v2598 = vsel %vm2583, %v2596, %v639
    %v2599 = vsel %vm2583, %v2597, %v640
    %v2600 = vld [vmem:[%s1 + $0x180] sm:$0xff]
    %v2601 = vld [vmem:[%s1 + $0x188] sm:$0xff]
    %v2602 = vld [vmem:[%s1 + $0x190] sm:$0xff]
    %v2603 = vld [vmem:[%s1 + $0x198] sm:$0xff]
    %v2604 = vld [vmem:[%s1 + $0x1a0] sm:$0xff]
    %v2605 = vld [vmem:[%s1 + $0x1a8] sm:$0xff]
    %v2606 = vld [vmem:[%s1 + $0x1b0] sm:$0xff]
    %v2607 = vld [vmem:[%s1 + $0x1b8] sm:$0xff]
    %2610 = vrot.lane.b32.xlu0 %v2598, 96
    %v2611 = vpop.permute.xlu0 %2610
    %2612 = vrot.lane.b32.xlu0 %v2599, 96
    %v2613 = vpop.permute.xlu0 %2612
    %v2614 = vsel %vm37, %v2611, 0
    %v2616 = vsel %vm37, %v2613, 0
    %v2619 = vsel %vm37, %v2604, 0
    %v2622 = vsel %vm37, %v2605, 0
    %v2625 = vsel %vm37, %v2606, 0
    %v2628 = vsel %vm37, %v2607, 0
    %2630 = vmatprep.subr.mxu0 0.0
    %2631 = vmatpush1.xpose.msra.mxu0 %v2619
    %2632 = vmatprep.subr.mxu0 0.0
    %2633 = vmatpush1.xpose.msra.mxu0 %v2622
    %2634 = vmatprep.subr.mxu0 0.0
    %2635 = vmatpush1.xpose.msra.mxu0 %v2625
    %2636 = vmatprep.subr.mxu0 0.0
    %2637 = vmatpush1.xpose.msra.mxu0 %v2628
    %2638 = vmatprep.subr.mxu0 0.0
    %2639 = vmatpush1.xpose.msra.mxu0 0.0
    %2640 = vmatprep.subr.mxu0 0.0
    %2641 = vmatpush1.xpose.msra.mxu0 0.0
    %2642 = vmatprep.subr.mxu0 0.0
    %2643 = vmatpush1.xpose.msra.mxu0 0.0
    %2644 = vmatprep.subr.mxu0 0.0
    %2645 = vmatpush1.xpose.msra.mxu0 0.0
    %2646 = vmatprep.subr.mxu0 0.0
    %2647 = vmatpush1.xpose.msra.mxu0 0.0
    %2648 = vmatprep.subr.mxu0 0.0
    %2649 = vmatpush1.xpose.msra.mxu0 0.0
    %2650 = vmatprep.subr.mxu0 0.0
    %2651 = vmatpush1.xpose.msra.mxu0 0.0
    %2652 = vmatprep.subr.mxu0 0.0
    %2653 = vmatpush1.xpose.msra.mxu0 0.0
    %2654 = vmatprep.subr.mxu0 0.0
    %2655 = vmatpush1.xpose.msra.mxu0 0.0
    %2656 = vmatprep.subr.mxu0 0.0
    %2657 = vmatpush1.xpose.msra.mxu0 0.0
    %2658 = vmatprep.subr.mxu0 0.0
    %2659 = vmatpush1.xpose.msra.mxu0 0.0
    %2660 = vmatprep.subr.mxu0 0.0
    %2661 = vmatpush1.xpose.msra.mxu0 0.0
    %2662 = vmatprep.subr.mxu0 0.0
    %2663 = vmatpush1.xpose.msra.mxu0 0.0
    %2664 = vmatprep.subr.mxu0 0.0
    %2665 = vmatpush1.xpose.msra.mxu0 0.0
    %2666 = vmatprep.subr.mxu0 0.0
    %2667 = vmatpush1.xpose.msra.mxu0 0.0
    %2668 = vmatprep.subr.mxu0 0.0
    %2669 = vmatpush1.xpose.msra.mxu0 0.0
    %2670 = vmatprep.subr.mxu0 0.0
    %2671 = vmatpush1.xpose.msra.mxu0 0.0
    %2672 = vmatprep.subr.mxu0 0.0
    %2673 = vmatpush1.xpose.msra.mxu0 0.0
    %2674 = vmatprep.subr.mxu0 0.0
    %2675 = vmatpush1.xpose.msra.mxu0 0.0
    %2676 = vmatprep.subr.mxu0 0.0
    %2677 = vmatpush1.xpose.msra.mxu0 0.0
    %2678 = vmatprep.subr.mxu0 0.0
    %2679 = vmatpush1.xpose.msra.mxu0 0.0
    %2680 = vmatprep.subr.mxu0 0.0
    %2681 = vmatpush1.xpose.msra.mxu0 0.0
    %2682 = vmatprep.subr.mxu0 0.0
    %2683 = vmatpush1.xpose.msra.mxu0 0.0
    %2684 = vmatprep.subr.mxu0 0.0
    %2685 = vmatpush1.xpose.msra.mxu0 0.0
    %2686 = vmatprep.subr.mxu0 0.0
    %2687 = vmatpush1.xpose.msra.mxu0 0.0
    %2688 = vmatprep.subr.mxu0 0.0
    %2689 = vmatpush1.xpose.msra.mxu0 0.0
    %2690 = vmatprep.subr.mxu0 0.0
    %2691 = vmatpush1.xpose.msra.mxu0 0.0
    %2692 = vmatprep.subr.mxu0 0.0
    %2693 = vmatpush1.xpose.msra.mxu0 0.0
    %2694 = vmatprep.mubr.f32.mxu0 0.0
    %2695 = vmatmul.mubr.f32.gmra.mrb[0].mxu0 %v2614
    %v2696 = vpop.f32.mrb[0].mxu0
    %v2697 = vadd.f32 0.0, %v2696
    %v2698 = vpop.f32.mrb[0].mxu0
    %2699 = vmatprep.mubr.f32.mxu0 0.0
    %2700 = vmatmul.mubr.f32.gmra.mrb[0].mxu0 %v2616
    %v2701 = vpop.f32.mrb[0].mxu0
    %v2702 = vadd.f32 0.0, %v2701
    %v2703 = vpop.f32.mrb[0].mxu0
    %2704 = vdwg.mxu0
    %2707 = vrot.lane.b32.xlu0 %v2584, 96
    %v2708 = vpop.permute.xlu0 %2707
    %2709 = vrot.lane.b32.xlu0 %v2585, 96
    %v2710 = vpop.permute.xlu0 %2709
    %v2711 = vsel %vm37, %v2708, 0
    %v2713 = vsel %vm37, %v2710, 0
    %v2716 = vsel %vm37, %v2600, 0
    %v2719 = vsel %vm37, %v2601, 0
    %v2722 = vsel %vm37, %v2602, 0
    %v2725 = vsel %vm37, %v2603, 0
    %2727 = vmatprep.subr.mxu0 0.0
    %2728 = vmatpush1.xpose.msra.mxu0 %v2716
    %2729 = vmatprep.subr.mxu0 0.0
    %2730 = vmatpush1.xpose.msra.mxu0 %v2719
    %2731 = vmatprep.subr.mxu0 0.0
    %2732 = vmatpush1.xpose.msra.mxu0 %v2722
    %2733 = vmatprep.subr.mxu0 0.0
    %2734 = vmatpush1.xpose.msra.mxu0 %v2725
    %2735 = vmatprep.subr.mxu0 0.0
    %2736 = vmatpush1.xpose.msra.mxu0 0.0
    %2737 = vmatprep.subr.mxu0 0.0
    %2738 = vmatpush1.xpose.msra.mxu0 0.0
    %2739 = vmatprep.subr.mxu0 0.0
    %2740 = vmatpush1.xpose.msra.mxu0 0.0
    %2741 = vmatprep.subr.mxu0 0.0
    %2742 = vmatpush1.xpose.msra.mxu0 0.0
    %2743 = vmatprep.subr.mxu0 0.0
    %2744 = vmatpush1.xpose.msra.mxu0 0.0
    %2745 = vmatprep.subr.mxu0 0.0
    %2746 = vmatpush1.xpose.msra.mxu0 0.0
    %2747 = vmatprep.subr.mxu0 0.0
    %2748 = vmatpush1.xpose.msra.mxu0 0.0
    %2749 = vmatprep.subr.mxu0 0.0
    %2750 = vmatpush1.xpose.msra.mxu0 0.0
    %2751 = vmatprep.subr.mxu0 0.0
    %2752 = vmatpush1.xpose.msra.mxu0 0.0
    %2753 = vmatprep.subr.mxu0 0.0
    %2754 = vmatpush1.xpose.msra.mxu0 0.0
    %2755 = vmatprep.subr.mxu0 0.0
    %2756 = vmatpush1.xpose.msra.mxu0 0.0
    %2757 = vmatprep.subr.mxu0 0.0
    %2758 = vmatpush1.xpose.msra.mxu0 0.0
    %2759 = vmatprep.subr.mxu0 0.0
    %2760 = vmatpush1.xpose.msra.mxu0 0.0
    %2761 = vmatprep.subr.mxu0 0.0
    %2762 = vmatpush1.xpose.msra.mxu0 0.0
    %2763 = vmatprep.subr.mxu0 0.0
    %2764 = vmatpush1.xpose.msra.mxu0 0.0
    %2765 = vmatprep.subr.mxu0 0.0
    %2766 = vmatpush1.xpose.msra.mxu0 0.0
    %2767 = vmatprep.subr.mxu0 0.0
    %2768 = vmatpush1.xpose.msra.mxu0 0.0
    %2769 = vmatprep.subr.mxu0 0.0
    %2770 = vmatpush1.xpose.msra.mxu0 0.0
    %2771 = vmatprep.subr.mxu0 0.0
    %2772 = vmatpush1.xpose.msra.mxu0 0.0
    %2773 = vmatprep.subr.mxu0 0.0
    %2774 = vmatpush1.xpose.msra.mxu0 0.0
    %2775 = vmatprep.subr.mxu0 0.0
    %2776 = vmatpush1.xpose.msra.mxu0 0.0
    %2777 = vmatprep.subr.mxu0 0.0
    %2778 = vmatpush1.xpose.msra.mxu0 0.0
    %2779 = vmatprep.subr.mxu0 0.0
    %2780 = vmatpush1.xpose.msra.mxu0 0.0
    %2781 = vmatprep.subr.mxu0 0.0
    %2782 = vmatpush1.xpose.msra.mxu0 0.0
    %2783 = vmatprep.subr.mxu0 0.0
    %2784 = vmatpush1.xpose.msra.mxu0 0.0
    %2785 = vmatprep.subr.mxu0 0.0
    %2786 = vmatpush1.xpose.msra.mxu0 0.0
    %2787 = vmatprep.subr.mxu0 0.0
    %2788 = vmatpush1.xpose.msra.mxu0 0.0
    %2789 = vmatprep.subr.mxu0 0.0
    %2790 = vmatpush1.xpose.msra.mxu0 0.0
    %2791 = vmatprep.mubr.f32.mxu0 0.0
    %2792 = vmatmul.mubr.f32.gmra.mrb[0].mxu0 %v2711
    %v2793 = vpop.f32.mrb[0].mxu0
    %v2794 = vadd.f32 %v2697, %v2793
    %v2795 = vpop.f32.mrb[0].mxu0
    %2796 = vmatprep.mubr.f32.mxu0 0.0
    %2797 = vmatmul.mubr.f32.gmra.mrb[0].mxu0 %v2713
    %v2798 = vpop.f32.mrb[0].mxu0
    %v2799 = vadd.f32 %v2702, %v2798
    %v2800 = vpop.f32.mrb[0].mxu0
    %2801 = vdwg.mxu0
    %v2802 = vld [vmem:[%s3 + $0x4] sm:$0x1]
    %v2803 = vlaneseq
    %v2804 = vshrl.u32 %v2803, 7
    %v2805 = vsub.s32 0, %v2804
    %v2806 = vrot.slane %v2802, %v2805
    %v2807 = vadd.f32 %v2794, %v2806
    %v2808 = vadd.f32 %v2799, %v2806
    %v2809 = vadd.f32 %v18, %v2807
    %v2810 = vadd.f32 %v19, %v2808
    %v2811 = vld [vmem:[%s1 + $0x1c0] sm:$0xff]
    %v2812 = vld [vmem:[%s1 + $0x1c8] sm:$0xff]
    %v2813 = vld [vmem:[%s1 + $0x1d0] sm:$0xff]
    %v2814 = vld [vmem:[%s1 + $0x1d8] sm:$0xff]
    %v2815 = vld [vmem:[%s1 + $0x1e0] sm:$0xff]
    %v2816 = vld [vmem:[%s1 + $0x1e8] sm:$0xff]
    %v2817 = vld [vmem:[%s1 + $0x1f0] sm:$0xff]
    %v2818 = vld [vmem:[%s1 + $0x1f8] sm:$0xff]
    %v2819 = vld [vmem:[%s1 + $0x200] sm:$0xff]
    %v2820 = vld [vmem:[%s1 + $0x208] sm:$0xff]
    %v2821 = vld [vmem:[%s1 + $0x210] sm:$0xff]
    %v2822 = vld [vmem:[%s1 + $0x218] sm:$0xff]
    %v2823 = vld [vmem:[%s1 + $0x220] sm:$0xff]
    %v2824 = vld [vmem:[%s1 + $0x228] sm:$0xff]
    %v2825 = vld [vmem:[%s1 + $0x230] sm:$0xff]
    %v2826 = vld [vmem:[%s1 + $0x238] sm:$0xff]
    %v2827 = vld [vmem:[%s1 + $0x240] sm:$0xff]
    %v2828 = vld [vmem:[%s1 + $0x248] sm:$0xff]
    %v2829 = vld [vmem:[%s1 + $0x250] sm:$0xff]
    %v2830 = vld [vmem:[%s1 + $0x258] sm:$0xff]
    %v2831 = vld [vmem:[%s1 + $0x260] sm:$0xff]
    %v2832 = vld [vmem:[%s1 + $0x268] sm:$0xff]
    %v2833 = vld [vmem:[%s1 + $0x270] sm:$0xff]
    %v2834 = vld [vmem:[%s1 + $0x278] sm:$0xff]
    %v2836 = vsel %vm37, %v2809, 0
    %v2839 = vsel %vm37, %v2810, 0
    %v2842 = vsel %vm37, %v2811, 0
    %v2845 = vsel %vm37, %v2812, 0
    %v2848 = vsel %vm37, %v2813, 0
    %v2851 = vsel %vm37, %v2814, 0
    %v2854 = vsel %vm37, %v2815, 0
    %v2857 = vsel %vm37, %v2816, 0
    %v2860 = vsel %vm37, %v2817, 0
    %v2863 = vsel %vm37, %v2818, 0
    %v2866 = vsel %vm37, %v2819, 0
    %v2869 = vsel %vm37, %v2820, 0
    %v2872 = vsel %vm37, %v2821, 0
    %v2875 = vsel %vm37, %v2822, 0
    %v2878 = vsel %vm37, %v2823, 0
    %v2881 = vsel %vm37, %v2824, 0
    %v2884 = vsel %vm37, %v2825, 0
    %v2887 = vsel %vm37, %v2826, 0
    %v2890 = vsel %vm37, %v2827, 0
    %v2893 = vsel %vm37, %v2828, 0
    %v2896 = vsel %vm37, %v2829, 0
    %v2899 = vsel %vm37, %v2830, 0
    %v2902 = vsel %vm37, %v2831, 0
    %v2905 = vsel %vm37, %v2832, 0
    %v2908 = vsel %vm37, %v2833, 0
    %v2911 = vsel %vm37, %v2834, 0
    %2913 = vmatprep.subr.mxu0 0.0
    %2914 = vmatpush1.xpose.msra.mxu0 %v2842
    %2915 = vmatprep.subr.mxu0 0.0
    %2916 = vmatpush1.xpose.msra.mxu0 %v2845
    %2917 = vmatprep.subr.mxu0 0.0
    %2918 = vmatpush1.xpose.msra.mxu0 %v2848
    %2919 = vmatprep.subr.mxu0 0.0
    %2920 = vmatpush1.xpose.msra.mxu0 %v2851
    %2921 = vmatprep.subr.mxu0 0.0
    %2922 = vmatpush1.xpose.msra.mxu0 %v2854
    %2923 = vmatprep.subr.mxu0 0.0
    %2924 = vmatpush1.xpose.msra.mxu0 %v2857
    %2925 = vmatprep.subr.mxu0 0.0
    %2926 = vmatpush1.xpose.msra.mxu0 %v2860
    %2927 = vmatprep.subr.mxu0 0.0
    %2928 = vmatpush1.xpose.msra.mxu0 %v2863
    %2929 = vmatprep.subr.mxu0 0.0
    %2930 = vmatpush1.xpose.msra.mxu0 %v2866
    %2931 = vmatprep.subr.mxu0 0.0
    %2932 = vmatpush1.xpose.msra.mxu0 %v2869
    %2933 = vmatprep.subr.mxu0 0.0
    %2934 = vmatpush1.xpose.msra.mxu0 %v2872
    %2935 = vmatprep.subr.mxu0 0.0
    %2936 = vmatpush1.xpose.msra.mxu0 %v2875
    %2937 = vmatprep.subr.mxu0 0.0
    %2938 = vmatpush1.xpose.msra.mxu0 %v2878
    %2939 = vmatprep.subr.mxu0 0.0
    %2940 = vmatpush1.xpose.msra.mxu0 %v2881
    %2941 = vmatprep.subr.mxu0 0.0
    %2942 = vmatpush1.xpose.msra.mxu0 %v2884
    %2943 = vmatprep.subr.mxu0 0.0
    %2944 = vmatpush1.xpose.msra.mxu0 %v2887
    %2945 = vmatprep.subr.mxu0 0.0
    %2946 = vmatpush1.xpose.msra.mxu0 %v2890
    %2947 = vmatprep.subr.mxu0 0.0
    %2948 = vmatpush1.xpose.msra.mxu0 %v2893
    %2949 = vmatprep.subr.mxu0 0.0
    %2950 = vmatpush1.xpose.msra.mxu0 %v2896
    %2951 = vmatprep.subr.mxu0 0.0
    %2952 = vmatpush1.xpose.msra.mxu0 %v2899
    %2953 = vmatprep.subr.mxu0 0.0
    %2954 = vmatpush1.xpose.msra.mxu0 %v2902
    %2955 = vmatprep.subr.mxu0 0.0
    %2956 = vmatpush1.xpose.msra.mxu0 %v2905
    %2957 = vmatprep.subr.mxu0 0.0
    %2958 = vmatpush1.xpose.msra.mxu0 %v2908
    %2959 = vmatprep.subr.mxu0 0.0
    %2960 = vmatpush1.xpose.msra.mxu0 %v2911
    %2961 = vmatprep.subr.mxu0 0.0
    %2962 = vmatpush1.xpose.msra.mxu0 0.0
    %2963 = vmatprep.subr.mxu0 0.0
    %2964 = vmatpush1.xpose.msra.mxu0 0.0
    %2965 = vmatprep.subr.mxu0 0.0
    %2966 = vmatpush1.xpose.msra.mxu0 0.0
    %2967 = vmatprep.subr.mxu0 0.0
    %2968 = vmatpush1.xpose.msra.mxu0 0.0
    %2969 = vmatprep.subr.mxu0 0.0
    %2970 = vmatpush1.xpose.msra.mxu0 0.0
    %2971 = vmatprep.subr.mxu0 0.0
    %2972 = vmatpush1.xpose.msra.mxu0 0.0
    %2973 = vmatprep.subr.mxu0 0.0
    %2974 = vmatpush1.xpose.msra.mxu0 0.0
    %2975 = vmatprep.subr.mxu0 0.0
    %2976 = vmatpush1.xpose.msra.mxu0 0.0
    %2977 = vmatprep.mubr.f32.mxu0 0.0
    %2978 = vmatmul.mubr.f32.gmra.mrb[0].mxu0 %v2836
    %v2979 = vpop.f32.mrb[0].mxu0
    %v2980 = vadd.f32 0.0, %v2979
    %v2981 = vpop.f32.mrb[0].mxu0
    %v2982 = vadd.f32 0.0, %v2981
    %2983 = vmatprep.mubr.f32.mxu0 0.0
    %2984 = vmatmul.mubr.f32.gmra.mrb[0].mxu0 %v2839
    %v2985 = vpop.f32.mrb[0].mxu0
    %v2986 = vadd.f32 0.0, %v2985
    %v2987 = vpop.f32.mrb[0].mxu0
    %v2988 = vadd.f32 0.0, %v2987
    %2989 = vdwg.mxu0
    %v2990 = vld [vmem:[%s3 + $0x5] sm:$0x1]
    %v2991 = vlaneseq
    %v2992 = vshrl.u32 %v2991, 7
    %v2993 = vsub.s32 0, %v2992
    %v2994 = vrot.slane %v2990, %v2993
    %v2995 = vadd.f32 %v2980, %v2994
    %v2996 = vadd.f32 %v2986, %v2994
    %v2997 = vld [vmem:[%s3 + $0x6] sm:$0x1]
    %v2998 = vlaneseq
    %v2999 = vshrl.u32 %v2998, 7
    %v3000 = vsub.s32 0, %v2999
    %v3001 = vrot.slane %v2997, %v3000
    %3003 = vrot.lane.b32.xlu0 %v3001, 96
    %v3004 = vpop.permute.xlu0 %3003
    %v3006 = vadd.f32 %v2980, %v3004
    %v3007 = vadd.f32 %v2982, %v3004
    %v3008 = vadd.f32 %v2986, %v3004
    %v3009 = vadd.f32 %v2988, %v3004
    %3011 = vrot.lane.b32.xlu0 %v2995, 96
    %v3012 = vpop.permute.xlu0 %3011
    %v3013 = vsel %vm37, %v2995, 0
    %v3015 = vsel %vm37, %v3012, 0
    %3017 = vmatprep.subr.mxu0 0.0
    %3018 = vmatpush1.xpose.msra.mxu0 %v3015
    %3019 = vmatprep.subr.mxu0 0.0
    %3020 = vmatpush1.xpose.msra.mxu0 0.0
    %3021 = vmatprep.subr.mxu0 0.0
    %3022 = vmatpush1.xpose.msra.mxu0 0.0
    %3023 = vmatprep.subr.mxu0 0.0
    %3024 = vmatpush1.xpose.msra.mxu0 0.0
    %3025 = vmatprep.subr.mxu0 0.0
    %3026 = vmatpush1.xpose.msra.mxu0 0.0
    %3027 = vmatprep.subr.mxu0 0.0
    %3028 = vmatpush1.xpose.msra.mxu0 0.0
    %3029 = vmatprep.subr.mxu0 0.0
    %3030 = vmatpush1.xpose.msra.mxu0 0.0
    %3031 = vmatprep.subr.mxu0 0.0
    %3032 = vmatpush1.xpose.msra.mxu0 0.0
    %3033 = vmatprep.subr.mxu0 0.0
    %3034 = vmatpush1.xpose.msra.mxu0 0.0
    %3035 = vmatprep.subr.mxu0 0.0
    %3036 = vmatpush1.xpose.msra.mxu0 0.0
    %3037 = vmatprep.subr.mxu0 0.0
    %3038 = vmatpush1.xpose.msra.mxu0 0.0
    %3039 = vmatprep.subr.mxu0 0.0
    %3040 = vmatpush1.xpose.msra.mxu0 0.0
    %3041 = vmatprep.subr.mxu0 0.0
    %3042 = vmatpush1.xpose.msra.mxu0 0.0
    %3043 = vmatprep.subr.mxu0 0.0
    %3044 = vmatpush1.xpose.msra.mxu0 0.0
    %3045 = vmatprep.subr.mxu0 0.0
    %3046 = vmatpush1.xpose.msra.mxu0 0.0
    %3047 = vmatprep.subr.mxu0 0.0
    %3048 = vmatpush1.xpose.msra.mxu0 0.0
    %3049 = vmatprep.subr.mxu0 0.0
    %3050 = vmatpush1.xpose.msra.mxu0 0.0
    %3051 = vmatprep.subr.mxu0 0.0
    %3052 = vmatpush1.xpose.msra.mxu0 0.0
    %3053 = vmatprep.subr.mxu0 0.0
    %3054 = vmatpush1.xpose.msra.mxu0 0.0
    %3055 = vmatprep.subr.mxu0 0.0
    %3056 = vmatpush1.xpose.msra.mxu0 0.0
    %3057 = vmatprep.subr.mxu0 0.0
    %3058 = vmatpush1.xpose.msra.mxu0 0.0
    %3059 = vmatprep.subr.mxu0 0.0
    %3060 = vmatpush1.xpose.msra.mxu0 0.0
    %3061 = vmatprep.subr.mxu0 0.0
    %3062 = vmatpush1.xpose.msra.mxu0 0.0
    %3063 = vmatprep.subr.mxu0 0.0
    %3064 = vmatpush1.xpose.msra.mxu0 0.0
    %3065 = vmatprep.subr.mxu0 0.0
    %3066 = vmatpush1.xpose.msra.mxu0 0.0
    %3067 = vmatprep.subr.mxu0 0.0
    %3068 = vmatpush1.xpose.msra.mxu0 0.0
    %3069 = vmatprep.subr.mxu0 0.0
    %3070 = vmatpush1.xpose.msra.mxu0 0.0
    %3071 = vmatprep.subr.mxu0 0.0
    %3072 = vmatpush1.xpose.msra.mxu0 0.0
    %3073 = vmatprep.subr.mxu0 0.0
    %3074 = vmatpush1.xpose.msra.mxu0 0.0
    %3075 = vmatprep.subr.mxu0 0.0
    %3076 = vmatpush1.xpose.msra.mxu0 0.0
    %3077 = vmatprep.subr.mxu0 0.0
    %3078 = vmatpush1.xpose.msra.mxu0 0.0
    %3079 = vmatprep.subr.mxu0 0.0
    %3080 = vmatpush1.xpose.msra.mxu0 0.0
    %3081 = vmatprep.mubr.f32.mxu0 0.0
    %3082 = vmatmul.mubr.f32.gmra.mrb[0].mxu0 %v3013
    %v3083 = vpop.f32.mrb[0].mxu0
    %v3084 = vadd.f32 0.0, %v3083
    %v3085 = vpop.f32.mrb[0].mxu0
    %3086 = vdwg.mxu0
    %3088 = vrot.lane.b32.xlu0 %v2996, 96
    %v3089 = vpop.permute.xlu0 %3088
    %v3090 = vsel %vm37, %v2996, 0
    %v3092 = vsel %vm37, %v3089, 0
    %3094 = vmatprep.subr.mxu0 0.0
    %3095 = vmatpush1.xpose.msra.mxu0 %v3092
    %3096 = vmatprep.subr.mxu0 0.0
    %3097 = vmatpush1.xpose.msra.mxu0 0.0
    %3098 = vmatprep.subr.mxu0 0.0
    %3099 = vmatpush1.xpose.msra.mxu0 0.0
    %3100 = vmatprep.subr.mxu0 0.0
    %3101 = vmatpush1.xpose.msra.mxu0 0.0
    %3102 = vmatprep.subr.mxu0 0.0
    %3103 = vmatpush1.xpose.msra.mxu0 0.0
    %3104 = vmatprep.subr.mxu0 0.0
    %3105 = vmatpush1.xpose.msra.mxu0 0.0
    %3106 = vmatprep.subr.mxu0 0.0
    %3107 = vmatpush1.xpose.msra.mxu0 0.0
    %3108 = vmatprep.subr.mxu0 0.0
    %3109 = vmatpush1.xpose.msra.mxu0 0.0
    %3110 = vmatprep.subr.mxu0 0.0
    %3111 = vmatpush1.xpose.msra.mxu0 0.0
    %3112 = vmatprep.subr.mxu0 0.0
    %3113 = vmatpush1.xpose.msra.mxu0 0.0
    %3114 = vmatprep.subr.mxu0 0.0
    %3115 = vmatpush1.xpose.msra.mxu0 0.0
    %3116 = vmatprep.subr.mxu0 0.0
    %3117 = vmatpush1.xpose.msra.mxu0 0.0
    %3118 = vmatprep.subr.mxu0 0.0
    %3119 = vmatpush1.xpose.msra.mxu0 0.0
    %3120 = vmatprep.subr.mxu0 0.0
    %3121 = vmatpush1.xpose.msra.mxu0 0.0
    %3122 = vmatprep.subr.mxu0 0.0
    %3123 = vmatpush1.xpose.msra.mxu0 0.0
    %3124 = vmatprep.subr.mxu0 0.0
    %3125 = vmatpush1.xpose.msra.mxu0 0.0
    %3126 = vmatprep.subr.mxu0 0.0
    %3127 = vmatpush1.xpose.msra.mxu0 0.0
    %3128 = vmatprep.subr.mxu0 0.0
    %3129 = vmatpush1.xpose.msra.mxu0 0.0
    %3130 = vmatprep.subr.mxu0 0.0
    %3131 = vmatpush1.xpose.msra.mxu0 0.0
    %3132 = vmatprep.subr.mxu0 0.0
    %3133 = vmatpush1.xpose.msra.mxu0 0.0
    %3134 = vmatprep.subr.mxu0 0.0
    %3135 = vmatpush1.xpose.msra.mxu0 0.0
    %3136 = vmatprep.subr.mxu0 0.0
    %3137 = vmatpush1.xpose.msra.mxu0 0.0
    %3138 = vmatprep.subr.mxu0 0.0
    %3139 = vmatpush1.xpose.msra.mxu0 0.0
    %3140 = vmatprep.subr.mxu0 0.0
    %3141 = vmatpush1.xpose.msra.mxu0 0.0
    %3142 = vmatprep.subr.mxu0 0.0
    %3143 = vmatpush1.xpose.msra.mxu0 0.0
    %3144 = vmatprep.subr.mxu0 0.0
    %3145 = vmatpush1.xpose.msra.mxu0 0.0
    %3146 = vmatprep.subr.mxu0 0.0
    %3147 = vmatpush1.xpose.msra.mxu0 0.0
    %3148 = vmatprep.subr.mxu0 0.0
    %3149 = vmatpush1.xpose.msra.mxu0 0.0
    %3150 = vmatprep.subr.mxu0 0.0
    %3151 = vmatpush1.xpose.msra.mxu0 0.0
    %3152 = vmatprep.subr.mxu0 0.0
    %3153 = vmatpush1.xpose.msra.mxu0 0.0
    %3154 = vmatprep.subr.mxu0 0.0
    %3155 = vmatpush1.xpose.msra.mxu0 0.0
    %3156 = vmatprep.subr.mxu0 0.0
    %3157 = vmatpush1.xpose.msra.mxu0 0.0
    %3158 = vmatprep.mubr.f32.mxu0 0.0
    %3159 = vmatmul.mubr.f32.gmra.mrb[0].mxu0 %v3090
    %v3160 = vpop.f32.mrb[0].mxu0
    %v3161 = vadd.f32 0.0, %v3160
    %v3162 = vpop.f32.mrb[0].mxu0
    %3163 = vdwg.mxu0
    %v3164 = vmul.f32 %v3084, 0.17677669
    %v3165 = vmul.f32 %v3161, 0.17677669
    %vm3166 = vcmask 64512
    %v3167 = vsel %vm3166, %v3164, -inf
    %3168 = vmax.xlane.f32.xlu0 %v3167
    %v3169 = vpop.xlane.xlu0 %3168
    %v3170 = vsel %vm3166, %v3165, -inf
    %3171 = vmax.xlane.f32.xlu0 %v3170
    %v3172 = vpop.xlane.xlu0 %3171
    %v3173 = vsub.f32 %v3164, %v3169
    %v3174 = vsub.f32 %v3165, %v3172
    %v3175 = vmul.f32 %v3173, 1.442695
    %v3176 = vpow.pop %v3175
    %v3177 = vmul.f32 %v3174, 1.442695
    %v3178 = vpow.pop %v3177
    %v3179 = vsel %vm3166, %v3176, 0.0
    %3180 = vadd.xlane.f32.xlu0 %v3179
    %v3181 = vpop.xlane.xlu0 %3180
    %v3182 = vsel %vm3166, %v3178, 0.0
    %3183 = vadd.xlane.f32.xlu0 %v3182
    %v3184 = vpop.xlane.xlu0 %3183
    %v3185 = vrcp.pop %v3181
    %v3186 = vrcp.pop %v3184
    %v3187 = vmul.f32 %v3176, %v3185
    %v3188 = vmul.f32 %v3178, %v3186
    %3189 = vrot.lane.b32.xlu0 %v2995, 64
    %v3190 = vpop.permute.xlu0 %3189
    %v3193 = vsel %vm3166, %v3187, 0
    %3195 = vmatprep.subr.mxu0 0.0
    %3196 = vmatpush1.msra.mxu0 %v3190
    %3197 = vmatprep.subr.mxu0 0.0
    %3198 = vmatpush1.msra.mxu0 0.0
    %3199 = vmatprep.subr.mxu0 0.0
    %3200 = vmatpush1.msra.mxu0 0.0
    %3201 = vmatprep.subr.mxu0 0.0
    %3202 = vmatpush1.msra.mxu0 0.0
    %3203 = vmatprep.subr.mxu0 0.0
    %3204 = vmatpush1.msra.mxu0 0.0
    %3205 = vmatprep.subr.mxu0 0.0
    %3206 = vmatpush1.msra.mxu0 0.0
    %3207 = vmatprep.subr.mxu0 0.0
    %3208 = vmatpush1.msra.mxu0 0.0
    %3209 = vmatprep.subr.mxu0 0.0
    %3210 = vmatpush1.msra.mxu0 0.0
    %3211 = vmatprep.subr.mxu0 0.0
    %3212 = vmatpush1.msra.mxu0 0.0
    %3213 = vmatprep.subr.mxu0 0.0
    %3214 = vmatpush1.msra.mxu0 0.0
    %3215 = vmatprep.subr.mxu0 0.0
    %3216 = vmatpush1.msra.mxu0 0.0
    %3217 = vmatprep.subr.mxu0 0.0
    %3218 = vmatpush1.msra.mxu0 0.0
    %3219 = vmatprep.subr.mxu0 0.0
    %3220 = vmatpush1.msra.mxu0 0.0
    %3221 = vmatprep.subr.mxu0 0.0
    %3222 = vmatpush1.msra.mxu0 0.0
    %3223 = vmatprep.subr.mxu0 0.0
    %3224 = vmatpush1.msra.mxu0 0.0
    %3225 = vmatprep.subr.mxu0 0.0
    %3226 = vmatpush1.msra.mxu0 0.0
    %3227 = vmatprep.subr.mxu0 0.0
    %3228 = vmatpush1.msra.mxu0 0.0
    %3229 = vmatprep.subr.mxu0 0.0
    %3230 = vmatpush1.msra.mxu0 0.0
    %3231 = vmatprep.subr.mxu0 0.0
    %3232 = vmatpush1.msra.mxu0 0.0
    %3233 = vmatprep.subr.mxu0 0.0
    %3234 = vmatpush1.msra.mxu0 0.0
    %3235 = vmatprep.subr.mxu0 0.0
    %3236 = vmatpush1.msra.mxu0 0.0
    %3237 = vmatprep.subr.mxu0 0.0
    %3238 = vmatpush1.msra.mxu0 0.0
    %3239 = vmatprep.subr.mxu0 0.0
    %3240 = vmatpush1.msra.mxu0 0.0
    %3241 = vmatprep.subr.mxu0 0.0
    %3242 = vmatpush1.msra.mxu0 0.0
    %3243 = vmatprep.subr.mxu0 0.0
    %3244 = vmatpush1.msra.mxu0 0.0
    %3245 = vmatprep.subr.mxu0 0.0
    %3246 = vmatpush1.msra.mxu0 0.0
    %3247 = vmatprep.subr.mxu0 0.0
    %3248 = vmatpush1.msra.mxu0 0.0
    %3249 = vmatprep.subr.mxu0 0.0
    %3250 = vmatpush1.msra.mxu0 0.0
    %3251 = vmatprep.subr.mxu0 0.0
    %3252 = vmatpush1.msra.mxu0 0.0
    %3253 = vmatprep.subr.mxu0 0.0
    %3254 = vmatpush1.msra.mxu0 0.0
    %3255 = vmatprep.subr.mxu0 0.0
    %3256 = vmatpush1.msra.mxu0 0.0
    %3257 = vmatprep.subr.mxu0 0.0
    %3258 = vmatpush1.msra.mxu0 0.0
    %3259 = vmatprep.mubr.f32.mxu0 0.0
    %3260 = vmatmul.mubr.f32.gmra.mrb[0].mxu0 %v3193
    %v3261 = vpop.f32.mrb[0].mxu0
    %v3262 = vadd.f32 0.0, %v3261
    %v3263 = vpop.f32.mrb[0].mxu0
    %3264 = vdwg.mxu0
    %3265 = vrot.lane.b32.xlu0 %v2996, 64
    %v3266 = vpop.permute.xlu0 %3265
    %v3269 = vsel %vm3166, %v3188, 0
    %3271 = vmatprep.subr.mxu0 0.0
    %3272 = vmatpush1.msra.mxu0 %v3266
    %3273 = vmatprep.subr.mxu0 0.0
    %3274 = vmatpush1.msra.mxu0 0.0
    %3275 = vmatprep.subr.mxu0 0.0
    %3276 = vmatpush1.msra.mxu0 0.0
    %3277 = vmatprep.subr.mxu0 0.0
    %3278 = vmatpush1.msra.mxu0 0.0
    %3279 = vmatprep.subr.mxu0 0.0
    %3280 = vmatpush1.msra.mxu0 0.0
    %3281 = vmatprep.subr.mxu0 0.0
    %3282 = vmatpush1.msra.mxu0 0.0
    %3283 = vmatprep.subr.mxu0 0.0
    %3284 = vmatpush1.msra.mxu0 0.0
    %3285 = vmatprep.subr.mxu0 0.0
    %3286 = vmatpush1.msra.mxu0 0.0
    %3287 = vmatprep.subr.mxu0 0.0
    %3288 = vmatpush1.msra.mxu0 0.0
    %3289 = vmatprep.subr.mxu0 0.0
    %3290 = vmatpush1.msra.mxu0 0.0
    %3291 = vmatprep.subr.mxu0 0.0
    %3292 = vmatpush1.msra.mxu0 0.0
    %3293 = vmatprep.subr.mxu0 0.0
    %3294 = vmatpush1.msra.mxu0 0.0
    %3295 = vmatprep.subr.mxu0 0.0
    %3296 = vmatpush1.msra.mxu0 0.0
    %3297 = vmatprep.subr.mxu0 0.0
    %3298 = vmatpush1.msra.mxu0 0.0
    %3299 = vmatprep.subr.mxu0 0.0
    %3300 = vmatpush1.msra.mxu0 0.0
    %3301 = vmatprep.subr.mxu0 0.0
    %3302 = vmatpush1.msra.mxu0 0.0
    %3303 = vmatprep.subr.mxu0 0.0
    %3304 = vmatpush1.msra.mxu0 0.0
    %3305 = vmatprep.subr.mxu0 0.0
    %3306 = vmatpush1.msra.mxu0 0.0
    %3307 = vmatprep.subr.mxu0 0.0
    %3308 = vmatpush1.msra.mxu0 0.0
    %3309 = vmatprep.subr.mxu0 0.0
    %3310 = vmatpush1.msra.mxu0 0.0
    %3311 = vmatprep.subr.mxu0 0.0
    %3312 = vmatpush1.msra.mxu0 0.0
    %3313 = vmatprep.subr.mxu0 0.0
    %3314 = vmatpush1.msra.mxu0 0.0
    %3315 = vmatprep.subr.mxu0 0.0
    %3316 = vmatpush1.msra.mxu0 0.0
    %3317 = vmatprep.subr.mxu0 0.0
    %3318 = vmatpush1.msra.mxu0 0.0
    %3319 = vmatprep.subr.mxu0 0.0
    %3320 = vmatpush1.msra.mxu0 0.0
    %3321 = vmatprep.subr.mxu0 0.0
    %3322 = vmatpush1.msra.mxu0 0.0
    %3323 = vmatprep.subr.mxu0 0.0
    %3324 = vmatpush1.msra.mxu0 0.0
    %3325 = vmatprep.subr.mxu0 0.0
    %3326 = vmatpush1.msra.mxu0 0.0
    %3327 = vmatprep.subr.mxu0 0.0
    %3328 = vmatpush1.msra.mxu0 0.0
    %3329 = vmatprep.subr.mxu0 0.0
    %3330 = vmatpush1.msra.mxu0 0.0
    %3331 = vmatprep.subr.mxu0 0.0
    %3332 = vmatpush1.msra.mxu0 0.0
    %3333 = vmatprep.subr.mxu0 0.0
    %3334 = vmatpush1.msra.mxu0 0.0
    %3335 = vmatprep.mubr.f32.mxu0 0.0
    %3336 = vmatmul.mubr.f32.gmra.mrb[0].mxu0 %v3269
    %v3337 = vpop.f32.mrb[0].mxu0
    %v3338 = vadd.f32 0.0, %v3337
    %v3339 = vpop.f32.mrb[0].mxu0
    %3340 = vdwg.mxu0
    %v3341 = vadd.f32 %v2809, %v3262
    %v3342 = vadd.f32 %v2810, %v3338
    %v3343 = vsel %vm37, %v3341, 0.0
    %3344 = vadd.xlane.f32.xlu0 %v3343
    %v3345 = vpop.xlane.xlu0 %3344
    %v3346 = vsel %vm37, %v3342, 0.0
    %3347 = vadd.xlane.f32.xlu0 %v3346
    %v3348 = vpop.xlane.xlu0 %3347
    %v3349 = vrcp.pop 32.0
    %v3350 = vmul.f32 %v3345, %v3349
    %v3351 = vmul.f32 %v3348, %v3349
    %v3352 = vsub.f32 %v3341, %v3350
    %v3353 = vsub.f32 %v3342, %v3351
    %v3354 = vmul.f32 %v3352, %v3352
    %v3355 = vmul.f32 %v3353, %v3353
    %v3356 = vsel %vm37, %v3354, 0.0
    %3357 = vadd.xlane.f32.xlu0 %v3356
    %v3358 = vpop.xlane.xlu0 %3357
    %v3359 = vsel %vm37, %v3355, 0.0
    %3360 = vadd.xlane.f32.xlu0 %v3359
    %v3361 = vpop.xlane.xlu0 %3360
    %v3362 = vmul.f32 %v3358, %v3349
    %v3363 = vmul.f32 %v3361, %v3349
    %v3364 = vadd.f32 %v3362, 1e-05
    %v3365 = vadd.f32 %v3363, 1e-05
    %v3366 = vrsqrt.pop %v3364
    %v3367 = vrsqrt.pop %v3365
    %v3368 = vmul.f32 %v3352, %v3366
    %v3369 = vmul.f32 %v3353, %v3367
    %v3370 = vld [vmem:[%s3 + $0x7] sm:$0x1]
    %v3371 = vlaneseq
    %v3372 = vshrl.u32 %v3371, 7
    %v3373 = vsub.s32 0, %v3372
    %v3374 = vrot.slane %v3370, %v3373
    %v3375 = vmul.f32 %v3368, %v3374
    %v3376 = vmul.f32 %v3369, %v3374
    %v3377 = vld [vmem:[%s3 + $0x8] sm:$0x1]
    %v3378 = vlaneseq
    %v3379 = vshrl.u32 %v3378, 7
    %v3380 = vsub.s32 0, %v3379
    %v3381 = vrot.slane %v3377, %v3380
    %v3382 = vadd.f32 %v3375, %v3381
    %v3383 = vadd.f32 %v3376, %v3381
    %v3384 = vld [vmem:[%s1 + $0x280] sm:$0xff]
    %v3385 = vld [vmem:[%s1 + $0x288] sm:$0xff]
    %v3386 = vld [vmem:[%s1 + $0x290] sm:$0xff]
    %v3387 = vld [vmem:[%s1 + $0x298] sm:$0xff]
    %v3388 = vld [vmem:[%s3 + $0x9] sm:$0x1]
    %v3389 = vlaneseq
    %v3390 = vshrl.u32 %v3389, 7
    %v3391 = vsub.s32 0, %v3390
    %v3392 = vrot.slane %v3388, %v3391
    %v3394 = vsel %vm37, %v3382, 0
    %v3397 = vsel %vm37, %v3383, 0
    %v3400 = vsel %vm37, %v3384, 0
    %v3403 = vsel %vm37, %v3385, 0
    %v3406 = vsel %vm37, %v3386, 0
    %v3409 = vsel %vm37, %v3387, 0
    %3411 = vmatprep.subr.mxu0 0.0
    %3412 = vmatpush1.xpose.msra.mxu0 %v3400
    %3413 = vmatprep.subr.mxu0 0.0
    %3414 = vmatpush1.xpose.msra.mxu0 %v3403
    %3415 = vmatprep.subr.mxu0 0.0
    %3416 = vmatpush1.xpose.msra.mxu0 %v3406
    %3417 = vmatprep.subr.mxu0 0.0
    %3418 = vmatpush1.xpose.msra.mxu0 %v3409
    %3419 = vmatprep.subr.mxu0 0.0
    %3420 = vmatpush1.xpose.msra.mxu0 0.0
    %3421 = vmatprep.subr.mxu0 0.0
    %3422 = vmatpush1.xpose.msra.mxu0 0.0
    %3423 = vmatprep.subr.mxu0 0.0
    %3424 = vmatpush1.xpose.msra.mxu0 0.0
    %3425 = vmatprep.subr.mxu0 0.0
    %3426 = vmatpush1.xpose.msra.mxu0 0.0
    %3427 = vmatprep.subr.mxu0 0.0
    %3428 = vmatpush1.xpose.msra.mxu0 0.0
    %3429 = vmatprep.subr.mxu0 0.0
    %3430 = vmatpush1.xpose.msra.mxu0 0.0
    %3431 = vmatprep.subr.mxu0 0.0
    %3432 = vmatpush1.xpose.msra.mxu0 0.0
    %3433 = vmatprep.subr.mxu0 0.0
    %3434 = vmatpush1.xpose.msra.mxu0 0.0
    %3435 = vmatprep.subr.mxu0 0.0
    %3436 = vmatpush1.xpose.msra.mxu0 0.0
    %3437 = vmatprep.subr.mxu0 0.0
    %3438 = vmatpush1.xpose.msra.mxu0 0.0
    %3439 = vmatprep.subr.mxu0 0.0
    %3440 = vmatpush1.xpose.msra.mxu0 0.0
    %3441 = vmatprep.subr.mxu0 0.0
    %3442 = vmatpush1.xpose.msra.mxu0 0.0
    %3443 = vmatprep.subr.mxu0 0.0
    %3444 = vmatpush1.xpose.msra.mxu0 0.0
    %3445 = vmatprep.subr.mxu0 0.0
    %3446 = vmatpush1.xpose.msra.mxu0 0.0
    %3447 = vmatprep.subr.mxu0 0.0
    %3448 = vmatpush1.xpose.msra.mxu0 0.0
    %3449 = vmatprep.subr.mxu0 0.0
    %3450 = vmatpush1.xpose.msra.mxu0 0.0
    %3451 = vmatprep.subr.mxu0 0.0
    %3452 = vmatpush1.xpose.msra.mxu0 0.0
    %3453 = vmatprep.subr.mxu0 0.0
    %3454 = vmatpush1.xpose.msra.mxu0 0.0
    %3455 = vmatprep.subr.mxu0 0.0
    %3456 = vmatpush1.xpose.msra.mxu0 0.0
    %3457 = vmatprep.subr.mxu0 0.0
    %3458 = vmatpush1.xpose.msra.mxu0 0.0
    %3459 = vmatprep.subr.mxu0 0.0
    %3460 = vmatpush1.xpose.msra.mxu0 0.0
    %3461 = vmatprep.subr.mxu0 0.0
    %3462 = vmatpush1.xpose.msra.mxu0 0.0
    %3463 = vmatprep.subr.mxu0 0.0
    %3464 = vmatpush1.xpose.msra.mxu0 0.0
    %3465 = vmatprep.subr.mxu0 0.0
    %3466 = vmatpush1.xpose.msra.mxu0 0.0
    %3467 = vmatprep.subr.mxu0 0.0
    %3468 = vmatpush1.xpose.msra.mxu0 0.0
    %3469 = vmatprep.subr.mxu0 0.0
    %3470 = vmatpush1.xpose.msra.mxu0 0.0
    %3471 = vmatprep.subr.mxu0 0.0
    %3472 = vmatpush1.xpose.msra.mxu0 0.0
    %3473 = vmatprep.subr.mxu0 0.0
    %3474 = vmatpush1.xpose.msra.mxu0 0.0
    %3475 = vmatprep.mubr.f32.mxu0 0.0
    %3476 = vmatmul.mubr.f32.gmra.mrb[0].mxu0 %v3394
    %v3477 = vpop.f32.mrb[0].mxu0
    %v3478 = vadd.f32 %v3392, %v3477
    %v3479 = vpop.f32.mrb[0].mxu0
    %3480 = vmatprep.mubr.f32.mxu0 0.0
    %3481 = vmatmul.mubr.f32.gmra.mrb[0].mxu0 %v3397
    %v3482 = vpop.f32.mrb[0].mxu0
    %v3483 = vadd.f32 %v3392, %v3482
    %v3484 = vpop.f32.mrb[0].mxu0
    %3485 = vdwg.mxu0
    %v3486 = vmul.f32 %v3478, 0.5
    %v3487 = vmul.f32 %v3483, 0.5
    %v3488 = vmul.f32 %v3478, 0.70710677
    %v3489 = vmul.f32 %v3483, 0.70710677
    %v3490 = verf.f32.pop %v3488
    %v3491 = verf.f32.pop %v3489
    %v3492 = vadd.f32 %v3490, 1.0
    %v3493 = vadd.f32 %v3491, 1.0
    %v3494 = vmul.f32 %v3486, %v3492
    %v3495 = vmul.f32 %v3487, %v3493
    %v3496 = vadd.f32 %v3494, %v3382
    %v3497 = vadd.f32 %v3495, %v3383
    %v3498 = vsel %vm37, %v3496, 0.0
    %3499 = vadd.xlane.f32.xlu0 %v3498
    %v3500 = vpop.xlane.xlu0 %3499
    %v3501 = vsel %vm37, %v3497, 0.0
    %3502 = vadd.xlane.f32.xlu0 %v3501
    %v3503 = vpop.xlane.xlu0 %3502
    %v3504 = vmul.f32 %v3500, %v3349
    %v3505 = vmul.f32 %v3503, %v3349
    %v3506 = vsub.f32 %v3496, %v3504
    %v3507 = vsub.f32 %v3497, %v3505
    %v3508 = vmul.f32 %v3506, %v3506
    %v3509 = vmul.f32 %v3507, %v3507
    %v3510 = vsel %vm37, %v3508, 0.0
    %3511 = vadd.xlane.f32.xlu0 %v3510
    %v3512 = vpop.xlane.xlu0 %3511
    %v3513 = vsel %vm37, %v3509, 0.0
    %3514 = vadd.xlane.f32.xlu0 %v3513
    %v3515 = vpop.xlane.xlu0 %3514
    %v3516 = vmul.f32 %v3512, %v3349
    %v3517 = vmul.f32 %v3515, %v3349
    %v3518 = vadd.f32 %v3516, 1e-05
    %v3519 = vadd.f32 %v3517, 1e-05
    %v3520 = vrsqrt.pop %v3518
    %v3521 = vrsqrt.pop %v3519
    %v3522 = vmul.f32 %v3506, %v3520
    %v3523 = vmul.f32 %v3507, %v3521
    %v3524 = vld [vmem:[%s3 + $0xa] sm:$0x1]
    %v3525 = vlaneseq
    %v3526 = vshrl.u32 %v3525, 7
    %v3527 = vsub.s32 0, %v3526
    %v3528 = vrot.slane %v3524, %v3527
    %v3529 = vmul.f32 %v3522, %v3528
    %v3530 = vmul.f32 %v3523, %v3528
    %v3531 = vld [vmem:[%s3 + $0xb] sm:$0x1]
    %v3532 = vlaneseq
    %v3533 = vshrl.u32 %v3532, 7
    %v3534 = vsub.s32 0, %v3533
    %v3535 = vrot.slane %v3531, %v3534
    %v3536 = vadd.f32 %v3529, %v3535
    %v3537 = vadd.f32 %v3530, %v3535
    %v3538 = vld [vmem:[%s1 + $0x2c0] sm:$0xff]
    %v3539 = vld [vmem:[%s1 + $0x2c8] sm:$0xff]
    %v3540 = vld [vmem:[%s3 + $0xc] sm:$0x1]
    %v3541 = vlaneseq
    %v3542 = vshrl.u32 %v3541, 7
    %v3543 = vsub.s32 0, %v3542
    %v3544 = vrot.slane %v3540, %v3543
    %v3546 = vsel %vm37, %v3536, 0
    %v3549 = vsel %vm37, %v3537, 0
    %v3552 = vsel %vm37, %v3538, 0
    %v3555 = vsel %vm37, %v3539, 0
    %3557 = vmatprep.subr.mxu0 0.0
    %3558 = vmatpush1.xpose.msra.mxu0 %v3552
    %3559 = vmatprep.subr.mxu0 0.0
    %3560 = vmatpush1.xpose.msra.mxu0 %v3555
    %3561 = vmatprep.subr.mxu0 0.0
    %3562 = vmatpush1.xpose.msra.mxu0 0.0
    %3563 = vmatprep.subr.mxu0 0.0
    %3564 = vmatpush1.xpose.msra.mxu0 0.0
    %3565 = vmatprep.subr.mxu0 0.0
    %3566 = vmatpush1.xpose.msra.mxu0 0.0
    %3567 = vmatprep.subr.mxu0 0.0
    %3568 = vmatpush1.xpose.msra.mxu0 0.0
    %3569 = vmatprep.subr.mxu0 0.0
    %3570 = vmatpush1.xpose.msra.mxu0 0.0
    %3571 = vmatprep.subr.mxu0 0.0
    %3572 = vmatpush1.xpose.msra.mxu0 0.0
    %3573 = vmatprep.subr.mxu0 0.0
    %3574 = vmatpush1.xpose.msra.mxu0 0.0
    %3575 = vmatprep.subr.mxu0 0.0
    %3576 = vmatpush1.xpose.msra.mxu0 0.0
    %3577 = vmatprep.subr.mxu0 0.0
    %3578 = vmatpush1.xpose.msra.mxu0 0.0
    %3579 = vmatprep.subr.mxu0 0.0
    %3580 = vmatpush1.xpose.msra.mxu0 0.0
    %3581 = vmatprep.subr.mxu0 0.0
    %3582 = vmatpush1.xpose.msra.mxu0 0.0
    %3583 = vmatprep.subr.mxu0 0.0
    %3584 = vmatpush1.xpose.msra.mxu0 0.0
    %3585 = vmatprep.subr.mxu0 0.0
    %3586 = vmatpush1.xpose.msra.mxu0 0.0
    %3587 = vmatprep.subr.mxu0 0.0
    %3588 = vmatpush1.xpose.msra.mxu0 0.0
    %3589 = vmatprep.subr.mxu0 0.0
    %3590 = vmatpush1.xpose.msra.mxu0 0.0
    %3591 = vmatprep.subr.mxu0 0.0
    %3592 = vmatpush1.xpose.msra.mxu0 0.0
    %3593 = vmatprep.subr.mxu0 0.0
    %3594 = vmatpush1.xpose.msra.mxu0 0.0
    %3595 = vmatprep.subr.mxu0 0.0
    %3596 = vmatpush1.xpose.msra.mxu0 0.0
    %3597 = vmatprep.subr.mxu0 0.0
    %3598 = vmatpush1.xpose.msra.mxu0 0.0
    %3599 = vmatprep.subr.mxu0 0.0
    %3600 = vmatpush1.xpose.msra.mxu0 0.0
    %3601 = vmatprep.subr.mxu0 0.0
    %3602 = vmatpush1.xpose.msra.mxu0 0.0
    %3603 = vmatprep.subr.mxu0 0.0
    %3604 = vmatpush1.xpose.msra.mxu0 0.0
    %3605 = vmatprep.subr.mxu0 0.0
    %3606 = vmatpush1.xpose.msra.mxu0 0.0
    %3607 = vmatprep.subr.mxu0 0.0
    %3608 = vmatpush1.xpose.msra.mxu0 0.0
    %3609 = vmatprep.subr.mxu0 0.0
    %3610 = vmatpush1.xpose.msra.mxu0 0.0
    %3611 = vmatprep.subr.mxu0 0.0
    %3612 = vmatpush1.xpose.msra.mxu0 0.0
    %3613 = vmatprep.subr.mxu0 0.0
    %3614 = vmatpush1.xpose.msra.mxu0 0.0
    %3615 = vmatprep.subr.mxu0 0.0
    %3616 = vmatpush1.xpose.msra.mxu0 0.0
    %3617 = vmatprep.subr.mxu0 0.0
    %3618 = vmatpush1.xpose.msra.mxu0 0.0
    %3619 = vmatprep.subr.mxu0 0.0
    %3620 = vmatpush1.xpose.msra.mxu0 0.0
    %3621 = vmatprep.mubr.f32.mxu0 0.0
    %3622 = vmatmul.mubr.f32.gmra.mrb[0].mxu0 %v3546
    %v3623 = vpop.f32.mrb[0].mxu0
    %v3624 = vadd.f32 %v3544, %v3623
    %v3625 = vpop.f32.mrb[0].mxu0
    %3626 = vmatprep.mubr.f32.mxu0 0.0
    %3627 = vmatmul.mubr.f32.gmra.mrb[0].mxu0 %v3549
    %v3628 = vpop.f32.mrb[0].mxu0
    %v3629 = vadd.f32 %v3544, %v3628
    %v3630 = vpop.f32.mrb[0].mxu0
    %3631 = vdwg.mxu0
    %v3632 = vmul.f32 %v3624, 0.5
    %v3633 = vmul.f32 %v3629, 0.5
    %v3634 = vmul.f32 %v3624, 0.70710677
    %v3635 = vmul.f32 %v3629, 0.70710677
    %v3636 = verf.f32.pop %v3634
    %v3637 = verf.f32.pop %v3635
    %v3638 = vadd.f32 %v3636, 1.0
    %v3639 = vadd.f32 %v3637, 1.0
    %v3640 = vmul.f32 %v3632, %v3638
    %v3641 = vmul.f32 %v3633, %v3639
    %vm3642 = vcmask 130048
    %v3643 = vsel %vm3642, %v3640, 0.0
    %3644 = vadd.xlane.f32.xlu0 %v3643
    %v3645 = vpop.xlane.xlu0 %3644
    %v3646 = vsel %vm3642, %v3641, 0.0
    %3647 = vadd.xlane.f32.xlu0 %v3646
    %v3648 = vpop.xlane.xlu0 %3647
    %v3649 = vrcp.pop 16.0
    %v3650 = vmul.f32 %v3645, %v3649
    %v3651 = vmul.f32 %v3648, %v3649
    %v3652 = vsub.f32 %v3640, %v3650
    %v3653 = vsub.f32 %v3641, %v3651
    %v3654 = vmul.f32 %v3652, %v3652
    %v3655 = vmul.f32 %v3653, %v3653
    %v3656 = vsel %vm3642, %v3654, 0.0
    %3657 = vadd.xlane.f32.xlu0 %v3656
    %v3658 = vpop.xlane.xlu0 %3657
    %v3659 = vsel %vm3642, %v3655, 0.0
    %3660 = vadd.xlane.f32.xlu0 %v3659
    %v3661 = vpop.xlane.xlu0 %3660
    %v3662 = vmul.f32 %v3658, %v3649
    %v3663 = vmul.f32 %v3661, %v3649
    %v3664 = vadd.f32 %v3662, 1e-05
    %v3665 = vadd.f32 %v3663, 1e-05
    %v3666 = vrsqrt.pop %v3664
    %v3667 = vrsqrt.pop %v3665
    %v3668 = vmul.f32 %v3652, %v3666
    %v3669 = vmul.f32 %v3653, %v3667
    %v3670 = vld [vmem:[%s3 + $0xd] sm:$0x1]
    %v3671 = vlaneseq
    %v3672 = vshrl.u32 %v3671, 7
    %v3673 = vsub.s32 0, %v3672
    %v3674 = vrot.slane %v3670, %v3673
    %v3675 = vmul.f32 %v3668, %v3674
    %v3676 = vmul.f32 %v3669, %v3674
    %v3677 = vld [vmem:[%s3 + $0xe] sm:$0x1]
    %v3678 = vlaneseq
    %v3679 = vshrl.u32 %v3678, 7
    %v3680 = vsub.s32 0, %v3679
    %v3681 = vrot.slane %v3677, %v3680
    %v3682 = vadd.f32 %v3675, %v3681
    %v3683 = vadd.f32 %v3676, %v3681
    %v3684 = vld [vmem:[%s2] sm:$0xff]
    %v3685 = vld [vmem:[%s2 + $0x8] sm:$0xff]
    %v3686 = vld [vmem:[%s2 + $0x10] sm:$0xff]
    %v3687 = vld [vmem:[%s2 + $0x18] sm:$0xff]
    %v3688 = vld [vmem:[%s2 + $0x20] sm:$0xff]
    %v3689 = vld [vmem:[%s2 + $0x28] sm:$0xff]
    %v3690 = vld [vmem:[%s2 + $0x30] sm:$0xff]
    %v3691 = vld [vmem:[%s2 + $0x38] sm:$0xff]
    %v3692 = vld [vmem:[%s2 + $0x40] sm:$0xff]
    %v3693 = vld [vmem:[%s2 + $0x48] sm:$0xff]
    %v3694 = vld [vmem:[%s2 + $0x50] sm:$0xff]
    %v3695 = vld [vmem:[%s2 + $0x58] sm:$0xff]
    %v3696 = vld [vmem:[%s2 + $0x60] sm:$0xff]
    %v3697 = vld [vmem:[%s2 + $0x68] sm:$0xff]
    %v3698 = vld [vmem:[%s2 + $0x70] sm:$0xff]
    %v3699 = vld [vmem:[%s2 + $0x78] sm:$0xff]
    %v3700 = vld [vmem:[%s3 + $0xf] sm:$0x1]
    %v3701 = vlaneseq
    %v3702 = vshrl.u32 %v3701, 7
    %v3703 = vsub.s32 0, %v3702
    %v3704 = vrot.slane %v3700, %v3703
    %v3706 = vsel %vm3642, %v3682, 0
    %v3709 = vsel %vm3642, %v3683, 0
    %v3712 = vsel %vm3642, %v3684, 0
    %v3715 = vsel %vm3642, %v3685, 0
    %v3718 = vsel %vm3642, %v3686, 0
    %v3721 = vsel %vm3642, %v3687, 0
    %v3724 = vsel %vm3642, %v3688, 0
    %v3727 = vsel %vm3642, %v3689, 0
    %v3730 = vsel %vm3642, %v3690, 0
    %v3733 = vsel %vm3642, %v3691, 0
    %v3736 = vsel %vm3642, %v3692, 0
    %v3739 = vsel %vm3642, %v3693, 0
    %v3742 = vsel %vm3642, %v3694, 0
    %v3745 = vsel %vm3642, %v3695, 0
    %v3748 = vsel %vm3642, %v3696, 0
    %v3751 = vsel %vm3642, %v3697, 0
    %v3754 = vsel %vm3642, %v3698, 0
    %v3757 = vsel %vm3642, %v3699, 0
    %3759 = vmatprep.subr.mxu0 0.0
    %3760 = vmatpush1.xpose.msra.mxu0 %v3712
    %3761 = vmatprep.subr.mxu0 0.0
    %3762 = vmatpush1.xpose.msra.mxu0 %v3715
    %3763 = vmatprep.subr.mxu0 0.0
    %3764 = vmatpush1.xpose.msra.mxu0 %v3718
    %3765 = vmatprep.subr.mxu0 0.0
    %3766 = vmatpush1.xpose.msra.mxu0 %v3721
    %3767 = vmatprep.subr.mxu0 0.0
    %3768 = vmatpush1.xpose.msra.mxu0 %v3724
    %3769 = vmatprep.subr.mxu0 0.0
    %3770 = vmatpush1.xpose.msra.mxu0 %v3727
    %3771 = vmatprep.subr.mxu0 0.0
    %3772 = vmatpush1.xpose.msra.mxu0 %v3730
    %3773 = vmatprep.subr.mxu0 0.0
    %3774 = vmatpush1.xpose.msra.mxu0 %v3733
    %3775 = vmatprep.subr.mxu0 0.0
    %3776 = vmatpush1.xpose.msra.mxu0 %v3736
    %3777 = vmatprep.subr.mxu0 0.0
    %3778 = vmatpush1.xpose.msra.mxu0 %v3739
    %3779 = vmatprep.subr.mxu0 0.0
    %3780 = vmatpush1.xpose.msra.mxu0 %v3742
    %3781 = vmatprep.subr.mxu0 0.0
    %3782 = vmatpush1.xpose.msra.mxu0 %v3745
    %3783 = vmatprep.subr.mxu0 0.0
    %3784 = vmatpush1.xpose.msra.mxu0 %v3748
    %3785 = vmatprep.subr.mxu0 0.0
    %3786 = vmatpush1.xpose.msra.mxu0 %v3751
    %3787 = vmatprep.subr.mxu0 0.0
    %3788 = vmatpush1.xpose.msra.mxu0 %v3754
    %3789 = vmatprep.subr.mxu0 0.0
    %3790 = vmatpush1.xpose.msra.mxu0 %v3757
    %3791 = vmatprep.subr.mxu0 0.0
    %3792 = vmatpush1.xpose.msra.mxu0 0.0
    %3793 = vmatprep.subr.mxu0 0.0
    %3794 = vmatpush1.xpose.msra.mxu0 0.0
    %3795 = vmatprep.subr.mxu0 0.0
    %3796 = vmatpush1.xpose.msra.mxu0 0.0
    %3797 = vmatprep.subr.mxu0 0.0
    %3798 = vmatpush1.xpose.msra.mxu0 0.0
    %3799 = vmatprep.subr.mxu0 0.0
    %3800 = vmatpush1.xpose.msra.mxu0 0.0
    %3801 = vmatprep.subr.mxu0 0.0
    %3802 = vmatpush1.xpose.msra.mxu0 0.0
    %3803 = vmatprep.subr.mxu0 0.0
    %3804 = vmatpush1.xpose.msra.mxu0 0.0
    %3805 = vmatprep.subr.mxu0 0.0
    %3806 = vmatpush1.xpose.msra.mxu0 0.0
    %3807 = vmatprep.subr.mxu0 0.0
    %3808 = vmatpush1.xpose.msra.mxu0 0.0
    %3809 = vmatprep.subr.mxu0 0.0
    %3810 = vmatpush1.xpose.msra.mxu0 0.0
    %3811 = vmatprep.subr.mxu0 0.0
    %3812 = vmatpush1.xpose.msra.mxu0 0.0
    %3813 = vmatprep.subr.mxu0 0.0
    %3814 = vmatpush1.xpose.msra.mxu0 0.0
    %3815 = vmatprep.subr.mxu0 0.0
    %3816 = vmatpush1.xpose.msra.mxu0 0.0
    %3817 = vmatprep.subr.mxu0 0.0
    %3818 = vmatpush1.xpose.msra.mxu0 0.0
    %3819 = vmatprep.subr.mxu0 0.0
    %3820 = vmatpush1.xpose.msra.mxu0 0.0
    %3821 = vmatprep.subr.mxu0 0.0
    %3822 = vmatpush1.xpose.msra.mxu0 0.0
    %3823 = vmatprep.mubr.f32.mxu0 0.0
    %3824 = vmatmul.mubr.f32.gmra.mrb[0].mxu0 %v3706
    %v3825 = vpop.f32.mrb[0].mxu0
    %v3826 = vadd.f32 %v3704, %v3825
    %v3827 = vpop.f32.mrb[0].mxu0
    %3828 = vmatprep.mubr.f32.mxu0 0.0
    %3829 = vmatmul.mubr.f32.gmra.mrb[0].mxu0 %v3709
    %v3830 = vpop.f32.mrb[0].mxu0
    %v3831 = vadd.f32 %v3704, %v3830
    %v3832 = vpop.f32.mrb[0].mxu0
    %3833 = vdwg.mxu0
    %3835 = vrot.lane.b32.xlu0 %v3006, 32
    %v3836 = vpop.permute.xlu0 %3835
    %v3837 = vsel %vm37, %v3836, 0
    %v3840 = vsel %vm37, %v3007, 0
    %3842 = vmatprep.subr.mxu0 0.0
    %3843 = vmatpush1.xpose.msra.mxu0 %v3840
    %3844 = vmatprep.subr.mxu0 0.0
    %3845 = vmatpush1.xpose.msra.mxu0 0.0
    %3846 = vmatprep.subr.mxu0 0.0
    %3847 = vmatpush1.xpose.msra.mxu0 0.0
    %3848 = vmatprep.subr.mxu0 0.0
    %3849 = vmatpush1.xpose.msra.mxu0 0.0
    %3850 = vmatprep.subr.mxu0 0.0
    %3851 = vmatpush1.xpose.msra.mxu0 0.0
    %3852 = vmatprep.subr.mxu0 0.0
    %3853 = vmatpush1.xpose.msra.mxu0 0.0
    %3854 = vmatprep.subr.mxu0 0.0
    %3855 = vmatpush1.xpose.msra.mxu0 0.0
    %3856 = vmatprep.subr.mxu0 0.0
    %3857 = vmatpush1.xpose.msra.mxu0 0.0
    %3858 = vmatprep.subr.mxu0 0.0
    %3859 = vmatpush1.xpose.msra.mxu0 0.0
    %3860 = vmatprep.subr.mxu0 0.0
    %3861 = vmatpush1.xpose.msra.mxu0 0.0
    %3862 = vmatprep.subr.mxu0 0.0
    %3863 = vmatpush1.xpose.msra.mxu0 0.0
    %3864 = vmatprep.subr.mxu0 0.0
    %3865 = vmatpush1.xpose.msra.mxu0 0.0
    %3866 = vmatprep.subr.mxu0 0.0
    %3867 = vmatpush1.xpose.msra.mxu0 0.0
    %3868 = vmatprep.subr.mxu0 0.0
    %3869 = vmatpush1.xpose.msra.mxu0 0.0
    %3870 = vmatprep.subr.mxu0 0.0
    %3871 = vmatpush1.xpose.msra.mxu0 0.0
    %3872 = vmatprep.subr.mxu0 0.0
    %3873 = vmatpush1.xpose.msra.mxu0 0.0
    %3874 = vmatprep.subr.mxu0 0.0
    %3875 = vmatpush1.xpose.msra.mxu0 0.0
    %3876 = vmatprep.subr.mxu0 0.0
    %3877 = vmatpush1.xpose.msra.mxu0 0.0
    %3878 = vmatprep.subr.mxu0 0.0
    %3879 = vmatpush1.xpose.msra.mxu0 0.0
    %3880 = vmatprep.subr.mxu0 0.0
    %3881 = vmatpush1.xpose.msra.mxu0 0.0
    %3882 = vmatprep.subr.mxu0 0.0
    %3883 = vmatpush1.xpose.msra.mxu0 0.0
    %3884 = vmatprep.subr.mxu0 0.0
    %3885 = vmatpush1.xpose.msra.mxu0 0.0
    %3886 = vmatprep.subr.mxu0 0.0
    %3887 = vmatpush1.xpose.msra.mxu0 0.0
    %3888 = vmatprep.subr.mxu0 0.0
    %3889 = vmatpush1.xpose.msra.mxu0 0.0
    %3890 = vmatprep.subr.mxu0 0.0
    %3891 = vmatpush1.xpose.msra.mxu0 0.0
    %3892 = vmatprep.subr.mxu0 0.0
    %3893 = vmatpush1.xpose.msra.mxu0 0.0
    %3894 = vmatprep.subr.mxu0 0.0
    %3895 = vmatpush1.xpose.msra.mxu0 0.0
    %3896 = vmatprep.subr.mxu0 0.0
    %3897 = vmatpush1.xpose.msra.mxu0 0.0
    %3898 = vmatprep.subr.mxu0 0.0
    %3899 = vmatpush1.xpose.msra.mxu0 0.0
    %3900 = vmatprep.subr.mxu0 0.0
    %3901 = vmatpush1.xpose.msra.mxu0 0.0
    %3902 = vmatprep.subr.mxu0 0.0
    %3903 = vmatpush1.xpose.msra.mxu0 0.0
    %3904 = vmatprep.subr.mxu0 0.0
    %3905 = vmatpush1.xpose.msra.mxu0 0.0
    %3906 = vmatprep.mubr.f32.mxu0 0.0
    %3907 = vmatmul.mubr.f32.gmra.mrb[0].mxu0 %v3837
    %v3908 = vpop.f32.mrb[0].mxu0
    %v3909 = vadd.f32 0.0, %v3908
    %v3910 = vpop.f32.mrb[0].mxu0
    %3911 = vdwg.mxu0
    %3913 = vrot.lane.b32.xlu0 %v3008, 32
    %v3914 = vpop.permute.xlu0 %3913
    %v3915 = vsel %vm37, %v3914, 0
    %v3918 = vsel %vm37, %v3009, 0
    %3920 = vmatprep.subr.mxu0 0.0
    %3921 = vmatpush1.xpose.msra.mxu0 %v3918
    %3922 = vmatprep.subr.mxu0 0.0
    %3923 = vmatpush1.xpose.msra.mxu0 0.0
    %3924 = vmatprep.subr.mxu0 0.0
    %3925 = vmatpush1.xpose.msra.mxu0 0.0
    %3926 = vmatprep.subr.mxu0 0.0
    %3927 = vmatpush1.xpose.msra.mxu0 0.0
    %3928 = vmatprep.subr.mxu0 0.0
    %3929 = vmatpush1.xpose.msra.mxu0 0.0
    %3930 = vmatprep.subr.mxu0 0.0
    %3931 = vmatpush1.xpose.msra.mxu0 0.0
    %3932 = vmatprep.subr.mxu0 0.0
    %3933 = vmatpush1.xpose.msra.mxu0 0.0
    %3934 = vmatprep.subr.mxu0 0.0
    %3935 = vmatpush1.xpose.msra.mxu0 0.0
    %3936 = vmatprep.subr.mxu0 0.0
    %3937 = vmatpush1.xpose.msra.mxu0 0.0
    %3938 = vmatprep.subr.mxu0 0.0
    %3939 = vmatpush1.xpose.msra.mxu0 0.0
    %3940 = vmatprep.subr.mxu0 0.0
    %3941 = vmatpush1.xpose.msra.mxu0 0.0
    %3942 = vmatprep.subr.mxu0 0.0
    %3943 = vmatpush1.xpose.msra.mxu0 0.0
    %3944 = vmatprep.subr.mxu0 0.0
    %3945 = vmatpush1.xpose.msra.mxu0 0.0
    %3946 = vmatprep.subr.mxu0 0.0
    %3947 = vmatpush1.xpose.msra.mxu0 0.0
    %3948 = vmatprep.subr.mxu0 0.0
    %3949 = vmatpush1.xpose.msra.mxu0 0.0
    %3950 = vmatprep.subr.mxu0 0.0
    %3951 = vmatpush1.xpose.msra.mxu0 0.0
    %3952 = vmatprep.subr.mxu0 0.0
    %3953 = vmatpush1.xpose.msra.mxu0 0.0
    %3954 = vmatprep.subr.mxu0 0.0
    %3955 = vmatpush1.xpose.msra.mxu0 0.0
    %3956 = vmatprep.subr.mxu0 0.0
    %3957 = vmatpush1.xpose.msra.mxu0 0.0
    %3958 = vmatprep.subr.mxu0 0.0
    %3959 = vmatpush1.xpose.msra.mxu0 0.0
    %3960 = vmatprep.subr.mxu0 0.0
    %3961 = vmatpush1.xpose.msra.mxu0 0.0
    %3962 = vmatprep.subr.mxu0 0.0
    %3963 = vmatpush1.xpose.msra.mxu0 0.0
    %3964 = vmatprep.subr.mxu0 0.0
    %3965 = vmatpush1.xpose.msra.mxu0 0.0
    %3966 = vmatprep.subr.mxu0 0.0
    %3967 = vmatpush1.xpose.msra.mxu0 0.0
    %3968 = vmatprep.subr.mxu0 0.0
    %3969 = vmatpush1.xpose.msra.mxu0 0.0
    %3970 = vmatprep.subr.mxu0 0.0
    %3971 = vmatpush1.xpose.msra.mxu0 0.0
    %3972 = vmatprep.subr.mxu0 0.0
    %3973 = vmatpush1.xpose.msra.mxu0 0.0
    %3974 = vmatprep.subr.mxu0 0.0
    %3975 = vmatpush1.xpose.msra.mxu0 0.0
    %3976 = vmatprep.subr.mxu0 0.0
    %3977 = vmatpush1.xpose.msra.mxu0 0.0
    %3978 = vmatprep.subr.mxu0 0.0
    %3979 = vmatpush1.xpose.msra.mxu0 0.0
    %3980 = vmatprep.subr.mxu0 0.0
    %3981 = vmatpush1.xpose.msra.mxu0 0.0
    %3982 = vmatprep.subr.mxu0 0.0
    %3983 = vmatpush1.xpose.msra.mxu0 0.0
    %3984 = vmatprep.mubr.f32.mxu0 0.0
    %3985 = vmatmul.mubr.f32.gmra.mrb[0].mxu0 %v3915
    %v3986 = vpop.f32.mrb[0].mxu0
    %v3987 = vadd.f32 0.0, %v3986
    %v3988 = vpop.f32.mrb[0].mxu0
    %3989 = vdwg.mxu0
    %v3990 = vmul.f32 %v3909, 0.17677669
    %v3991 = vmul.f32 %v3987, 0.17677669
    %v3992 = vsel %vm3166, %v3990, -inf
    %3993 = vmax.xlane.f32.xlu0 %v3992
    %v3994 = vpop.xlane.xlu0 %3993
    %v3995 = vsel %vm3166, %v3991, -inf
    %3996 = vmax.xlane.f32.xlu0 %v3995
    %v3997 = vpop.xlane.xlu0 %3996
    %v3998 = vsub.f32 %v3990, %v3994
    %v3999 = vsub.f32 %v3991, %v3997
    %v4000 = vmul.f32 %v3998, 1.442695
    %v4001 = vpow.pop %v4000
    %v4002 = vmul.f32 %v3999, 1.442695
    %v4003 = vpow.pop %v4002
    %v4004 = vsel %vm3166, %v4001, 0.0
    %4005 = vadd.xlane.f32.xlu0 %v4004
    %v4006 = vpop.xlane.xlu0 %4005
    %v4007 = vsel %vm3166, %v4003, 0.0
    %4008 = vadd.xlane.f32.xlu0 %v4007
    %v4009 = vpop.xlane.xlu0 %4008
    %v4010 = vrcp.pop %v4006
    %v4011 = vrcp.pop %v4009
    %v4012 = vmul.f32 %v4001, %v4010
    %v4013 = vmul.f32 %v4003, %v4011
    %4014 = vrot.lane.b32.xlu0 %v3007, 96
    %v4015 = vpop.permute.xlu0 %4014
    %v4018 = vsel %vm3166, %v4012, 0
    %4020 = vmatprep.subr.mxu0 0.0
    %4021 = vmatpush1.msra.mxu0 %v4015
    %4022 = vmatprep.subr.mxu0 0.0
    %4023 = vmatpush1.msra.mxu0 0.0
    %4024 = vmatprep.subr.mxu0 0.0
    %4025 = vmatpush1.msra.mxu0 0.0
    %4026 = vmatprep.subr.mxu0 0.0
    %4027 = vmatpush1.msra.mxu0 0.0
    %4028 = vmatprep.subr.mxu0 0.0
    %4029 = vmatpush1.msra.mxu0 0.0
    %4030 = vmatprep.subr.mxu0 0.0
    %4031 = vmatpush1.msra.mxu0 0.0
    %4032 = vmatprep.subr.mxu0 0.0
    %4033 = vmatpush1.msra.mxu0 0.0
    %4034 = vmatprep.subr.mxu0 0.0
    %4035 = vmatpush1.msra.mxu0 0.0
    %4036 = vmatprep.subr.mxu0 0.0
    %4037 = vmatpush1.msra.mxu0 0.0
    %4038 = vmatprep.subr.mxu0 0.0
    %4039 = vmatpush1.msra.mxu0 0.0
    %4040 = vmatprep.subr.mxu0 0.0
    %4041 = vmatpush1.msra.mxu0 0.0
    %4042 = vmatprep.subr.mxu0 0.0
    %4043 = vmatpush1.msra.mxu0 0.0
    %4044 = vmatprep.subr.mxu0 0.0
    %4045 = vmatpush1.msra.mxu0 0.0
    %4046 = vmatprep.subr.mxu0 0.0
    %4047 = vmatpush1.msra.mxu0 0.0
    %4048 = vmatprep.subr.mxu0 0.0
    %4049 = vmatpush1.msra.mxu0 0.0
    %4050 = vmatprep.subr.mxu0 0.0
    %4051 = vmatpush1.msra.mxu0 0.0
    %4052 = vmatprep.subr.mxu0 0.0
    %4053 = vmatpush1.msra.mxu0 0.0
    %4054 = vmatprep.subr.mxu0 0.0
    %4055 = vmatpush1.msra.mxu0 0.0
    %4056 = vmatprep.subr.mxu0 0.0
    %4057 = vmatpush1.msra.mxu0 0.0
    %4058 = vmatprep.subr.mxu0 0.0
    %4059 = vmatpush1.msra.mxu0 0.0
    %4060 = vmatprep.subr.mxu0 0.0
    %4061 = vmatpush1.msra.mxu0 0.0
    %4062 = vmatprep.subr.mxu0 0.0
    %4063 = vmatpush1.msra.mxu0 0.0
    %4064 = vmatprep.subr.mxu0 0.0
    %4065 = vmatpush1.msra.mxu0 0.0
    %4066 = vmatprep.subr.mxu0 0.0
    %4067 = vmatpush1.msra.mxu0 0.0
    %4068 = vmatprep.subr.mxu0 0.0
    %4069 = vmatpush1.msra.mxu0 0.0
    %4070 = vmatprep.subr.mxu0 0.0
    %4071 = vmatpush1.msra.mxu0 0.0
    %4072 = vmatprep.subr.mxu0 0.0
    %4073 = vmatpush1.msra.mxu0 0.0
    %4074 = vmatprep.subr.mxu0 0.0
    %4075 = vmatpush1.msra.mxu0 0.0
    %4076 = vmatprep.subr.mxu0 0.0
    %4077 = vmatpush1.msra.mxu0 0.0
    %4078 = vmatprep.subr.mxu0 0.0
    %4079 = vmatpush1.msra.mxu0 0.0
    %4080 = vmatprep.subr.mxu0 0.0
    %4081 = vmatpush1.msra.mxu0 0.0
    %4082 = vmatprep.subr.mxu0 0.0
    %4083 = vmatpush1.msra.mxu0 0.0
    %4084 = vmatprep.mubr.f32.mxu0 0.0
    %4085 = vmatmul.mubr.f32.gmra.mrb[0].mxu0 %v4018
    %v4086 = vpop.f32.mrb[0].mxu0
    %v4087 = vadd.f32 0.0, %v4086
    %v4088 = vpop.f32.mrb[0].mxu0
    %4089 = vdwg.mxu0
    %4090 = vrot.lane.b32.xlu0 %v3009, 96
    %v4091 = vpop.permute.xlu0 %4090
    %v4094 = vsel %vm3166, %v4013, 0
    %4096 = vmatprep.subr.mxu0 0.0
    %4097 = vmatpush1.msra.mxu0 %v4091
    %4098 = vmatprep.subr.mxu0 0.0
    %4099 = vmatpush1.msra.mxu0 0.0
    %4100 = vmatprep.subr.mxu0 0.0
    %4101 = vmatpush1.msra.mxu0 0.0
    %4102 = vmatprep.subr.mxu0 0.0
    %4103 = vmatpush1.msra.mxu0 0.0
    %4104 = vmatprep.subr.mxu0 0.0
    %4105 = vmatpush1.msra.mxu0 0.0
    %4106 = vmatprep.subr.mxu0 0.0
    %4107 = vmatpush1.msra.mxu0 0.0
    %4108 = vmatprep.subr.mxu0 0.0
    %4109 = vmatpush1.msra.mxu0 0.0
    %4110 = vmatprep.subr.mxu0 0.0
    %4111 = vmatpush1.msra.mxu0 0.0
    %4112 = vmatprep.subr.mxu0 0.0
    %4113 = vmatpush1.msra.mxu0 0.0
    %4114 = vmatprep.subr.mxu0 0.0
    %4115 = vmatpush1.msra.mxu0 0.0
    %4116 = vmatprep.subr.mxu0 0.0
    %4117 = vmatpush1.msra.mxu0 0.0
    %4118 = vmatprep.subr.mxu0 0.0
    %4119 = vmatpush1.msra.mxu0 0.0
    %4120 = vmatprep.subr.mxu0 0.0
    %4121 = vmatpush1.msra.mxu0 0.0
    %4122 = vmatprep.subr.mxu0 0.0
    %4123 = vmatpush1.msra.mxu0 0.0
    %4124 = vmatprep.subr.mxu0 0.0
    %4125 = vmatpush1.msra.mxu0 0.0
    %4126 = vmatprep.subr.mxu0 0.0
    %4127 = vmatpush1.msra.mxu0 0.0
    %4128 = vmatprep.subr.mxu0 0.0
    %4129 = vmatpush1.msra.mxu0 0.0
    %4130 = vmatprep.subr.mxu0 0.0
    %4131 = vmatpush1.msra.mxu0 0.0
    %4132 = vmatprep.subr.mxu0 0.0
    %4133 = vmatpush1.msra.mxu0 0.0
    %4134 = vmatprep.subr.mxu0 0.0
    %4135 = vmatpush1.msra.mxu0 0.0
    %4136 = vmatprep.subr.mxu0 0.0
    %4137 = vmatpush1.msra.mxu0 0.0
    %4138 = vmatprep.subr.mxu0 0.0
    %4139 = vmatpush1.msra.mxu0 0.0
    %4140 = vmatprep.subr.mxu0 0.0
    %4141 = vmatpush1.msra.mxu0 0.0
    %4142 = vmatprep.subr.mxu0 0.0
    %4143 = vmatpush1.msra.mxu0 0.0
    %4144 = vmatprep.subr.mxu0 0.0
    %4145 = vmatpush1.msra.mxu0 0.0
    %4146 = vmatprep.subr.mxu0 0.0
    %4147 = vmatpush1.msra.mxu0 0.0
    %4148 = vmatprep.subr.mxu0 0.0
    %4149 = vmatpush1.msra.mxu0 0.0
    %4150 = vmatprep.subr.mxu0 0.0
    %4151 = vmatpush1.msra.mxu0 0.0
    %4152 = vmatprep.subr.mxu0 0.0
    %4153 = vmatpush1.msra.mxu0 0.0
    %4154 = vmatprep.subr.mxu0 0.0
    %4155 = vmatpush1.msra.mxu0 0.0
    %4156 = vmatprep.subr.mxu0 0.0
    %4157 = vmatpush1.msra.mxu0 0.0
    %4158 = vmatprep.subr.mxu0 0.0
    %4159 = vmatpush1.msra.mxu0 0.0
    %4160 = vmatprep.mubr.f32.mxu0 0.0
    %4161 = vmatmul.mubr.f32.gmra.mrb[0].mxu0 %v4094
    %v4162 = vpop.f32.mrb[0].mxu0
    %v4163 = vadd.f32 0.0, %v4162
    %v4164 = vpop.f32.mrb[0].mxu0
    %4165 = vdwg.mxu0
    %v4166 = vadd.f32 %v2809, %v4087
    %v4167 = vadd.f32 %v2810, %v4163
    %v4168 = vsel %vm37, %v4166, 0.0
    %4169 = vadd.xlane.f32.xlu0 %v4168
    %v4170 = vpop.xlane.xlu0 %4169
    %v4171 = vsel %vm37, %v4167, 0.0
    %4172 = vadd.xlane.f32.xlu0 %v4171
    %v4173 = vpop.xlane.xlu0 %4172
    %v4174 = vmul.f32 %v4170, %v3349
    %v4175 = vmul.f32 %v4173, %v3349
    %v4176 = vsub.f32 %v4166, %v4174
    %v4177 = vsub.f32 %v4167, %v4175
    %v4178 = vmul.f32 %v4176, %v4176
    %v4179 = vmul.f32 %v4177, %v4177
    %v4180 = vsel %vm37, %v4178, 0.0
    %4181 = vadd.xlane.f32.xlu0 %v4180
    %v4182 = vpop.xlane.xlu0 %4181
    %v4183 = vsel %vm37, %v4179, 0.0
    %4184 = vadd.xlane.f32.xlu0 %v4183
    %v4185 = vpop.xlane.xlu0 %4184
    %v4186 = vmul.f32 %v4182, %v3349
    %v4187 = vmul.f32 %v4185, %v3349
    %v4188 = vadd.f32 %v4186, 1e-05
    %v4189 = vadd.f32 %v4187, 1e-05
    %v4190 = vrsqrt.pop %v4188
    %v4191 = vrsqrt.pop %v4189
    %v4192 = vmul.f32 %v4176, %v4190
    %v4193 = vmul.f32 %v4177, %v4191
    %v4194 = vld [vmem:[%s3 + $0x10] sm:$0x1]
    %v4195 = vlaneseq
    %v4196 = vshrl.u32 %v4195, 7
    %v4197 = vsub.s32 0, %v4196
    %v4198 = vrot.slane %v4194, %v4197
    %v4199 = vmul.f32 %v4192, %v4198
    %v4200 = vmul.f32 %v4193, %v4198
    %v4201 = vld [vmem:[%s3 + $0x11] sm:$0x1]
    %v4202 = vlaneseq
    %v4203 = vshrl.u32 %v4202, 7
    %v4204 = vsub.s32 0, %v4203
    %v4205 = vrot.slane %v4201, %v4204
    %v4206 = vadd.f32 %v4199, %v4205
    %v4207 = vadd.f32 %v4200, %v4205
    %v4208 = vld [vmem:[%s2 + $0x100] sm:$0xff]
    %v4209 = vld [vmem:[%s2 + $0x108] sm:$0xff]
    %v4210 = vld [vmem:[%s3 + $0x12] sm:$0x1]
    %v4211 = vlaneseq
    %v4212 = vshrl.u32 %v4211, 7
    %v4213 = vsub.s32 0, %v4212
    %v4214 = vrot.slane %v4210, %v4213
    %v4216 = vsel %vm3642, %v4208, 0
    %v4219 = vsel %vm3642, %v4209, 0
    %4221 = vmatprep.subr.mxu0 0.0
    %4222 = vmatpush1.xpose.msra.mxu0 %v4216
    %4223 = vmatprep.subr.mxu0 0.0
    %4224 = vmatpush1.xpose.msra.mxu0 %v4219
    %4225 = vmatprep.subr.mxu0 0.0
    %4226 = vmatpush1.xpose.msra.mxu0 0.0
    %4227 = vmatprep.subr.mxu0 0.0
    %4228 = vmatpush1.xpose.msra.mxu0 0.0
    %4229 = vmatprep.subr.mxu0 0.0
    %4230 = vmatpush1.xpose.msra.mxu0 0.0
    %4231 = vmatprep.subr.mxu0 0.0
    %4232 = vmatpush1.xpose.msra.mxu0 0.0
    %4233 = vmatprep.subr.mxu0 0.0
    %4234 = vmatpush1.xpose.msra.mxu0 0.0
    %4235 = vmatprep.subr.mxu0 0.0
    %4236 = vmatpush1.xpose.msra.mxu0 0.0
    %4237 = vmatprep.subr.mxu0 0.0
    %4238 = vmatpush1.xpose.msra.mxu0 0.0
    %4239 = vmatprep.subr.mxu0 0.0
    %4240 = vmatpush1.xpose.msra.mxu0 0.0
    %4241 = vmatprep.subr.mxu0 0.0
    %4242 = vmatpush1.xpose.msra.mxu0 0.0
    %4243 = vmatprep.subr.mxu0 0.0
    %4244 = vmatpush1.xpose.msra.mxu0 0.0
    %4245 = vmatprep.subr.mxu0 0.0
    %4246 = vmatpush1.xpose.msra.mxu0 0.0
    %4247 = vmatprep.subr.mxu0 0.0
    %4248 = vmatpush1.xpose.msra.mxu0 0.0
    %4249 = vmatprep.subr.mxu0 0.0
    %4250 = vmatpush1.xpose.msra.mxu0 0.0
    %4251 = vmatprep.subr.mxu0 0.0
    %4252 = vmatpush1.xpose.msra.mxu0 0.0
    %4253 = vmatprep.subr.mxu0 0.0
    %4254 = vmatpush1.xpose.msra.mxu0 0.0
    %4255 = vmatprep.subr.mxu0 0.0
    %4256 = vmatpush1.xpose.msra.mxu0 0.0
    %4257 = vmatprep.subr.mxu0 0.0
    %4258 = vmatpush1.xpose.msra.mxu0 0.0
    %4259 = vmatprep.subr.mxu0 0.0
    %4260 = vmatpush1.xpose.msra.mxu0 0.0
    %4261 = vmatprep.subr.mxu0 0.0
    %4262 = vmatpush1.xpose.msra.mxu0 0.0
    %4263 = vmatprep.subr.mxu0 0.0
    %4264 = vmatpush1.xpose.msra.mxu0 0.0
    %4265 = vmatprep.subr.mxu0 0.0
    %4266 = vmatpush1.xpose.msra.mxu0 0.0
    %4267 = vmatprep.subr.mxu0 0.0
    %4268 = vmatpush1.xpose.msra.mxu0 0.0
    %4269 = vmatprep.subr.mxu0 0.0
    %4270 = vmatpush1.xpose.msra.mxu0 0.0
    %4271 = vmatprep.subr.mxu0 0.0
    %4272 = vmatpush1.xpose.msra.mxu0 0.0
    %4273 = vmatprep.subr.mxu0 0.0
    %4274 = vmatpush1.xpose.msra.mxu0 0.0
    %4275 = vmatprep.subr.mxu0 0.0
    %4276 = vmatpush1.xpose.msra.mxu0 0.0
    %4277 = vmatprep.subr.mxu0 0.0
    %4278 = vmatpush1.xpose.msra.mxu0 0.0
    %4279 = vmatprep.subr.mxu0 0.0
    %4280 = vmatpush1.xpose.msra.mxu0 0.0
    %4281 = vmatprep.subr.mxu0 0.0
    %4282 = vmatpush1.xpose.msra.mxu0 0.0
    %4283 = vmatprep.subr.mxu0 0.0
    %4284 = vmatpush1.xpose.msra.mxu0 0.0
    %4285 = vmatprep.mubr.f32.mxu0 0.0
    %4286 = vmatmul.mubr.f32.gmra.mrb[0].mxu0 %v3706
    %v4287 = vpop.f32.mrb[0].mxu0
    %v4288 = vadd.f32 %v4214, %v4287
    %v4289 = vpop.f32.mrb[0].mxu0
    %4290 = vmatprep.mubr.f32.mxu0 0.0
    %4291 = vmatmul.mubr.f32.gmra.mrb[0].mxu0 %v3709
    %v4292 = vpop.f32.mrb[0].mxu0
    %v4293 = vadd.f32 %v4214, %v4292
    %v4294 = vpop.f32.mrb[0].mxu0
    %4295 = vdwg.mxu0
    %v4296 = vld [vmem:[%s1 + $0x2a0] sm:$0xff]
    %v4297 = vld [vmem:[%s1 + $0x2a8] sm:$0xff]
    %v4298 = vld [vmem:[%s1 + $0x2b0] sm:$0xff]
    %v4299 = vld [vmem:[%s1 + $0x2b8] sm:$0xff]
    %v4300 = vld [vmem:[%s2 + $0x110] sm:$0xff]
    %v4301 = vld [vmem:[%s2 + $0x118] sm:$0xff]
    %v4302 = vld [vmem:[%s2 + $0x120] sm:$0xff]
    %v4303 = vld [vmem:[%s2 + $0x128] sm:$0xff]
    %v4305 = vsel %vm3642, %v4288, 0
    %v4308 = vsel %vm3642, %v4293, 0
    %v4311 = vsel %vm3642, %v4300, 0
    %v4314 = vsel %vm3642, %v4301, 0
    %v4317 = vsel %vm3642, %v4302, 0
    %v4320 = vsel %vm3642, %v4303, 0
    %4322 = vmatprep.subr.mxu0 0.0
    %4323 = vmatpush1.xpose.msra.mxu0 %v4311
    %4324 = vmatprep.subr.mxu0 0.0
    %4325 = vmatpush1.xpose.msra.mxu0 %v4314
    %4326 = vmatprep.subr.mxu0 0.0
    %4327 = vmatpush1.xpose.msra.mxu0 %v4317
    %4328 = vmatprep.subr.mxu0 0.0
    %4329 = vmatpush1.xpose.msra.mxu0 %v4320
    %4330 = vmatprep.subr.mxu0 0.0
    %4331 = vmatpush1.xpose.msra.mxu0 0.0
    %4332 = vmatprep.subr.mxu0 0.0
    %4333 = vmatpush1.xpose.msra.mxu0 0.0
    %4334 = vmatprep.subr.mxu0 0.0
    %4335 = vmatpush1.xpose.msra.mxu0 0.0
    %4336 = vmatprep.subr.mxu0 0.0
    %4337 = vmatpush1.xpose.msra.mxu0 0.0
    %4338 = vmatprep.subr.mxu0 0.0
    %4339 = vmatpush1.xpose.msra.mxu0 0.0
    %4340 = vmatprep.subr.mxu0 0.0
    %4341 = vmatpush1.xpose.msra.mxu0 0.0
    %4342 = vmatprep.subr.mxu0 0.0
    %4343 = vmatpush1.xpose.msra.mxu0 0.0
    %4344 = vmatprep.subr.mxu0 0.0
    %4345 = vmatpush1.xpose.msra.mxu0 0.0
    %4346 = vmatprep.subr.mxu0 0.0
    %4347 = vmatpush1.xpose.msra.mxu0 0.0
    %4348 = vmatprep.subr.mxu0 0.0
    %4349 = vmatpush1.xpose.msra.mxu0 0.0
    %4350 = vmatprep.subr.mxu0 0.0
    %4351 = vmatpush1.xpose.msra.mxu0 0.0
    %4352 = vmatprep.subr.mxu0 0.0
    %4353 = vmatpush1.xpose.msra.mxu0 0.0
    %4354 = vmatprep.subr.mxu0 0.0
    %4355 = vmatpush1.xpose.msra.mxu0 0.0
    %4356 = vmatprep.subr.mxu0 0.0
    %4357 = vmatpush1.xpose.msra.mxu0 0.0
    %4358 = vmatprep.subr.mxu0 0.0
    %4359 = vmatpush1.xpose.msra.mxu0 0.0
    %4360 = vmatprep.subr.mxu0 0.0
    %4361 = vmatpush1.xpose.msra.mxu0 0.0
    %4362 = vmatprep.subr.mxu0 0.0
    %4363 = vmatpush1.xpose.msra.mxu0 0.0
    %4364 = vmatprep.subr.mxu0 0.0
    %4365 = vmatpush1.xpose.msra.mxu0 0.0
    %4366 = vmatprep.subr.mxu0 0.0
    %4367 = vmatpush1.xpose.msra.mxu0 0.0
    %4368 = vmatprep.subr.mxu0 0.0
    %4369 = vmatpush1.xpose.msra.mxu0 0.0
    %4370 = vmatprep.subr.mxu0 0.0
    %4371 = vmatpush1.xpose.msra.mxu0 0.0
    %4372 = vmatprep.subr.mxu0 0.0
    %4373 = vmatpush1.xpose.msra.mxu0 0.0
    %4374 = vmatprep.subr.mxu0 0.0
    %4375 = vmatpush1.xpose.msra.mxu0 0.0
    %4376 = vmatprep.subr.mxu0 0.0
    %4377 = vmatpush1.xpose.msra.mxu0 0.0
    %4378 = vmatprep.subr.mxu0 0.0
    %4379 = vmatpush1.xpose.msra.mxu0 0.0
    %4380 = vmatprep.subr.mxu0 0.0
    %4381 = vmatpush1.xpose.msra.mxu0 0.0
    %4382 = vmatprep.subr.mxu0 0.0
    %4383 = vmatpush1.xpose.msra.mxu0 0.0
    %4384 = vmatprep.subr.mxu0 0.0
    %4385 = vmatpush1.xpose.msra.mxu0 0.0
    %4386 = vmatprep.mubr.f32.mxu0 0.0
    %4387 = vmatmul.mubr.f32.gmra.mrb[0].mxu0 %v4305
    %v4388 = vpop.f32.mrb[0].mxu0
    %v4389 = vadd.f32 0.0, %v4388
    %v4390 = vpop.f32.mrb[0].mxu0
    %4391 = vmatprep.mubr.f32.mxu0 0.0
    %4392 = vmatmul.mubr.f32.gmra.mrb[0].mxu0 %v4308
    %v4393 = vpop.f32.mrb[0].mxu0
    %v4394 = vadd.f32 0.0, %v4393
    %v4395 = vpop.f32.mrb[0].mxu0
    %4396 = vdwg.mxu0
    %v4398 = vsel %vm37, %v4206, 0
    %v4401 = vsel %vm37, %v4207, 0
    %v4404 = vsel %vm37, %v4296, 0
    %v4407 = vsel %vm37, %v4297, 0
    %v4410 = vsel %vm37, %v4298, 0
    %v4413 = vsel %vm37, %v4299, 0
    %4415 = vmatprep.subr.mxu0 0.0
    %4416 = vmatpush1.xpose.msra.mxu0 %v4404
    %4417 = vmatprep.subr.mxu0 0.0
    %4418 = vmatpush1.xpose.msra.mxu0 %v4407
    %4419 = vmatprep.subr.mxu0 0.0
    %4420 = vmatpush1.xpose.msra.mxu0 %v4410
    %4421 = vmatprep.subr.mxu0 0.0
    %4422 = vmatpush1.xpose.msra.mxu0 %v4413
    %4423 = vmatprep.subr.mxu0 0.0
    %4424 = vmatpush1.xpose.msra.mxu0 0.0
    %4425 = vmatprep.subr.mxu0 0.0
    %4426 = vmatpush1.xpose.msra.mxu0 0.0
    %4427 = vmatprep.subr.mxu0 0.0
    %4428 = vmatpush1.xpose.msra.mxu0 0.0
    %4429 = vmatprep.subr.mxu0 0.0
    %4430 = vmatpush1.xpose.msra.mxu0 0.0
    %4431 = vmatprep.subr.mxu0 0.0
    %4432 = vmatpush1.xpose.msra.mxu0 0.0
    %4433 = vmatprep.subr.mxu0 0.0
    %4434 = vmatpush1.xpose.msra.mxu0 0.0
    %4435 = vmatprep.subr.mxu0 0.0
    %4436 = vmatpush1.xpose.msra.mxu0 0.0
    %4437 = vmatprep.subr.mxu0 0.0
    %4438 = vmatpush1.xpose.msra.mxu0 0.0
    %4439 = vmatprep.subr.mxu0 0.0
    %4440 = vmatpush1.xpose.msra.mxu0 0.0
    %4441 = vmatprep.subr.mxu0 0.0
    %4442 = vmatpush1.xpose.msra.mxu0 0.0
    %4443 = vmatprep.subr.mxu0 0.0
    %4444 = vmatpush1.xpose.msra.mxu0 0.0
    %4445 = vmatprep.subr.mxu0 0.0
    %4446 = vmatpush1.xpose.msra.mxu0 0.0
    %4447 = vmatprep.subr.mxu0 0.0
    %4448 = vmatpush1.xpose.msra.mxu0 0.0
    %4449 = vmatprep.subr.mxu0 0.0
    %4450 = vmatpush1.xpose.msra.mxu0 0.0
    %4451 = vmatprep.subr.mxu0 0.0
    %4452 = vmatpush1.xpose.msra.mxu0 0.0
    %4453 = vmatprep.subr.mxu0 0.0
    %4454 = vmatpush1.xpose.msra.mxu0 0.0
    %4455 = vmatprep.subr.mxu0 0.0
    %4456 = vmatpush1.xpose.msra.mxu0 0.0
    %4457 = vmatprep.subr.mxu0 0.0
    %4458 = vmatpush1.xpose.msra.mxu0 0.0
    %4459 = vmatprep.subr.mxu0 0.0
    %4460 = vmatpush1.xpose.msra.mxu0 0.0
    %4461 = vmatprep.subr.mxu0 0.0
    %4462 = vmatpush1.xpose.msra.mxu0 0.0
    %4463 = vmatprep.subr.mxu0 0.0
    %4464 = vmatpush1.xpose.msra.mxu0 0.0
    %4465 = vmatprep.subr.mxu0 0.0
    %4466 = vmatpush1.xpose.msra.mxu0 0.0
    %4467 = vmatprep.subr.mxu0 0.0
    %4468 = vmatpush1.xpose.msra.mxu0 0.0
    %4469 = vmatprep.subr.mxu0 0.0
    %4470 = vmatpush1.xpose.msra.mxu0 0.0
    %4471 = vmatprep.subr.mxu0 0.0
    %4472 = vmatpush1.xpose.msra.mxu0 0.0
    %4473 = vmatprep.subr.mxu0 0.0
    %4474 = vmatpush1.xpose.msra.mxu0 0.0
    %4475 = vmatprep.subr.mxu0 0.0
    %4476 = vmatpush1.xpose.msra.mxu0 0.0
    %4477 = vmatprep.subr.mxu0 0.0
    %4478 = vmatpush1.xpose.msra.mxu0 0.0
    %4479 = vmatprep.mubr.f32.mxu0 0.0
    %4480 = vmatmul.mubr.f32.gmra.mrb[0].mxu0 %v4398
    %v4481 = vpop.f32.mrb[0].mxu0
    %v4482 = vadd.f32 %v4389, %v4481
    %v4483 = vpop.f32.mrb[0].mxu0
    %4484 = vmatprep.mubr.f32.mxu0 0.0
    %4485 = vmatmul.mubr.f32.gmra.mrb[0].mxu0 %v4401
    %v4486 = vpop.f32.mrb[0].mxu0
    %v4487 = vadd.f32 %v4394, %v4486
    %v4488 = vpop.f32.mrb[0].mxu0
    %4489 = vdwg.mxu0
    %v4490 = vld [vmem:[%s3 + $0x13] sm:$0x1]
    %v4491 = vlaneseq
    %v4492 = vshrl.u32 %v4491, 7
    %v4493 = vsub.s32 0, %v4492
    %v4494 = vrot.slane %v4490, %v4493
    %v4495 = vadd.f32 %v4482, %v4494
    %v4496 = vadd.f32 %v4487, %v4494
    %v4497 = vmul.f32 %v4495, 0.5
    %v4498 = vmul.f32 %v4496, 0.5
    %v4499 = vmul.f32 %v4495, 0.70710677
    %v4500 = vmul.f32 %v4496, 0.70710677
    %v4501 = verf.f32.pop %v4499
    %v4502 = verf.f32.pop %v4500
    %v4503 = vadd.f32 %v4501, 1.0
    %v4504 = vadd.f32 %v4502, 1.0
    %v4505 = vmul.f32 %v4497, %v4503
    %v4506 = vmul.f32 %v4498, %v4504
    %v4507 = vsel %vm37, %v4505, 0.0
    %4508 = vadd.xlane.f32.xlu0 %v4507
    %v4509 = vpop.xlane.xlu0 %4508
    %v4510 = vsel %vm37, %v4506, 0.0
    %4511 = vadd.xlane.f32.xlu0 %v4510
    %v4512 = vpop.xlane.xlu0 %4511
    %v4513 = vmul.f32 %v4509, %v3349
    %v4514 = vmul.f32 %v4512, %v3349
    %v4515 = vsub.f32 %v4505, %v4513
    %v4516 = vsub.f32 %v4506, %v4514
    %v4517 = vmul.f32 %v4515, %v4515
    %v4518 = vmul.f32 %v4516, %v4516
    %v4519 = vsel %vm37, %v4517, 0.0
    %4520 = vadd.xlane.f32.xlu0 %v4519
    %v4521 = vpop.xlane.xlu0 %4520
    %v4522 = vsel %vm37, %v4518, 0.0
    %4523 = vadd.xlane.f32.xlu0 %v4522
    %v4524 = vpop.xlane.xlu0 %4523
    %v4525 = vmul.f32 %v4521, %v3349
    %v4526 = vmul.f32 %v4524, %v3349
    %v4527 = vadd.f32 %v4525, 1e-05
    %v4528 = vadd.f32 %v4526, 1e-05
    %v4529 = vrsqrt.pop %v4527
    %v4530 = vrsqrt.pop %v4528
    %v4531 = vmul.f32 %v4515, %v4529
    %v4532 = vmul.f32 %v4516, %v4530
    %v4533 = vld [vmem:[%s3 + $0x14] sm:$0x1]
    %v4534 = vlaneseq
    %v4535 = vshrl.u32 %v4534, 7
    %v4536 = vsub.s32 0, %v4535
    %v4537 = vrot.slane %v4533, %v4536
    %v4538 = vmul.f32 %v4531, %v4537
    %v4539 = vmul.f32 %v4532, %v4537
    %v4540 = vld [vmem:[%s3 + $0x15] sm:$0x1]
    %v4541 = vlaneseq
    %v4542 = vshrl.u32 %v4541, 7
    %v4543 = vsub.s32 0, %v4542
    %v4544 = vrot.slane %v4540, %v4543
    %v4545 = vadd.f32 %v4538, %v4544
    %v4546 = vadd.f32 %v4539, %v4544
    %v4547 = vld [vmem:[%s1 + $0x2d0] sm:$0xff]
    %v4548 = vld [vmem:[%s1 + $0x2d8] sm:$0xff]
    %v4549 = vld [vmem:[%s3 + $0x16] sm:$0x1]
    %v4550 = vlaneseq
    %v4551 = vshrl.u32 %v4550, 7
    %v4552 = vsub.s32 0, %v4551
    %v4553 = vrot.slane %v4549, %v4552
    %v4555 = vsel %vm37, %v4545, 0
    %v4558 = vsel %vm37, %v4546, 0
    %v4561 = vsel %vm37, %v4547, 0
    %v4564 = vsel %vm37, %v4548, 0
    %4566 = vmatprep.subr.mxu0 0.0
    %4567 = vmatpush1.xpose.msra.mxu0 %v4561
    %4568 = vmatprep.subr.mxu0 0.0
    %4569 = vmatpush1.xpose.msra.mxu0 %v4564
    %4570 = vmatprep.subr.mxu0 0.0
    %4571 = vmatpush1.xpose.msra.mxu0 0.0
    %4572 = vmatprep.subr.mxu0 0.0
    %4573 = vmatpush1.xpose.msra.mxu0 0.0
    %4574 = vmatprep.subr.mxu0 0.0
    %4575 = vmatpush1.xpose.msra.mxu0 0.0
    %4576 = vmatprep.subr.mxu0 0.0
    %4577 = vmatpush1.xpose.msra.mxu0 0.0
    %4578 = vmatprep.subr.mxu0 0.0
    %4579 = vmatpush1.xpose.msra.mxu0 0.0
    %4580 = vmatprep.subr.mxu0 0.0
    %4581 = vmatpush1.xpose.msra.mxu0 0.0
    %4582 = vmatprep.subr.mxu0 0.0
    %4583 = vmatpush1.xpose.msra.mxu0 0.0
    %4584 = vmatprep.subr.mxu0 0.0
    %4585 = vmatpush1.xpose.msra.mxu0 0.0
    %4586 = vmatprep.subr.mxu0 0.0
    %4587 = vmatpush1.xpose.msra.mxu0 0.0
    %4588 = vmatprep.subr.mxu0 0.0
    %4589 = vmatpush1.xpose.msra.mxu0 0.0
    %4590 = vmatprep.subr.mxu0 0.0
    %4591 = vmatpush1.xpose.msra.mxu0 0.0
    %4592 = vmatprep.subr.mxu0 0.0
    %4593 = vmatpush1.xpose.msra.mxu0 0.0
    %4594 = vmatprep.subr.mxu0 0.0
    %4595 = vmatpush1.xpose.msra.mxu0 0.0
    %4596 = vmatprep.subr.mxu0 0.0
    %4597 = vmatpush1.xpose.msra.mxu0 0.0
    %4598 = vmatprep.subr.mxu0 0.0
    %4599 = vmatpush1.xpose.msra.mxu0 0.0
    %4600 = vmatprep.subr.mxu0 0.0
    %4601 = vmatpush1.xpose.msra.mxu0 0.0
    %4602 = vmatprep.subr.mxu0 0.0
    %4603 = vmatpush1.xpose.msra.mxu0 0.0
    %4604 = vmatprep.subr.mxu0 0.0
    %4605 = vmatpush1.xpose.msra.mxu0 0.0
    %4606 = vmatprep.subr.mxu0 0.0
    %4607 = vmatpush1.xpose.msra.mxu0 0.0
    %4608 = vmatprep.subr.mxu0 0.0
    %4609 = vmatpush1.xpose.msra.mxu0 0.0
    %4610 = vmatprep.subr.mxu0 0.0
    %4611 = vmatpush1.xpose.msra.mxu0 0.0
    %4612 = vmatprep.subr.mxu0 0.0
    %4613 = vmatpush1.xpose.msra.mxu0 0.0
    %4614 = vmatprep.subr.mxu0 0.0
    %4615 = vmatpush1.xpose.msra.mxu0 0.0
    %4616 = vmatprep.subr.mxu0 0.0
    %4617 = vmatpush1.xpose.msra.mxu0 0.0
    %4618 = vmatprep.subr.mxu0 0.0
    %4619 = vmatpush1.xpose.msra.mxu0 0.0
    %4620 = vmatprep.subr.mxu0 0.0
    %4621 = vmatpush1.xpose.msra.mxu0 0.0
    %4622 = vmatprep.subr.mxu0 0.0
    %4623 = vmatpush1.xpose.msra.mxu0 0.0
    %4624 = vmatprep.subr.mxu0 0.0
    %4625 = vmatpush1.xpose.msra.mxu0 0.0
    %4626 = vmatprep.subr.mxu0 0.0
    %4627 = vmatpush1.xpose.msra.mxu0 0.0
    %4628 = vmatprep.subr.mxu0 0.0
    %4629 = vmatpush1.xpose.msra.mxu0 0.0
    %4630 = vmatprep.mubr.f32.mxu0 0.0
    %4631 = vmatmul.mubr.f32.gmra.mrb[0].mxu0 %v4555
    %v4632 = vpop.f32.mrb[0].mxu0
    %v4633 = vadd.f32 %v4553, %v4632
    %v4634 = vpop.f32.mrb[0].mxu0
    %4635 = vmatprep.mubr.f32.mxu0 0.0
    %4636 = vmatmul.mubr.f32.gmra.mrb[0].mxu0 %v4558
    %v4637 = vpop.f32.mrb[0].mxu0
    %v4638 = vadd.f32 %v4553, %v4637
    %v4639 = vpop.f32.mrb[0].mxu0
    %4640 = vdwg.mxu0
    %v4641 = vmul.f32 %v4633, 0.5
    %v4642 = vmul.f32 %v4638, 0.5
    %v4643 = vmul.f32 %v4633, 0.70710677
    %v4644 = vmul.f32 %v4638, 0.70710677
    %v4645 = verf.f32.pop %v4643
    %v4646 = verf.f32.pop %v4644
    %v4647 = vadd.f32 %v4645, 1.0
    %v4648 = vadd.f32 %v4646, 1.0
    %v4649 = vmul.f32 %v4641, %v4647
    %v4650 = vmul.f32 %v4642, %v4648
    %v4651 = vsel %vm3642, %v4649, 0.0
    %4652 = vadd.xlane.f32.xlu0 %v4651
    %v4653 = vpop.xlane.xlu0 %4652
    %v4654 = vsel %vm3642, %v4650, 0.0
    %4655 = vadd.xlane.f32.xlu0 %v4654
    %v4656 = vpop.xlane.xlu0 %4655
    %v4657 = vmul.f32 %v4653, %v3649
    %v4658 = vmul.f32 %v4656, %v3649
    %v4659 = vsub.f32 %v4649, %v4657
    %v4660 = vsub.f32 %v4650, %v4658
    %v4661 = vmul.f32 %v4659, %v4659
    %v4662 = vmul.f32 %v4660, %v4660
    %v4663 = vsel %vm3642, %v4661, 0.0
    %4664 = vadd.xlane.f32.xlu0 %v4663
    %v4665 = vpop.xlane.xlu0 %4664
    %v4666 = vsel %vm3642, %v4662, 0.0
    %4667 = vadd.xlane.f32.xlu0 %v4666
    %v4668 = vpop.xlane.xlu0 %4667
    %v4669 = vmul.f32 %v4665, %v3649
    %v4670 = vmul.f32 %v4668, %v3649
    %v4671 = vadd.f32 %v4669, 1e-05
    %v4672 = vadd.f32 %v4670, 1e-05
    %v4673 = vrsqrt.pop %v4671
    %v4674 = vrsqrt.pop %v4672
    %v4675 = vmul.f32 %v4659, %v4673
    %v4676 = vmul.f32 %v4660, %v4674
    %v4677 = vld [vmem:[%s3 + $0x17] sm:$0x1]
    %v4678 = vlaneseq
    %v4679 = vshrl.u32 %v4678, 7
    %v4680 = vsub.s32 0, %v4679
    %v4681 = vrot.slane %v4677, %v4680
    %v4682 = vmul.f32 %v4675, %v4681
    %v4683 = vmul.f32 %v4676, %v4681
    %v4684 = vld [vmem:[%s3 + $0x18] sm:$0x1]
    %v4685 = vlaneseq
    %v4686 = vshrl.u32 %v4685, 7
    %v4687 = vsub.s32 0, %v4686
    %v4688 = vrot.slane %v4684, %v4687
    %v4689 = vadd.f32 %v4682, %v4688
    %v4690 = vadd.f32 %v4683, %v4688
    %v4691 = vld [vmem:[%s2 + $0x80] sm:$0xff]
    %v4692 = vld [vmem:[%s2 + $0x88] sm:$0xff]
    %v4693 = vld [vmem:[%s2 + $0x90] sm:$0xff]
    %v4694 = vld [vmem:[%s2 + $0x98] sm:$0xff]
    %v4695 = vld [vmem:[%s2 + $0xa0] sm:$0xff]
    %v4696 = vld [vmem:[%s2 + $0xa8] sm:$0xff]
    %v4697 = vld [vmem:[%s2 + $0xb0] sm:$0xff]
    %v4698 = vld [vmem:[%s2 + $0xb8] sm:$0xff]
    %v4699 = vld [vmem:[%s2 + $0xc0] sm:$0xff]
    %v4700 = vld [vmem:[%s2 + $0xc8] sm:$0xff]
    %v4701 = vld [vmem:[%s2 + $0xd0] sm:$0xff]
    %v4702 = vld [vmem:[%s2 + $0xd8] sm:$0xff]
    %v4703 = vld [vmem:[%s2 + $0xe0] sm:$0xff]
    %v4704 = vld [vmem:[%s2 + $0xe8] sm:$0xff]
    %v4705 = vld [vmem:[%s2 + $0xf0] sm:$0xff]
    %v4706 = vld [vmem:[%s2 + $0xf8] sm:$0xff]
    %v4707 = vld [vmem:[%s3 + $0x19] sm:$0x1]
    %v4708 = vlaneseq
    %v4709 = vshrl.u32 %v4708, 7
    %v4710 = vsub.s32 0, %v4709
    %v4711 = vrot.slane %v4707, %v4710
    %v4713 = vsel %vm3642, %v4689, 0
    %v4716 = vsel %vm3642, %v4690, 0
    %v4719 = vsel %vm3642, %v4691, 0
    %v4722 = vsel %vm3642, %v4692, 0
    %v4725 = vsel %vm3642, %v4693, 0
    %v4728 = vsel %vm3642, %v4694, 0
    %v4731 = vsel %vm3642, %v4695, 0
    %v4734 = vsel %vm3642, %v4696, 0
    %v4737 = vsel %vm3642, %v4697, 0
    %v4740 = vsel %vm3642, %v4698, 0
    %v4743 = vsel %vm3642, %v4699, 0
    %v4746 = vsel %vm3642, %v4700, 0
    %v4749 = vsel %vm3642, %v4701, 0
    %v4752 = vsel %vm3642, %v4702, 0
    %v4755 = vsel %vm3642, %v4703, 0
    %v4758 = vsel %vm3642, %v4704, 0
    %v4761 = vsel %vm3642, %v4705, 0
    %v4764 = vsel %vm3642, %v4706, 0
    %4766 = vmatprep.subr.mxu0 0.0
    %4767 = vmatpush1.xpose.msra.mxu0 %v4719
    %4768 = vmatprep.subr.mxu0 0.0
    %4769 = vmatpush1.xpose.msra.mxu0 %v4722
    %4770 = vmatprep.subr.mxu0 0.0
    %4771 = vmatpush1.xpose.msra.mxu0 %v4725
    %4772 = vmatprep.subr.mxu0 0.0
    %4773 = vmatpush1.xpose.msra.mxu0 %v4728
    %4774 = vmatprep.subr.mxu0 0.0
    %4775 = vmatpush1.xpose.msra.mxu0 %v4731
    %4776 = vmatprep.subr.mxu0 0.0
    %4777 = vmatpush1.xpose.msra.mxu0 %v4734
    %4778 = vmatprep.subr.mxu0 0.0
    %4779 = vmatpush1.xpose.msra.mxu0 %v4737
    %4780 = vmatprep.subr.mxu0 0.0
    %4781 = vmatpush1.xpose.msra.mxu0 %v4740
    %4782 = vmatprep.subr.mxu0 0.0
    %4783 = vmatpush1.xpose.msra.mxu0 %v4743
    %4784 = vmatprep.subr.mxu0 0.0
    %4785 = vmatpush1.xpose.msra.mxu0 %v4746
    %4786 = vmatprep.subr.mxu0 0.0
    %4787 = vmatpush1.xpose.msra.mxu0 %v4749
    %4788 = vmatprep.subr.mxu0 0.0
    %4789 = vmatpush1.xpose.msra.mxu0 %v4752
    %4790 = vmatprep.subr.mxu0 0.0
    %4791 = vmatpush1.xpose.msra.mxu0 %v4755
    %4792 = vmatprep.subr.mxu0 0.0
    %4793 = vmatpush1.xpose.msra.mxu0 %v4758
    %4794 = vmatprep.subr.mxu0 0.0
    %4795 = vmatpush1.xpose.msra.mxu0 %v4761
    %4796 = vmatprep.subr.mxu0 0.0
    %4797 = vmatpush1.xpose.msra.mxu0 %v4764
    %4798 = vmatprep.subr.mxu0 0.0
    %4799 = vmatpush1.xpose.msra.mxu0 0.0
    %4800 = vmatprep.subr.mxu0 0.0
    %4801 = vmatpush1.xpose.msra.mxu0 0.0
    %4802 = vmatprep.subr.mxu0 0.0
    %4803 = vmatpush1.xpose.msra.mxu0 0.0
    %4804 = vmatprep.subr.mxu0 0.0
    %4805 = vmatpush1.xpose.msra.mxu0 0.0
    %4806 = vmatprep.subr.mxu0 0.0
    %4807 = vmatpush1.xpose.msra.mxu0 0.0
    %4808 = vmatprep.subr.mxu0 0.0
    %4809 = vmatpush1.xpose.msra.mxu0 0.0
    %4810 = vmatprep.subr.mxu0 0.0
    %4811 = vmatpush1.xpose.msra.mxu0 0.0
    %4812 = vmatprep.subr.mxu0 0.0
    %4813 = vmatpush1.xpose.msra.mxu0 0.0
    %4814 = vmatprep.subr.mxu0 0.0
    %4815 = vmatpush1.xpose.msra.mxu0 0.0
    %4816 = vmatprep.subr.mxu0 0.0
    %4817 = vmatpush1.xpose.msra.mxu0 0.0
    %4818 = vmatprep.subr.mxu0 0.0
    %4819 = vmatpush1.xpose.msra.mxu0 0.0
    %4820 = vmatprep.subr.mxu0 0.0
    %4821 = vmatpush1.xpose.msra.mxu0 0.0
    %4822 = vmatprep.subr.mxu0 0.0
    %4823 = vmatpush1.xpose.msra.mxu0 0.0
    %4824 = vmatprep.subr.mxu0 0.0
    %4825 = vmatpush1.xpose.msra.mxu0 0.0
    %4826 = vmatprep.subr.mxu0 0.0
    %4827 = vmatpush1.xpose.msra.mxu0 0.0
    %4828 = vmatprep.subr.mxu0 0.0
    %4829 = vmatpush1.xpose.msra.mxu0 0.0
    %4830 = vmatprep.mubr.f32.mxu0 0.0
    %4831 = vmatmul.mubr.f32.gmra.mrb[0].mxu0 %v4713
    %v4832 = vpop.f32.mrb[0].mxu0
    %v4833 = vadd.f32 %v4711, %v4832
    %v4834 = vpop.f32.mrb[0].mxu0
    %4835 = vmatprep.mubr.f32.mxu0 0.0
    %4836 = vmatmul.mubr.f32.gmra.mrb[0].mxu0 %v4716
    %v4837 = vpop.f32.mrb[0].mxu0
    %v4838 = vadd.f32 %v4711, %v4837
    %v4839 = vpop.f32.mrb[0].mxu0
    %4840 = vdwg.mxu0
    %v4841 = vsel %vm37, %v2809, 0.0
    %v4842 = vsel %vm37, %v2810, 0.0
    %4843 = vst [vmem:[#allocation2] sm:$0xff] %v4841
    %4844 = vst [vmem:[#allocation2 + $0x8] sm:$0xff] %v3826
    %4845 = vst [vmem:[#allocation2 + $0x10] sm:$0xff] %v4833
    %4846 = vst [vmem:[#allocation2 + $0x18] sm:$0xff] %v4842
    %4847 = vst [vmem:[#allocation2 + $0x20] sm:$0xff] %v3831
    %4848 = vst [vmem:[#allocation2 + $0x28] sm:$0xff] %v4838
    // Predicated region
    $region18: #{tpu_custom_call.1} parent=1 // pred_check
      _
    $region19: #{tpu_custom_call.1} parent=1 // pred_check_branch
      %4850 = sbr.rel (0) target = $region21
    $region20: #{tpu_custom_call.1} parent=1 // pred_region
      %s4852 = ssub.s32 768, 768
      %4853 = vsyncadd [#allocation3], %s4852
      %s4854 = sshll.u32 [#allocation2], 4
      %s4855 = int_to_ptr.vmem [resolvable:$true] %s4854
      %4860 = dma.vmem_to_hbm [thread:$0]  %s4855, 768, %s4, [#allocation3], 384, 384, 24
    $region21: #{tpu_custom_call.1} parent=1 // pred_fallthru
      _
    // Predicated region
    $region22: #{tpu_custom_call.1} parent=1 // pred_check
      _
    $region23: #{tpu_custom_call.1} parent=1 // pred_check_branch
      %4862 = sbr.rel (0) target = $region25
    $region24: #{tpu_custom_call.1} parent=1 // pred_region
      %4863 = dma.done [#allocation3], 768
    $region25: #{tpu_custom_call.1} parent=1 // pred_fallthru
      _
    %4864 = vsyncpa [#allocation3], 1

</llo_original>
